<compile_context>
chip_gen: v5e
topology: v5e:2x2
jax: 0.10.0
libtpu: 0.0.40
codegen_flags: <defaults>
</compile_context>

<pallas_src>
import functools

import numpy as np
import jax
import jax.numpy as jnp
from jax import lax
from jax.experimental import pallas as pl
from jax.experimental.pallas import tpu as pltpu

LEAKY_SLOPE = 0.1
BN_EPS = 1e-5


def _leaky(x):
    # 0 < slope < 1  =>  LeakyReLU(x) == max(x, slope*x)   (vmul + vmax)
    return jnp.maximum(x, LEAKY_SLOPE * x)


def _vmem_spec():
    return pl.BlockSpec(memory_space=pltpu.MemorySpace.VMEM)


# ----------------------------------------------------------------------------
# In-kernel helpers (one batch element; spatial flattened on the lane axis).
# ----------------------------------------------------------------------------
def _layer_block(dst_ref, x_ref, xpad_ref, wd_ref, b1_ref, wp_ref, b2_ref, H, W):
    """DepthwiseConv3x3(+BN+LeakyReLU) -> Dropout(eval:id) -> Pointwise1x1(+BN+LeakyReLU).

    Result is written straight into dst_ref (no full-map value escapes).

    x_ref   : (Cin, H*W)  input (native dtype, cast in-kernel)
    xpad_ref: (Cin, H*W + 2*W + 2) f32 scratch (halo-padded copy of x)
    wd_ref  : (9, Cin, 1) f32  depthwise taps with bn1 scale folded in
    b1_ref  : (Cin, 1)    f32  folded bn1 bias
    wp_ref  : (Cout, Cin) bf16 pointwise weights with bn2 scale folded in
    b2_ref  : (Cout, 1)   f32  folded bn2 bias
    dst_ref : (Cout, H*W) f32
    """
    Cin = x_ref.shape[0]
    S = H * W
    P = W + 1  # leading halo: one zero row + one element

    # Only the two (W+1)-wide halo strips are zeroed; the centre is written
    # once with the cast input (no full-buffer zero pass, no host-side pad).
    xpad_ref[:, :P] = jnp.zeros((Cin, P), jnp.float32)
    xpad_ref[:, P + S:] = jnp.zeros((Cin, P), jnp.float32)
    xpad_ref[:, P:P + S] = x_ref[...].astype(jnp.float32)

    # Width-border validity masks, computed once per block (the halo rows in
    # the padded buffer already handle the height borders).
    col = lax.broadcasted_iota(jnp.int32, (1, S), 1) % W
    ml = (col >= 1).astype(jnp.float32)          # left neighbour exists
    mr = (col <= W - 2).astype(jnp.float32)      # right neighbour exists

    wd = wd_ref[...]                             # (9, Cin, 1): hoisted single load
    acc = None
    for k in range(9):
        off = (k // 3) * W + (k % 3)
        # Static lane window of the padded scratch (flat-offset 3x3 conv).
        # These reads ride the vld/XLU slots, which have slack under the
        # VALU-bound multiply-accumulate below.
        win = xpad_ref[:, off:off + S]
        j = k % 3
        if j == 0:
            win = win * ml
        elif j == 2:
            win = win * mr
        term = wd[k] * win                       # (Cin,1) * (Cin,S)
        acc = term if acc is None else acc + term

    pre = acc + b1_ref[...]                      # folded BN1 bias
    y = _leaky(pre)

    # Pointwise 1x1 conv (+ folded BN2 + LeakyReLU): lane-dense MXU matmul,
    # bf16 operands, f32 accumulation; epilogue stays on the f32 VPU.
    z = jnp.dot(wp_ref[...], y.astype(jnp.bfloat16),
                preferred_element_type=jnp.float32)          # (Cout, S)
    dst_ref[...] = _leaky(z + b2_ref[...])


def _upsample2x_add_into(dst_ref, src_ref, uwT_ref, H, W):
    """dst_ref += bilinear_upsample_2x(src_ref)   (PyTorch align_corners=False).

    Separable: width via a (W, 2W) MXU matmul per source row (bf16 operands,
    f32 accumulate); height via fixed 0.25/0.75 blends of adjacent upsampled
    rows (edge-clamped), accumulated straight into dst_ref rows.  Only a
    rolling window of three upsampled rows is live at any time.

    dst_ref : (C, 2H*2W) f32 (already holds the higher-res layer output)
    src_ref : (C, H*W)   f32
    uwT_ref : (W, 2W)    bf16
    """
    Wo = 2 * W
    uwT = uwT_ref[...]                           # hoisted single load

    def up_row(h):
        r = src_ref[:, h * W:(h + 1) * W].astype(jnp.bfloat16)
        return jnp.dot(r, uwT, preferred_element_type=jnp.float32)   # (C, Wo)

    # TODO(synk): at production H (64-128) convert this static loop into a
    # lax.fori_loop over row chunks to bound code size / compile time.
    prev = cur = up_row(0)                       # edge clamp at the top
    for h in range(H):
        nxt = up_row(h + 1) if h + 1 < H else cur  # edge clamp at the bottom
        lo = 2 * h * Wo
        dst_ref[:, lo:lo + Wo] = (dst_ref[:, lo:lo + Wo]
                                  + (0.25 * prev + 0.75 * cur))      # row 2h
        dst_ref[:, lo + Wo:lo + 2 * Wo] = (dst_ref[:, lo + Wo:lo + 2 * Wo]
                                           + (0.75 * cur + 0.25 * nxt))  # 2h+1
        prev, cur = cur, nxt


# ----------------------------------------------------------------------------
# Fused kernel: whole head for one batch element per grid step.
# ----------------------------------------------------------------------------
def _fused_head_kernel(x32_ref, x64_ref, x128_ref,
                       wd32, b132, wp32, b232,
                       wd64, b164, wp64, b264,
                       wd128, b1128, wp128, b2128,
                       uwT32, uwT64, wpred, bpred,
                       out_ref,
                       xp32, xp64, xp128, s32, s64, s128,
                       *, H32, W32, H64, W64, H128, W128, pred_chunk):
    # layer_32 -> s32 ; layer_64 -> s64 ; s64 += up2x(s32)
    _layer_block(s32, x32_ref, xp32, wd32, b132, wp32, b232, H32, W32)
    _layer_block(s64, x64_ref, xp64, wd64, b164, wp64, b264, H64, W64)
    _upsample2x_add_into(s64, s32, uwT32, H32, W32)

    # layer_128 -> s128 ; s128 += up2x(s64)
    _layer_block(s128, x128_ref, xp128, wd128, b1128, wp128, b2128, H128, W128)
    _upsample2x_add_into(s128, s64, uwT64, H64, W64)

    # Both predictor 1x1 convs merged into one (class_ts+1, hidden) matmul,
    # streamed in lane chunks read straight from the s128 ref (no full-map
    # value / hidden spill buffer).
    wp = wpred[...]
    bp = bpred[...]
    S128 = H128 * W128
    for c0 in range(0, S128, pred_chunk):
        z = jnp.dot(wp, s128[:, c0:c0 + pred_chunk].astype(jnp.bfloat16),
                    preferred_element_type=jnp.float32)
        out_ref[:, c0:c0 + pred_chunk] = z + bp


# ----------------------------------------------------------------------------
# Host wrapper
# ----------------------------------------------------------------------------
def semantic_head_stuff_forward(params, x_32, x_64, x_128):
    """Inputs NCHW (PyTorch convention, any float dtype). Returns (preds, mask) NCHW f32."""
    N, C32, H32, W32 = x_32.shape
    _, C64, H64, W64 = x_64.shape
    _, C128, H128, W128 = x_128.shape
    S32, S64, S128 = H32 * W32, H64 * W64, H128 * W128
    CT, Chid = params["wpred"].shape
    class_ts = CT - 1

    # Free reshapes (contiguous NCHW -> (N, C, H*W)); inputs stay in their
    # native dtype (cast happens inside the kernel), no transposes, no pads.
    xf32 = x_32.reshape(N, C32, S32)
    xf64 = x_64.reshape(N, C64, S64)
    xf128 = x_128.reshape(N, C128, S128)

    # Lane-chunk for the predictor matmul (largest 128-multiple divisor <= 2048).
    pred_chunk = S128
    for cand in (2048, 1024, 512, 256, 128):
        if S128 % cand == 0:
            pred_chunk = cand
            break

    L32, L64, L128 = params["L32"], params["L64"], params["L128"]
    kernel = functools.partial(_fused_head_kernel,
                               H32=H32, W32=W32, H64=H64, W64=W64,
                               H128=H128, W128=W128, pred_chunk=pred_chunk)

    def x_spec(C, S):
        return pl.BlockSpec((None, C, S), lambda n: (n, 0, 0))

    out = pl.pallas_call(
        kernel,
        out_shape=jax.ShapeDtypeStruct((N, CT, S128), jnp.float32),
        grid=(N,),
        in_specs=[x_spec(C32, S32), x_spec(C64, S64), x_spec(C128, S128)]
                 + [_vmem_spec()] * 16,
        out_specs=pl.BlockSpec((None, CT, S128), lambda n: (n, 0, 0)),
        scratch_shapes=[
            pltpu.VMEM((C32, S32 + 2 * W32 + 2), jnp.float32),
            pltpu.VMEM((C64, S64 + 2 * W64 + 2), jnp.float32),
            pltpu.VMEM((C128, S128 + 2 * W128 + 2), jnp.float32),
            pltpu.VMEM((Chid, S32), jnp.float32),
            pltpu.VMEM((Chid, S64), jnp.float32),
            pltpu.VMEM((Chid, S128), jnp.float32),
        ],
        compiler_params=pltpu.CompilerParams(
            dimension_semantics=("parallel",),   # shard batch across TCs (v7x)
            # 32 MiB is ample for these shapes; at production resolutions raise
            # this on v6e (128 MiB physical) and re-derive for v7x (64 MiB).
            vmem_limit_bytes=32 * 1024 * 1024),
        # TODO(synk): for production resolutions on v7x add a grid axis over
        # H128 row tiles (compute the 32/64 stages once, keep only a tile of
        # x128/s128/out in VMEM) -- also gives a second parallel axis for the
        # N=1 inference case.
    )(xf32, xf64, xf128,
      L32["wd"], L32["b1"], L32["wp"], L32["b2"],
      L64["wd"], L64["b1"], L64["wp"], L64["b2"],
      L128["wd"], L128["b1"], L128["wp"], L128["b2"],
      params["uwT32"], params["uwT64"], params["wpred"], params["bpred"])

    preds = out[:, :class_ts, :].reshape(N, class_ts, H128, W128)
    mask = out[:, class_ts:, :].reshape(N, 1, H128, W128)
    return preds, mask


# ----------------------------------------------------------------------------
# Deterministic parameter construction (BN folded in eval mode).
# ----------------------------------------------------------------------------
def _fold_bn(gamma, beta, mean, var):
    scale = gamma / jnp.sqrt(var + BN_EPS)
    bias = beta - mean * scale
    return scale, bias


def _init_layer_params(key, cin, cout):
    ks = jax.random.split(key, 10)
    # torch depthwise Conv2d(cin,cin,3,groups=cin,bias=False) weight (cin,1,3,3)
    # maps to wd[k, c] = weight[c, 0, k // 3, k % 3].
    wd = 0.2 * jax.random.normal(ks[0], (9, cin), jnp.float32)
    g1 = 1.0 + 0.1 * jax.random.normal(ks[1], (cin,), jnp.float32)
    b1 = 0.1 * jax.random.normal(ks[2], (cin,), jnp.float32)
    m1 = 0.1 * jax.random.normal(ks[3], (cin,), jnp.float32)
    v1 = 1.0 + 0.1 * jax.random.uniform(ks[4], (cin,), jnp.float32)
    # torch pointwise Conv2d(cin,cout,1,bias=False) weight (cout,cin,1,1) -> (cout,cin)
    wp = 0.2 * jax.random.normal(ks[5], (cout, cin), jnp.float32)
    g2 = 1.0 + 0.1 * jax.random.normal(ks[6], (cout,), jnp.float32)
    b2 = 0.1 * jax.random.normal(ks[7], (cout,), jnp.float32)
    m2 = 0.1 * jax.random.normal(ks[8], (cout,), jnp.float32)
    v2 = 1.0 + 0.1 * jax.random.uniform(ks[9], (cout,), jnp.float32)
    s1, fb1 = _fold_bn(g1, b1, m1, v1)
    s2, fb2 = _fold_bn(g2, b2, m2, v2)
    return dict(
        wd=(wd * s1[None, :]).reshape(9, cin, 1),       # bn1 scale folded into taps
        b1=fb1.reshape(cin, 1),
        wp=(wp * s2[:, None]).astype(jnp.bfloat16),     # bn2 scale folded into 1x1 weights
        b2=fb2.reshape(cout, 1),
    )


def _upsample2x_matrix_1d(n):
    # Exactly PyTorch bilinear, scale_factor=2, align_corners=False.
    m = np.zeros((2 * n, n), dtype=np.float32)
    for i in range(2 * n):
        src = (i + 0.5) / 2.0 - 0.5
        src = max(src, 0.0)
        i0 = min(int(np.floor(src)), n - 1)
        i1 = min(i0 + 1, n - 1)
        lam = src - i0
        m[i, i0] += 1.0 - lam
        m[i, i1] += lam
    return m


# ----------------------------------------------------------------------------
# Pure-XLA reference (different code path: pad+slice conv, dense-kron upsample)
# for a numerical cross-check at toy sizes only.
# ----------------------------------------------------------------------------
def _reference_forward(params, x_32, x_64, x_128):
    hi = jax.lax.Precision.HIGHEST

    def layer(x, p):
        N, C, H, W = x.shape
        x = x.astype(jnp.float32)
        wd = p["wd"][:, :, 0]                                        # (9, C)
        xp = jnp.pad(x, ((0, 0), (0, 0), (1, 1), (1, 1)))
        acc = jnp.zeros_like(x)
        for i in range(3):
            for j in range(3):
                acc = acc + (wd[i * 3 + j][None, :, None, None]
                             * xp[:, :, i:i + H, j:j + W])
        y = _leaky(acc + p["b1"][:, 0][None, :, None, None])
        wp = p["wp"].astype(jnp.float32)
        z = jnp.einsum('oc,nchw->nohw', wp, y, precision=hi)
        return _leaky(z + p["b2"][:, 0][None, :, None, None])

    def up2x(x):  # dense kron, test-only reference (kernel uses separable form)
        N, C, H, W = x.shape
        U = jnp.asarray(np.kron(_upsample2x_matrix_1d(H), _upsample2x_matrix_1d(W)))
        o = jnp.einsum('os,ncs->nco', U, x.reshape(N, C, H * W), precision=hi)
        return o.reshape(N, C, 2 * H, 2 * W)

    h32 = layer(x_32, params["L32"])
    h64 = layer(x_64, params["L64"]) + up2x(h32)
    h128 = layer(x_128, params["L128"]) + up2x(h64)
    wpred = params["wpred"].astype(jnp.float32)
    out = (jnp.einsum('oc,nchw->nohw', wpred, h128, precision=hi)
           + params["bpred"][:, 0][None, :, None, None])
    ct = wpred.shape[0] - 1
    return out[:, :ct], out[:, ct:]


# TODO(synk): loss() and post_process() (boolean-mask gathers, cv2.warpPerspective,
# numpy interop) are not part of forward() and are not implemented here.

if __name__ == "__main__":
    key = jax.random.PRNGKey(0)
    N = 2
    in_ch32 = in_ch64 = in_ch128 = 16
    hidden = 32
    class_ts = 12
    H32, W32 = 4, 4
    H64, W64 = 8, 8
    H128, W128 = 16, 16

    k = jax.random.split(key, 8)
    x_32 = jax.random.normal(k[0], (N, in_ch32, H32, W32), jnp.float32)
    x_64 = jax.random.normal(k[1], (N, in_ch64, H64, W64), jnp.float32)
    x_128 = jax.random.normal(k[2], (N, in_ch128, H128, W128), jnp.float32)

    # predictor_thing_stuff: Conv2d(hidden, class_ts, 1) with bias;
    # predictor_thing_mask: Conv2d(hidden, 1, 1) with bias  -> merged head.
    wts = 0.2 * jax.random.normal(k[6], (class_ts, hidden), jnp.float32)
    bts = 0.05 * jnp.arange(class_ts, dtype=jnp.float32)
    wm = 0.2 * jax.random.normal(k[7], (1, hidden), jnp.float32)
    bm = jnp.full((1,), 0.1, jnp.float32)

    params = dict(
        L32=_init_layer_params(k[3], in_ch32, hidden),
        L64=_init_layer_params(k[4], in_ch64, hidden),
        L128=_init_layer_params(k[5], in_ch128, hidden),
        # (W, 2W) width-upsample matrices; 0.25/0.75/1.0 are exact in bf16.
        uwT32=jnp.asarray(_upsample2x_matrix_1d(W32).T).astype(jnp.bfloat16),
        uwT64=jnp.asarray(_upsample2x_matrix_1d(W64).T).astype(jnp.bfloat16),
        wpred=jnp.concatenate([wts, wm], axis=0).astype(jnp.bfloat16),
        bpred=jnp.concatenate([bts, bm], axis=0).reshape(class_ts + 1, 1),
    )

    preds, thing_mask = jax.jit(semantic_head_stuff_forward)(params, x_32, x_64, x_128)
    jax.block_until_ready((preds, thing_mask))

    assert preds.shape == (N, class_ts, H128, W128)
    assert thing_mask.shape == (N, 1, H128, W128)
    assert preds.dtype == jnp.float32 and thing_mask.dtype == jnp.float32

    # Numerical cross-check (tolerance covers the intentional bf16 operands in
    # the pointwise / upsample / predictor MXU matmuls; structural errors would
    # be O(1) or larger).
    preds_ref, mask_ref = _reference_forward(params, x_32, x_64, x_128)
    err = max(float(jnp.max(jnp.abs(preds - preds_ref))),
              float(jnp.max(jnp.abs(thing_mask - mask_ref))))
    assert err < 2e-1, f"max abs error vs reference: {err}"

    print("KERNEL_OK")
</pallas_src>

<mosaic_0001>
module attributes {stable_mosaic.version = 11 : i64} {
  func.func @_fused_head_kernel(%arg0: i32, %arg1: memref<1x16x16xf32, #tpu.memory_space<vmem>>, %arg2: memref<1x16x64xf32, #tpu.memory_space<vmem>>, %arg3: memref<1x16x256xf32, #tpu.memory_space<vmem>>, %arg4: memref<9x16x1xf32, #tpu.memory_space<vmem>>, %arg5: memref<16x1xf32, #tpu.memory_space<vmem>>, %arg6: memref<32x16xbf16, #tpu.memory_space<vmem>>, %arg7: memref<32x1xf32, #tpu.memory_space<vmem>>, %arg8: memref<9x16x1xf32, #tpu.memory_space<vmem>>, %arg9: memref<16x1xf32, #tpu.memory_space<vmem>>, %arg10: memref<32x16xbf16, #tpu.memory_space<vmem>>, %arg11: memref<32x1xf32, #tpu.memory_space<vmem>>, %arg12: memref<9x16x1xf32, #tpu.memory_space<vmem>>, %arg13: memref<16x1xf32, #tpu.memory_space<vmem>>, %arg14: memref<32x16xbf16, #tpu.memory_space<vmem>>, %arg15: memref<32x1xf32, #tpu.memory_space<vmem>>, %arg16: memref<4x8xbf16, #tpu.memory_space<vmem>>, %arg17: memref<8x16xbf16, #tpu.memory_space<vmem>>, %arg18: memref<13x32xbf16, #tpu.memory_space<vmem>>, %arg19: memref<13x1xf32, #tpu.memory_space<vmem>>, %arg20: memref<1x13x256xf32, #tpu.memory_space<vmem>>, %arg21: memref<16x26xf32, #tpu.memory_space<vmem>>, %arg22: memref<16x82xf32, #tpu.memory_space<vmem>>, %arg23: memref<16x290xf32, #tpu.memory_space<vmem>>, %arg24: memref<32x16xf32, #tpu.memory_space<vmem>>, %arg25: memref<32x64xf32, #tpu.memory_space<vmem>>, %arg26: memref<32x256xf32, #tpu.memory_space<vmem>>) attributes {dimension_semantics = [#tpu.dimension_semantics<parallel>], iteration_bounds = array<i64: 2>, scalar_prefetch = 0 : i64, scratch_operands = 6 : i64, tpu.core_type = #tpu.core_type<tc>, window_params = [{transform_indices = @transform_0, window_bounds = array<i64: 1, 16, 16>}, {transform_indices = @transform_1, window_bounds = array<i64: 1, 16, 64>}, {transform_indices = @transform_2, window_bounds = array<i64: 1, 16, 256>}, {pipeline_mode = #tpu.pipeline_mode<synchronous>, transform_indices = @transform_3, window_bounds = array<i64: 9, 16, 1>}, {pipeline_mode = #tpu.pipeline_mode<synchronous>, transform_indices = @transform_4, window_bounds = array<i64: 16, 1>}, {pipeline_mode = #tpu.pipeline_mode<synchronous>, transform_indices = @transform_5, window_bounds = array<i64: 32, 16>}, {pipeline_mode = #tpu.pipeline_mode<synchronous>, transform_indices = @transform_6, window_bounds = array<i64: 32, 1>}, {pipeline_mode = #tpu.pipeline_mode<synchronous>, transform_indices = @transform_7, window_bounds = array<i64: 9, 16, 1>}, {pipeline_mode = #tpu.pipeline_mode<synchronous>, transform_indices = @transform_8, window_bounds = array<i64: 16, 1>}, {pipeline_mode = #tpu.pipeline_mode<synchronous>, transform_indices = @transform_9, window_bounds = array<i64: 32, 16>}, {pipeline_mode = #tpu.pipeline_mode<synchronous>, transform_indices = @transform_10, window_bounds = array<i64: 32, 1>}, {pipeline_mode = #tpu.pipeline_mode<synchronous>, transform_indices = @transform_11, window_bounds = array<i64: 9, 16, 1>}, {pipeline_mode = #tpu.pipeline_mode<synchronous>, transform_indices = @transform_12, window_bounds = array<i64: 16, 1>}, {pipeline_mode = #tpu.pipeline_mode<synchronous>, transform_indices = @transform_13, window_bounds = array<i64: 32, 16>}, {pipeline_mode = #tpu.pipeline_mode<synchronous>, transform_indices = @transform_14, window_bounds = array<i64: 32, 1>}, {pipeline_mode = #tpu.pipeline_mode<synchronous>, transform_indices = @transform_15, window_bounds = array<i64: 4, 8>}, {pipeline_mode = #tpu.pipeline_mode<synchronous>, transform_indices = @transform_16, window_bounds = array<i64: 8, 16>}, {pipeline_mode = #tpu.pipeline_mode<synchronous>, transform_indices = @transform_17, window_bounds = array<i64: 13, 32>}, {pipeline_mode = #tpu.pipeline_mode<synchronous>, transform_indices = @transform_18, window_bounds = array<i64: 13, 1>}, {transform_indices = @transform_19, window_bounds = array<i64: 1, 13, 256>}]} {
    %cst = arith.constant 0.000000e+00 : f32
    %0 = vector.broadcast %cst : f32 to vector<16x5xf32>
    %c0 = arith.constant 0 : index
    %c0_0 = arith.constant 0 : index
    %1 = vector.load %arg21[%c0, %c0_0] : memref<16x26xf32, #tpu.memory_space<vmem>>, vector<16x5xf32>
    tpu.vector_store %arg21[%c0, %c0_0], %0 {strides = array<i32>} : memref<16x26xf32, #tpu.memory_space<vmem>>, vector<16x5xf32>,
    %cst_1 = arith.constant 0.000000e+00 : f32
    %2 = vector.broadcast %cst_1 : f32 to vector<16x5xf32>
    %c0_2 = arith.constant 0 : index
    %c21 = arith.constant 21 : index
    %3 = vector.load %arg21[%c0_2, %c21] : memref<16x26xf32, #tpu.memory_space<vmem>>, vector<16x5xf32>
    tpu.vector_store %arg21[%c0_2, %c21], %2 {strides = array<i32>} : memref<16x26xf32, #tpu.memory_space<vmem>>, vector<16x5xf32>,
    %c0_3 = arith.constant 0 : index
    %c0_4 = arith.constant 0 : index
    %c0_5 = arith.constant 0 : index
    %4 = vector.load %arg1[%c0_3, %c0_4, %c0_5] : memref<1x16x16xf32, #tpu.memory_space<vmem>>, vector<1x16x16xf32>
    %5 = vector.shape_cast %4 : vector<1x16x16xf32> to vector<16x16xf32>
    %c0_6 = arith.constant 0 : index
    %c5 = arith.constant 5 : index
    %6 = vector.load %arg21[%c0_6, %c5] : memref<16x26xf32, #tpu.memory_space<vmem>>, vector<16x16xf32>
    tpu.vector_store %arg21[%c0_6, %c5], %5 {strides = array<i32>} : memref<16x26xf32, #tpu.memory_space<vmem>>, vector<16x16xf32>,
    %7 = tpu.iota {dimensions = array<i32: 1>} : vector<1x16xi32>
    %c4_i32 = arith.constant 4 : i32
    %c0_i32 = arith.constant 0 : i32
    %8 = arith.cmpi eq, %c4_i32, %c0_i32 : i32
    %c1_i32 = arith.constant 1 : i32
    %9 = arith.select %8, %c1_i32, %c4_i32 : i32
    %10 = vector.broadcast %9 : i32 to vector<1x16xi32>
    %11 = arith.remsi %7, %10 : vector<1x16xi32>
    %c0_i32_7 = arith.constant 0 : i32
    %12 = vector.broadcast %c0_i32_7 : i32 to vector<1x16xi32>
    %13 = arith.cmpi ne, %11, %12 : vector<1x16xi32>
    %c0_i32_8 = arith.constant 0 : i32
    %14 = vector.broadcast %c0_i32_8 : i32 to vector<1x16xi32>
    %15 = arith.cmpi slt, %11, %14 : vector<1x16xi32>
    %c0_i32_9 = arith.constant 0 : i32
    %16 = arith.cmpi slt, %9, %c0_i32_9 : i32
    %17 = vector.broadcast %16 : i1 to vector<1x16xi1>
    %18 = vector.broadcast %17 : vector<1x16xi1> to vector<1x16xi1>
    %19 = arith.xori %15, %18 : vector<1x16xi1>
    %20 = arith.andi %19, %13 : vector<1x16xi1>
    %21 = vector.broadcast %9 : i32 to vector<1x16xi32>
    %22 = arith.addi %11, %21 : vector<1x16xi32>
    %23 = arith.select %20, %22, %11 : vector<1x16xi1>, vector<1x16xi32>
    %c1_i32_10 = arith.constant 1 : i32
    %24 = vector.broadcast %c1_i32_10 : i32 to vector<1x16xi32>
    %25 = arith.cmpi sge, %23, %24 : vector<1x16xi32>
    %26 = arith.extui %25 : vector<1x16xi1> to vector<1x16xi32>
    %27 = arith.sitofp %26 : vector<1x16xi32> to vector<1x16xf32>
    %c2_i32 = arith.constant 2 : i32
    %28 = vector.broadcast %c2_i32 : i32 to vector<1x16xi32>
    %29 = arith.cmpi sle, %23, %28 : vector<1x16xi32>
    %30 = arith.extui %29 : vector<1x16xi1> to vector<1x16xi32>
    %31 = arith.sitofp %30 : vector<1x16xi32> to vector<1x16xf32>
    %c0_11 = arith.constant 0 : index
    %c0_12 = arith.constant 0 : index
    %c0_13 = arith.constant 0 : index
    %32 = vector.load %arg4[%c0_11, %c0_12, %c0_13] : memref<9x16x1xf32, #tpu.memory_space<vmem>>, vector<9x16x1xf32>
    %c0_14 = arith.constant 0 : index
    %c0_15 = arith.constant 0 : index
    %33 = vector.load %arg21[%c0_14, %c0_15] : memref<16x26xf32, #tpu.memory_space<vmem>>, vector<16x16xf32>
    %34 = vector.broadcast %27 : vector<1x16xf32> to vector<16x16xf32>
    %35 = arith.mulf %33, %34 : vector<16x16xf32>
    %36 = vector.extract_strided_slice %32 {offsets = [0, 0, 0], sizes = [1, 16, 1], strides = [1, 1, 1]} : vector<9x16x1xf32> to vector<1x16x1xf32>
    %37 = vector.shape_cast %36 : vector<1x16x1xf32> to vector<16x1xf32>
    %38 = vector.broadcast %37 : vector<16x1xf32> to vector<16x16xf32>
    %39 = arith.mulf %38, %35 : vector<16x16xf32>
    %c0_16 = arith.constant 0 : index
    %c1 = arith.constant 1 : index
    %40 = vector.load %arg21[%c0_16, %c1] : memref<16x26xf32, #tpu.memory_space<vmem>>, vector<16x16xf32>
    %41 = vector.extract_strided_slice %32 {offsets = [1, 0, 0], sizes = [1, 16, 1], strides = [1, 1, 1]} : vector<9x16x1xf32> to vector<1x16x1xf32>
    %42 = vector.shape_cast %41 : vector<1x16x1xf32> to vector<16x1xf32>
    %43 = vector.broadcast %42 : vector<16x1xf32> to vector<16x16xf32>
    %44 = arith.mulf %43, %40 : vector<16x16xf32>
    %45 = arith.addf %39, %44 : vector<16x16xf32>
    %c0_17 = arith.constant 0 : index
    %c2 = arith.constant 2 : index
    %46 = vector.load %arg21[%c0_17, %c2] : memref<16x26xf32, #tpu.memory_space<vmem>>, vector<16x16xf32>
    %47 = vector.broadcast %31 : vector<1x16xf32> to vector<16x16xf32>
    %48 = arith.mulf %46, %47 : vector<16x16xf32>
    %49 = vector.extract_strided_slice %32 {offsets = [2, 0, 0], sizes = [1, 16, 1], strides = [1, 1, 1]} : vector<9x16x1xf32> to vector<1x16x1xf32>
    %50 = vector.shape_cast %49 : vector<1x16x1xf32> to vector<16x1xf32>
    %51 = vector.broadcast %50 : vector<16x1xf32> to vector<16x16xf32>
    %52 = arith.mulf %51, %48 : vector<16x16xf32>
    %53 = arith.addf %45, %52 : vector<16x16xf32>
    %c0_18 = arith.constant 0 : index
    %c4 = arith.constant 4 : index
    %54 = vector.load %arg21[%c0_18, %c4] : memref<16x26xf32, #tpu.memory_space<vmem>>, vector<16x16xf32>
    %55 = vector.broadcast %27 : vector<1x16xf32> to vector<16x16xf32>
    %56 = arith.mulf %54, %55 : vector<16x16xf32>
    %57 = vector.extract_strided_slice %32 {offsets = [3, 0, 0], sizes = [1, 16, 1], strides = [1, 1, 1]} : vector<9x16x1xf32> to vector<1x16x1xf32>
    %58 = vector.shape_cast %57 : vector<1x16x1xf32> to vector<16x1xf32>
    %59 = vector.broadcast %58 : vector<16x1xf32> to vector<16x16xf32>
    %60 = arith.mulf %59, %56 : vector<16x16xf32>
    %61 = arith.addf %53, %60 : vector<16x16xf32>
    %c0_19 = arith.constant 0 : index
    %c5_20 = arith.constant 5 : index
    %62 = vector.load %arg21[%c0_19, %c5_20] : memref<16x26xf32, #tpu.memory_space<vmem>>, vector<16x16xf32>
    %63 = vector.extract_strided_slice %32 {offsets = [4, 0, 0], sizes = [1, 16, 1], strides = [1, 1, 1]} : vector<9x16x1xf32> to vector<1x16x1xf32>
    %64 = vector.shape_cast %63 : vector<1x16x1xf32> to vector<16x1xf32>
    %65 = vector.broadcast %64 : vector<16x1xf32> to vector<16x16xf32>
    %66 = arith.mulf %65, %62 : vector<16x16xf32>
    %67 = arith.addf %61, %66 : vector<16x16xf32>
    %c0_21 = arith.constant 0 : index
    %c6 = arith.constant 6 : index
    %68 = vector.load %arg21[%c0_21, %c6] : memref<16x26xf32, #tpu.memory_space<vmem>>, vector<16x16xf32>
    %69 = vector.broadcast %31 : vector<1x16xf32> to vector<16x16xf32>
    %70 = arith.mulf %68, %69 : vector<16x16xf32>
    %71 = vector.extract_strided_slice %32 {offsets = [5, 0, 0], sizes = [1, 16, 1], strides = [1, 1, 1]} : vector<9x16x1xf32> to vector<1x16x1xf32>
    %72 = vector.shape_cast %71 : vector<1x16x1xf32> to vector<16x1xf32>
    %73 = vector.broadcast %72 : vector<16x1xf32> to vector<16x16xf32>
    %74 = arith.mulf %73, %70 : vector<16x16xf32>
    %75 = arith.addf %67, %74 : vector<16x16xf32>
    %c0_22 = arith.constant 0 : index
    %c8 = arith.constant 8 : index
    %76 = vector.load %arg21[%c0_22, %c8] : memref<16x26xf32, #tpu.memory_space<vmem>>, vector<16x16xf32>
    %77 = vector.broadcast %27 : vector<1x16xf32> to vector<16x16xf32>
    %78 = arith.mulf %76, %77 : vector<16x16xf32>
    %79 = vector.extract_strided_slice %32 {offsets = [6, 0, 0], sizes = [1, 16, 1], strides = [1, 1, 1]} : vector<9x16x1xf32> to vector<1x16x1xf32>
    %80 = vector.shape_cast %79 : vector<1x16x1xf32> to vector<16x1xf32>
    %81 = vector.broadcast %80 : vector<16x1xf32> to vector<16x16xf32>
    %82 = arith.mulf %81, %78 : vector<16x16xf32>
    %83 = arith.addf %75, %82 : vector<16x16xf32>
    %c0_23 = arith.constant 0 : index
    %c9 = arith.constant 9 : index
    %84 = vector.load %arg21[%c0_23, %c9] : memref<16x26xf32, #tpu.memory_space<vmem>>, vector<16x16xf32>
    %85 = vector.extract_strided_slice %32 {offsets = [7, 0, 0], sizes = [1, 16, 1], strides = [1, 1, 1]} : vector<9x16x1xf32> to vector<1x16x1xf32>
    %86 = vector.shape_cast %85 : vector<1x16x1xf32> to vector<16x1xf32>
    %87 = vector.broadcast %86 : vector<16x1xf32> to vector<16x16xf32>
    %88 = arith.mulf %87, %84 : vector<16x16xf32>
    %89 = arith.addf %83, %88 : vector<16x16xf32>
    %c0_24 = arith.constant 0 : index
    %c10 = arith.constant 10 : index
    %90 = vector.load %arg21[%c0_24, %c10] : memref<16x26xf32, #tpu.memory_space<vmem>>, vector<16x16xf32>
    %91 = vector.broadcast %31 : vector<1x16xf32> to vector<16x16xf32>
    %92 = arith.mulf %90, %91 : vector<16x16xf32>
    %93 = vector.extract_strided_slice %32 {offsets = [8, 0, 0], sizes = [1, 16, 1], strides = [1, 1, 1]} : vector<9x16x1xf32> to vector<1x16x1xf32>
    %94 = vector.shape_cast %93 : vector<1x16x1xf32> to vector<16x1xf32>
    %95 = vector.broadcast %94 : vector<16x1xf32> to vector<16x16xf32>
    %96 = arith.mulf %95, %92 : vector<16x16xf32>
    %97 = arith.addf %89, %96 : vector<16x16xf32>
    %c0_25 = arith.constant 0 : index
    %c0_26 = arith.constant 0 : index
    %98 = vector.load %arg5[%c0_25, %c0_26] : memref<16x1xf32, #tpu.memory_space<vmem>>, vector<16x1xf32>
    %99 = vector.broadcast %98 : vector<16x1xf32> to vector<16x16xf32>
    %100 = arith.addf %97, %99 : vector<16x16xf32>
    %cst_27 = arith.constant 1.000000e-01 : f32
    %101 = vector.broadcast %cst_27 : f32 to vector<16x16xf32>
    %102 = arith.mulf %101, %100 : vector<16x16xf32>
    %103 = arith.maximumf %100, %102 : vector<16x16xf32>
    %c0_28 = arith.constant 0 : index
    %c0_29 = arith.constant 0 : index
    %104 = vector.load %arg6[%c0_28, %c0_29] : memref<32x16xbf16, #tpu.memory_space<vmem>>, vector<32x16xbf16>
    %105 = arith.truncf %103 : vector<16x16xf32> to vector<16x16xbf16>
    %cst_30 = arith.constant dense<0.000000e+00> : vector<32x16xf32>
    %106 = tpu.matmul %104, %105, %cst_30 {dimension_numbers = #tpu.dot_dimension_numbers<[1], [0], [0], [1], [0, 0, 1, 1], [], []>} : vector<32x16xbf16>, vector<16x16xbf16>, vector<32x16xf32> -> vector<32x16xf32>
    %c0_31 = arith.constant 0 : index
    %c0_32 = arith.constant 0 : index
    %107 = vector.load %arg7[%c0_31, %c0_32] : memref<32x1xf32, #tpu.memory_space<vmem>>, vector<32x1xf32>
    %108 = vector.broadcast %107 : vector<32x1xf32> to vector<32x16xf32>
    %109 = arith.addf %106, %108 : vector<32x16xf32>
    %cst_33 = arith.constant 1.000000e-01 : f32
    %110 = vector.broadcast %cst_33 : f32 to vector<32x16xf32>
    %111 = arith.mulf %110, %109 : vector<32x16xf32>
    %112 = arith.maximumf %109, %111 : vector<32x16xf32>
    %c0_34 = arith.constant 0 : index
    %c0_35 = arith.constant 0 : index
    %113 = vector.load %arg24[%c0_34, %c0_35] : memref<32x16xf32, #tpu.memory_space<vmem>>, vector<32x16xf32>
    tpu.vector_store %arg24[%c0_34, %c0_35], %112 {strides = array<i32>} : memref<32x16xf32, #tpu.memory_space<vmem>>, vector<32x16xf32>,
    %cst_36 = arith.constant 0.000000e+00 : f32
    %114 = vector.broadcast %cst_36 : f32 to vector<16x9xf32>
    %c0_37 = arith.constant 0 : index
    %c0_38 = arith.constant 0 : index
    %115 = vector.load %arg22[%c0_37, %c0_38] : memref<16x82xf32, #tpu.memory_space<vmem>>, vector<16x9xf32>
    tpu.vector_store %arg22[%c0_37, %c0_38], %114 {strides = array<i32>} : memref<16x82xf32, #tpu.memory_space<vmem>>, vector<16x9xf32>,
    %cst_39 = arith.constant 0.000000e+00 : f32
    %116 = vector.broadcast %cst_39 : f32 to vector<16x9xf32>
    %c0_40 = arith.constant 0 : index
    %c73 = arith.constant 73 : index
    %117 = vector.load %arg22[%c0_40, %c73] : memref<16x82xf32, #tpu.memory_space<vmem>>, vector<16x9xf32>
    tpu.vector_store %arg22[%c0_40, %c73], %116 {strides = array<i32>} : memref<16x82xf32, #tpu.memory_space<vmem>>, vector<16x9xf32>,
    %c0_41 = arith.constant 0 : index
    %c0_42 = arith.constant 0 : index
    %c0_43 = arith.constant 0 : index
    %118 = vector.load %arg2[%c0_41, %c0_42, %c0_43] : memref<1x16x64xf32, #tpu.memory_space<vmem>>, vector<1x16x64xf32>
    %119 = vector.shape_cast %118 : vector<1x16x64xf32> to vector<16x64xf32>
    %c0_44 = arith.constant 0 : index
    %c9_45 = arith.constant 9 : index
    %120 = vector.load %arg22[%c0_44, %c9_45] : memref<16x82xf32, #tpu.memory_space<vmem>>, vector<16x64xf32>
    tpu.vector_store %arg22[%c0_44, %c9_45], %119 {strides = array<i32>} : memref<16x82xf32, #tpu.memory_space<vmem>>, vector<16x64xf32>,
    %121 = tpu.iota {dimensions = array<i32: 1>} : vector<1x64xi32>
    %c8_i32 = arith.constant 8 : i32
    %c0_i32_46 = arith.constant 0 : i32
    %122 = arith.cmpi eq, %c8_i32, %c0_i32_46 : i32
    %c1_i32_47 = arith.constant 1 : i32
    %123 = arith.select %122, %c1_i32_47, %c8_i32 : i32
    %124 = vector.broadcast %123 : i32 to vector<1x64xi32>
    %125 = arith.remsi %121, %124 : vector<1x64xi32>
    %c0_i32_48 = arith.constant 0 : i32
    %126 = vector.broadcast %c0_i32_48 : i32 to vector<1x64xi32>
    %127 = arith.cmpi ne, %125, %126 : vector<1x64xi32>
    %c0_i32_49 = arith.constant 0 : i32
    %128 = vector.broadcast %c0_i32_49 : i32 to vector<1x64xi32>
    %129 = arith.cmpi slt, %125, %128 : vector<1x64xi32>
    %c0_i32_50 = arith.constant 0 : i32
    %130 = arith.cmpi slt, %123, %c0_i32_50 : i32
    %131 = vector.broadcast %130 : i1 to vector<1x64xi1>
    %132 = vector.broadcast %131 : vector<1x64xi1> to vector<1x64xi1>
    %133 = arith.xori %129, %132 : vector<1x64xi1>
    %134 = arith.andi %133, %127 : vector<1x64xi1>
    %135 = vector.broadcast %123 : i32 to vector<1x64xi32>
    %136 = arith.addi %125, %135 : vector<1x64xi32>
    %137 = arith.select %134, %136, %125 : vector<1x64xi1>, vector<1x64xi32>
    %c1_i32_51 = arith.constant 1 : i32
    %138 = vector.broadcast %c1_i32_51 : i32 to vector<1x64xi32>
    %139 = arith.cmpi sge, %137, %138 : vector<1x64xi32>
    %140 = arith.extui %139 : vector<1x64xi1> to vector<1x64xi32>
    %141 = arith.sitofp %140 : vector<1x64xi32> to vector<1x64xf32>
    %c6_i32 = arith.constant 6 : i32
    %142 = vector.broadcast %c6_i32 : i32 to vector<1x64xi32>
    %143 = arith.cmpi sle, %137, %142 : vector<1x64xi32>
    %144 = arith.extui %143 : vector<1x64xi1> to vector<1x64xi32>
    %145 = arith.sitofp %144 : vector<1x64xi32> to vector<1x64xf32>
    %c0_52 = arith.constant 0 : index
    %c0_53 = arith.constant 0 : index
    %c0_54 = arith.constant 0 : index
    %146 = vector.load %arg8[%c0_52, %c0_53, %c0_54] : memref<9x16x1xf32, #tpu.memory_space<vmem>>, vector<9x16x1xf32>
    %c0_55 = arith.constant 0 : index
    %c0_56 = arith.constant 0 : index
    %147 = vector.load %arg22[%c0_55, %c0_56] : memref<16x82xf32, #tpu.memory_space<vmem>>, vector<16x64xf32>
    %148 = vector.broadcast %141 : vector<1x64xf32> to vector<16x64xf32>
    %149 = arith.mulf %147, %148 : vector<16x64xf32>
    %150 = vector.extract_strided_slice %146 {offsets = [0, 0, 0], sizes = [1, 16, 1], strides = [1, 1, 1]} : vector<9x16x1xf32> to vector<1x16x1xf32>
    %151 = vector.shape_cast %150 : vector<1x16x1xf32> to vector<16x1xf32>
    %152 = vector.broadcast %151 : vector<16x1xf32> to vector<16x64xf32>
    %153 = arith.mulf %152, %149 : vector<16x64xf32>
    %c0_57 = arith.constant 0 : index
    %c1_58 = arith.constant 1 : index
    %154 = vector.load %arg22[%c0_57, %c1_58] : memref<16x82xf32, #tpu.memory_space<vmem>>, vector<16x64xf32>
    %155 = vector.extract_strided_slice %146 {offsets = [1, 0, 0], sizes = [1, 16, 1], strides = [1, 1, 1]} : vector<9x16x1xf32> to vector<1x16x1xf32>
    %156 = vector.shape_cast %155 : vector<1x16x1xf32> to vector<16x1xf32>
    %157 = vector.broadcast %156 : vector<16x1xf32> to vector<16x64xf32>
    %158 = arith.mulf %157, %154 : vector<16x64xf32>
    %159 = arith.addf %153, %158 : vector<16x64xf32>
    %c0_59 = arith.constant 0 : index
    %c2_60 = arith.constant 2 : index
    %160 = vector.load %arg22[%c0_59, %c2_60] : memref<16x82xf32, #tpu.memory_space<vmem>>, vector<16x64xf32>
    %161 = vector.broadcast %145 : vector<1x64xf32> to vector<16x64xf32>
    %162 = arith.mulf %160, %161 : vector<16x64xf32>
    %163 = vector.extract_strided_slice %146 {offsets = [2, 0, 0], sizes = [1, 16, 1], strides = [1, 1, 1]} : vector<9x16x1xf32> to vector<1x16x1xf32>
    %164 = vector.shape_cast %163 : vector<1x16x1xf32> to vector<16x1xf32>
    %165 = vector.broadcast %164 : vector<16x1xf32> to vector<16x64xf32>
    %166 = arith.mulf %165, %162 : vector<16x64xf32>
    %167 = arith.addf %159, %166 : vector<16x64xf32>
    %c0_61 = arith.constant 0 : index
    %c8_62 = arith.constant 8 : index
    %168 = vector.load %arg22[%c0_61, %c8_62] : memref<16x82xf32, #tpu.memory_space<vmem>>, vector<16x64xf32>
    %169 = vector.broadcast %141 : vector<1x64xf32> to vector<16x64xf32>
    %170 = arith.mulf %168, %169 : vector<16x64xf32>
    %171 = vector.extract_strided_slice %146 {offsets = [3, 0, 0], sizes = [1, 16, 1], strides = [1, 1, 1]} : vector<9x16x1xf32> to vector<1x16x1xf32>
    %172 = vector.shape_cast %171 : vector<1x16x1xf32> to vector<16x1xf32>
    %173 = vector.broadcast %172 : vector<16x1xf32> to vector<16x64xf32>
    %174 = arith.mulf %173, %170 : vector<16x64xf32>
    %175 = arith.addf %167, %174 : vector<16x64xf32>
    %c0_63 = arith.constant 0 : index
    %c9_64 = arith.constant 9 : index
    %176 = vector.load %arg22[%c0_63, %c9_64] : memref<16x82xf32, #tpu.memory_space<vmem>>, vector<16x64xf32>
    %177 = vector.extract_strided_slice %146 {offsets = [4, 0, 0], sizes = [1, 16, 1], strides = [1, 1, 1]} : vector<9x16x1xf32> to vector<1x16x1xf32>
    %178 = vector.shape_cast %177 : vector<1x16x1xf32> to vector<16x1xf32>
    %179 = vector.broadcast %178 : vector<16x1xf32> to vector<16x64xf32>
    %180 = arith.mulf %179, %176 : vector<16x64xf32>
    %181 = arith.addf %175, %180 : vector<16x64xf32>
    %c0_65 = arith.constant 0 : index
    %c10_66 = arith.constant 10 : index
    %182 = vector.load %arg22[%c0_65, %c10_66] : memref<16x82xf32, #tpu.memory_space<vmem>>, vector<16x64xf32>
    %183 = vector.broadcast %145 : vector<1x64xf32> to vector<16x64xf32>
    %184 = arith.mulf %182, %183 : vector<16x64xf32>
    %185 = vector.extract_strided_slice %146 {offsets = [5, 0, 0], sizes = [1, 16, 1], strides = [1, 1, 1]} : vector<9x16x1xf32> to vector<1x16x1xf32>
    %186 = vector.shape_cast %185 : vector<1x16x1xf32> to vector<16x1xf32>
    %187 = vector.broadcast %186 : vector<16x1xf32> to vector<16x64xf32>
    %188 = arith.mulf %187, %184 : vector<16x64xf32>
    %189 = arith.addf %181, %188 : vector<16x64xf32>
    %c0_67 = arith.constant 0 : index
    %c16 = arith.constant 16 : index
    %190 = vector.load %arg22[%c0_67, %c16] : memref<16x82xf32, #tpu.memory_space<vmem>>, vector<16x64xf32>
    %191 = vector.broadcast %141 : vector<1x64xf32> to vector<16x64xf32>
    %192 = arith.mulf %190, %191 : vector<16x64xf32>
    %193 = vector.extract_strided_slice %146 {offsets = [6, 0, 0], sizes = [1, 16, 1], strides = [1, 1, 1]} : vector<9x16x1xf32> to vector<1x16x1xf32>
    %194 = vector.shape_cast %193 : vector<1x16x1xf32> to vector<16x1xf32>
    %195 = vector.broadcast %194 : vector<16x1xf32> to vector<16x64xf32>
    %196 = arith.mulf %195, %192 : vector<16x64xf32>
    %197 = arith.addf %189, %196 : vector<16x64xf32>
    %c0_68 = arith.constant 0 : index
    %c17 = arith.constant 17 : index
    %198 = vector.load %arg22[%c0_68, %c17] : memref<16x82xf32, #tpu.memory_space<vmem>>, vector<16x64xf32>
    %199 = vector.extract_strided_slice %146 {offsets = [7, 0, 0], sizes = [1, 16, 1], strides = [1, 1, 1]} : vector<9x16x1xf32> to vector<1x16x1xf32>
    %200 = vector.shape_cast %199 : vector<1x16x1xf32> to vector<16x1xf32>
    %201 = vector.broadcast %200 : vector<16x1xf32> to vector<16x64xf32>
    %202 = arith.mulf %201, %198 : vector<16x64xf32>
    %203 = arith.addf %197, %202 : vector<16x64xf32>
    %c0_69 = arith.constant 0 : index
    %c18 = arith.constant 18 : index
    %204 = vector.load %arg22[%c0_69, %c18] : memref<16x82xf32, #tpu.memory_space<vmem>>, vector<16x64xf32>
    %205 = vector.broadcast %145 : vector<1x64xf32> to vector<16x64xf32>
    %206 = arith.mulf %204, %205 : vector<16x64xf32>
    %207 = vector.extract_strided_slice %146 {offsets = [8, 0, 0], sizes = [1, 16, 1], strides = [1, 1, 1]} : vector<9x16x1xf32> to vector<1x16x1xf32>
    %208 = vector.shape_cast %207 : vector<1x16x1xf32> to vector<16x1xf32>
    %209 = vector.broadcast %208 : vector<16x1xf32> to vector<16x64xf32>
    %210 = arith.mulf %209, %206 : vector<16x64xf32>
    %211 = arith.addf %203, %210 : vector<16x64xf32>
    %c0_70 = arith.constant 0 : index
    %c0_71 = arith.constant 0 : index
    %212 = vector.load %arg9[%c0_70, %c0_71] : memref<16x1xf32, #tpu.memory_space<vmem>>, vector<16x1xf32>
    %213 = vector.broadcast %212 : vector<16x1xf32> to vector<16x64xf32>
    %214 = arith.addf %211, %213 : vector<16x64xf32>
    %cst_72 = arith.constant 1.000000e-01 : f32
    %215 = vector.broadcast %cst_72 : f32 to vector<16x64xf32>
    %216 = arith.mulf %215, %214 : vector<16x64xf32>
    %217 = arith.maximumf %214, %216 : vector<16x64xf32>
    %c0_73 = arith.constant 0 : index
    %c0_74 = arith.constant 0 : index
    %218 = vector.load %arg10[%c0_73, %c0_74] : memref<32x16xbf16, #tpu.memory_space<vmem>>, vector<32x16xbf16>
    %219 = arith.truncf %217 : vector<16x64xf32> to vector<16x64xbf16>
    %cst_75 = arith.constant dense<0.000000e+00> : vector<32x64xf32>
    %220 = tpu.matmul %218, %219, %cst_75 {dimension_numbers = #tpu.dot_dimension_numbers<[1], [0], [0], [1], [0, 0, 1, 1], [], []>} : vector<32x16xbf16>, vector<16x64xbf16>, vector<32x64xf32> -> vector<32x64xf32>
    %c0_76 = arith.constant 0 : index
    %c0_77 = arith.constant 0 : index
    %221 = vector.load %arg11[%c0_76, %c0_77] : memref<32x1xf32, #tpu.memory_space<vmem>>, vector<32x1xf32>
    %222 = vector.broadcast %221 : vector<32x1xf32> to vector<32x64xf32>
    %223 = arith.addf %220, %222 : vector<32x64xf32>
    %cst_78 = arith.constant 1.000000e-01 : f32
    %224 = vector.broadcast %cst_78 : f32 to vector<32x64xf32>
    %225 = arith.mulf %224, %223 : vector<32x64xf32>
    %226 = arith.maximumf %223, %225 : vector<32x64xf32>
    %c0_79 = arith.constant 0 : index
    %c0_80 = arith.constant 0 : index
    %227 = vector.load %arg25[%c0_79, %c0_80] : memref<32x64xf32, #tpu.memory_space<vmem>>, vector<32x64xf32>
    tpu.vector_store %arg25[%c0_79, %c0_80], %226 {strides = array<i32>} : memref<32x64xf32, #tpu.memory_space<vmem>>, vector<32x64xf32>,
    %c0_81 = arith.constant 0 : index
    %c0_82 = arith.constant 0 : index
    %228 = vector.load %arg16[%c0_81, %c0_82] : memref<4x8xbf16, #tpu.memory_space<vmem>>, vector<4x8xbf16>
    %c0_83 = arith.constant 0 : index
    %c0_84 = arith.constant 0 : index
    %229 = vector.load %arg24[%c0_83, %c0_84] : memref<32x16xf32, #tpu.memory_space<vmem>>, vector<32x4xf32>
    %230 = arith.truncf %229 : vector<32x4xf32> to vector<32x4xbf16>
    %cst_85 = arith.constant dense<0.000000e+00> : vector<32x8xf32>
    %231 = tpu.matmul %230, %228, %cst_85 {dimension_numbers = #tpu.dot_dimension_numbers<[1], [0], [0], [1], [0, 0, 1, 1], [], []>} : vector<32x4xbf16>, vector<4x8xbf16>, vector<32x8xf32> -> vector<32x8xf32>
    %c0_86 = arith.constant 0 : index
    %c4_87 = arith.constant 4 : index
    %232 = vector.load %arg24[%c0_86, %c4_87] : memref<32x16xf32, #tpu.memory_space<vmem>>, vector<32x4xf32>
    %233 = arith.truncf %232 : vector<32x4xf32> to vector<32x4xbf16>
    %cst_88 = arith.constant dense<0.000000e+00> : vector<32x8xf32>
    %234 = tpu.matmul %233, %228, %cst_88 {dimension_numbers = #tpu.dot_dimension_numbers<[1], [0], [0], [1], [0, 0, 1, 1], [], []>} : vector<32x4xbf16>, vector<4x8xbf16>, vector<32x8xf32> -> vector<32x8xf32>
    %c0_89 = arith.constant 0 : index
    %c0_90 = arith.constant 0 : index
    %235 = vector.load %arg25[%c0_89, %c0_90] : memref<32x64xf32, #tpu.memory_space<vmem>>, vector<32x8xf32>
    %cst_91 = arith.constant 2.500000e-01 : f32
    %236 = vector.broadcast %cst_91 : f32 to vector<32x8xf32>
    %237 = arith.mulf %236, %231 : vector<32x8xf32>
    %cst_92 = arith.constant 7.500000e-01 : f32
    %238 = vector.broadcast %cst_92 : f32 to vector<32x8xf32>
    %239 = arith.mulf %238, %231 : vector<32x8xf32>
    %240 = arith.addf %237, %239 : vector<32x8xf32>
    %241 = arith.addf %235, %240 : vector<32x8xf32>
    %c0_93 = arith.constant 0 : index
    %c0_94 = arith.constant 0 : index
    %242 = vector.load %arg25[%c0_93, %c0_94] : memref<32x64xf32, #tpu.memory_space<vmem>>, vector<32x8xf32>
    tpu.vector_store %arg25[%c0_93, %c0_94], %241 {strides = array<i32>} : memref<32x64xf32, #tpu.memory_space<vmem>>, vector<32x8xf32>,
    %c0_95 = arith.constant 0 : index
    %c8_96 = arith.constant 8 : index
    %243 = vector.load %arg25[%c0_95, %c8_96] : memref<32x64xf32, #tpu.memory_space<vmem>>, vector<32x8xf32>
    %cst_97 = arith.constant 7.500000e-01 : f32
    %244 = vector.broadcast %cst_97 : f32 to vector<32x8xf32>
    %245 = arith.mulf %244, %231 : vector<32x8xf32>
    %cst_98 = arith.constant 2.500000e-01 : f32
    %246 = vector.broadcast %cst_98 : f32 to vector<32x8xf32>
    %247 = arith.mulf %246, %234 : vector<32x8xf32>
    %248 = arith.addf %245, %247 : vector<32x8xf32>
    %249 = arith.addf %243, %248 : vector<32x8xf32>
    %c0_99 = arith.constant 0 : index
    %c8_100 = arith.constant 8 : index
    %250 = vector.load %arg25[%c0_99, %c8_100] : memref<32x64xf32, #tpu.memory_space<vmem>>, vector<32x8xf32>
    tpu.vector_store %arg25[%c0_99, %c8_100], %249 {strides = array<i32>} : memref<32x64xf32, #tpu.memory_space<vmem>>, vector<32x8xf32>,
    %c0_101 = arith.constant 0 : index
    %c8_102 = arith.constant 8 : index
    %251 = vector.load %arg24[%c0_101, %c8_102] : memref<32x16xf32, #tpu.memory_space<vmem>>, vector<32x4xf32>
    %252 = arith.truncf %251 : vector<32x4xf32> to vector<32x4xbf16>
    %cst_103 = arith.constant dense<0.000000e+00> : vector<32x8xf32>
    %253 = tpu.matmul %252, %228, %cst_103 {dimension_numbers = #tpu.dot_dimension_numbers<[1], [0], [0], [1], [0, 0, 1, 1], [], []>} : vector<32x4xbf16>, vector<4x8xbf16>, vector<32x8xf32> -> vector<32x8xf32>
    %c0_104 = arith.constant 0 : index
    %c16_105 = arith.constant 16 : index
    %254 = vector.load %arg25[%c0_104, %c16_105] : memref<32x64xf32, #tpu.memory_space<vmem>>, vector<32x8xf32>
    %cst_106 = arith.constant 2.500000e-01 : f32
    %255 = vector.broadcast %cst_106 : f32 to vector<32x8xf32>
    %256 = arith.mulf %255, %231 : vector<32x8xf32>
    %cst_107 = arith.constant 7.500000e-01 : f32
    %257 = vector.broadcast %cst_107 : f32 to vector<32x8xf32>
    %258 = arith.mulf %257, %234 : vector<32x8xf32>
    %259 = arith.addf %256, %258 : vector<32x8xf32>
    %260 = arith.addf %254, %259 : vector<32x8xf32>
    %c0_108 = arith.constant 0 : index
    %c16_109 = arith.constant 16 : index
    %261 = vector.load %arg25[%c0_108, %c16_109] : memref<32x64xf32, #tpu.memory_space<vmem>>, vector<32x8xf32>
    tpu.vector_store %arg25[%c0_108, %c16_109], %260 {strides = array<i32>} : memref<32x64xf32, #tpu.memory_space<vmem>>, vector<32x8xf32>,
    %c0_110 = arith.constant 0 : index
    %c24 = arith.constant 24 : index
    %262 = vector.load %arg25[%c0_110, %c24] : memref<32x64xf32, #tpu.memory_space<vmem>>, vector<32x8xf32>
    %cst_111 = arith.constant 7.500000e-01 : f32
    %263 = vector.broadcast %cst_111 : f32 to vector<32x8xf32>
    %264 = arith.mulf %263, %234 : vector<32x8xf32>
    %cst_112 = arith.constant 2.500000e-01 : f32
    %265 = vector.broadcast %cst_112 : f32 to vector<32x8xf32>
    %266 = arith.mulf %265, %253 : vector<32x8xf32>
    %267 = arith.addf %264, %266 : vector<32x8xf32>
    %268 = arith.addf %262, %267 : vector<32x8xf32>
    %c0_113 = arith.constant 0 : index
    %c24_114 = arith.constant 24 : index
    %269 = vector.load %arg25[%c0_113, %c24_114] : memref<32x64xf32, #tpu.memory_space<vmem>>, vector<32x8xf32>
    tpu.vector_store %arg25[%c0_113, %c24_114], %268 {strides = array<i32>} : memref<32x64xf32, #tpu.memory_space<vmem>>, vector<32x8xf32>,
    %c0_115 = arith.constant 0 : index
    %c12 = arith.constant 12 : index
    %270 = vector.load %arg24[%c0_115, %c12] : memref<32x16xf32, #tpu.memory_space<vmem>>, vector<32x4xf32>
    %271 = arith.truncf %270 : vector<32x4xf32> to vector<32x4xbf16>
    %cst_116 = arith.constant dense<0.000000e+00> : vector<32x8xf32>
    %272 = tpu.matmul %271, %228, %cst_116 {dimension_numbers = #tpu.dot_dimension_numbers<[1], [0], [0], [1], [0, 0, 1, 1], [], []>} : vector<32x4xbf16>, vector<4x8xbf16>, vector<32x8xf32> -> vector<32x8xf32>
    %c0_117 = arith.constant 0 : index
    %c32 = arith.constant 32 : index
    %273 = vector.load %arg25[%c0_117, %c32] : memref<32x64xf32, #tpu.memory_space<vmem>>, vector<32x8xf32>
    %cst_118 = arith.constant 2.500000e-01 : f32
    %274 = vector.broadcast %cst_118 : f32 to vector<32x8xf32>
    %275 = arith.mulf %274, %234 : vector<32x8xf32>
    %cst_119 = arith.constant 7.500000e-01 : f32
    %276 = vector.broadcast %cst_119 : f32 to vector<32x8xf32>
    %277 = arith.mulf %276, %253 : vector<32x8xf32>
    %278 = arith.addf %275, %277 : vector<32x8xf32>
    %279 = arith.addf %273, %278 : vector<32x8xf32>
    %c0_120 = arith.constant 0 : index
    %c32_121 = arith.constant 32 : index
    %280 = vector.load %arg25[%c0_120, %c32_121] : memref<32x64xf32, #tpu.memory_space<vmem>>, vector<32x8xf32>
    tpu.vector_store %arg25[%c0_120, %c32_121], %279 {strides = array<i32>} : memref<32x64xf32, #tpu.memory_space<vmem>>, vector<32x8xf32>,
    %c0_122 = arith.constant 0 : index
    %c40 = arith.constant 40 : index
    %281 = vector.load %arg25[%c0_122, %c40] : memref<32x64xf32, #tpu.memory_space<vmem>>, vector<32x8xf32>
    %cst_123 = arith.constant 7.500000e-01 : f32
    %282 = vector.broadcast %cst_123 : f32 to vector<32x8xf32>
    %283 = arith.mulf %282, %253 : vector<32x8xf32>
    %cst_124 = arith.constant 2.500000e-01 : f32
    %284 = vector.broadcast %cst_124 : f32 to vector<32x8xf32>
    %285 = arith.mulf %284, %272 : vector<32x8xf32>
    %286 = arith.addf %283, %285 : vector<32x8xf32>
    %287 = arith.addf %281, %286 : vector<32x8xf32>
    %c0_125 = arith.constant 0 : index
    %c40_126 = arith.constant 40 : index
    %288 = vector.load %arg25[%c0_125, %c40_126] : memref<32x64xf32, #tpu.memory_space<vmem>>, vector<32x8xf32>
    tpu.vector_store %arg25[%c0_125, %c40_126], %287 {strides = array<i32>} : memref<32x64xf32, #tpu.memory_space<vmem>>, vector<32x8xf32>,
    %c0_127 = arith.constant 0 : index
    %c48 = arith.constant 48 : index
    %289 = vector.load %arg25[%c0_127, %c48] : memref<32x64xf32, #tpu.memory_space<vmem>>, vector<32x8xf32>
    %cst_128 = arith.constant 2.500000e-01 : f32
    %290 = vector.broadcast %cst_128 : f32 to vector<32x8xf32>
    %291 = arith.mulf %290, %253 : vector<32x8xf32>
    %cst_129 = arith.constant 7.500000e-01 : f32
    %292 = vector.broadcast %cst_129 : f32 to vector<32x8xf32>
    %293 = arith.mulf %292, %272 : vector<32x8xf32>
    %294 = arith.addf %291, %293 : vector<32x8xf32>
    %295 = arith.addf %289, %294 : vector<32x8xf32>
    %c0_130 = arith.constant 0 : index
    %c48_131 = arith.constant 48 : index
    %296 = vector.load %arg25[%c0_130, %c48_131] : memref<32x64xf32, #tpu.memory_space<vmem>>, vector<32x8xf32>
    tpu.vector_store %arg25[%c0_130, %c48_131], %295 {strides = array<i32>} : memref<32x64xf32, #tpu.memory_space<vmem>>, vector<32x8xf32>,
    %c0_132 = arith.constant 0 : index
    %c56 = arith.constant 56 : index
    %297 = vector.load %arg25[%c0_132, %c56] : memref<32x64xf32, #tpu.memory_space<vmem>>, vector<32x8xf32>
    %cst_133 = arith.constant 7.500000e-01 : f32
    %298 = vector.broadcast %cst_133 : f32 to vector<32x8xf32>
    %299 = arith.mulf %298, %272 : vector<32x8xf32>
    %cst_134 = arith.constant 2.500000e-01 : f32
    %300 = vector.broadcast %cst_134 : f32 to vector<32x8xf32>
    %301 = arith.mulf %300, %272 : vector<32x8xf32>
    %302 = arith.addf %299, %301 : vector<32x8xf32>
    %303 = arith.addf %297, %302 : vector<32x8xf32>
    %c0_135 = arith.constant 0 : index
    %c56_136 = arith.constant 56 : index
    %304 = vector.load %arg25[%c0_135, %c56_136] : memref<32x64xf32, #tpu.memory_space<vmem>>, vector<32x8xf32>
    tpu.vector_store %arg25[%c0_135, %c56_136], %303 {strides = array<i32>} : memref<32x64xf32, #tpu.memory_space<vmem>>, vector<32x8xf32>,
    %cst_137 = arith.constant 0.000000e+00 : f32
    %305 = vector.broadcast %cst_137 : f32 to vector<16x17xf32>
    %c0_138 = arith.constant 0 : index
    %c0_139 = arith.constant 0 : index
    %306 = vector.load %arg23[%c0_138, %c0_139] : memref<16x290xf32, #tpu.memory_space<vmem>>, vector<16x17xf32>
    tpu.vector_store %arg23[%c0_138, %c0_139], %305 {strides = array<i32>} : memref<16x290xf32, #tpu.memory_space<vmem>>, vector<16x17xf32>,
    %cst_140 = arith.constant 0.000000e+00 : f32
    %307 = vector.broadcast %cst_140 : f32 to vector<16x17xf32>
    %c0_141 = arith.constant 0 : index
    %c273 = arith.constant 273 : index
    %308 = vector.load %arg23[%c0_141, %c273] : memref<16x290xf32, #tpu.memory_space<vmem>>, vector<16x17xf32>
    tpu.vector_store %arg23[%c0_141, %c273], %307 {strides = array<i32>} : memref<16x290xf32, #tpu.memory_space<vmem>>, vector<16x17xf32>,
    %c0_142 = arith.constant 0 : index
    %c0_143 = arith.constant 0 : index
    %c0_144 = arith.constant 0 : index
    %309 = vector.load %arg3[%c0_142, %c0_143, %c0_144] : memref<1x16x256xf32, #tpu.memory_space<vmem>>, vector<1x16x256xf32>
    %310 = vector.shape_cast %309 : vector<1x16x256xf32> to vector<16x256xf32>
    %c0_145 = arith.constant 0 : index
    %c17_146 = arith.constant 17 : index
    %311 = vector.load %arg23[%c0_145, %c17_146] : memref<16x290xf32, #tpu.memory_space<vmem>>, vector<16x256xf32>
    tpu.vector_store %arg23[%c0_145, %c17_146], %310 {strides = array<i32>} : memref<16x290xf32, #tpu.memory_space<vmem>>, vector<16x256xf32>,
    %312 = tpu.iota {dimensions = array<i32: 1>} : vector<1x256xi32>
    %c16_i32 = arith.constant 16 : i32
    %c0_i32_147 = arith.constant 0 : i32
    %313 = arith.cmpi eq, %c16_i32, %c0_i32_147 : i32
    %c1_i32_148 = arith.constant 1 : i32
    %314 = arith.select %313, %c1_i32_148, %c16_i32 : i32
    %315 = vector.broadcast %314 : i32 to vector<1x256xi32>
    %316 = arith.remsi %312, %315 : vector<1x256xi32>
    %c0_i32_149 = arith.constant 0 : i32
    %317 = vector.broadcast %c0_i32_149 : i32 to vector<1x256xi32>
    %318 = arith.cmpi ne, %316, %317 : vector<1x256xi32>
    %c0_i32_150 = arith.constant 0 : i32
    %319 = vector.broadcast %c0_i32_150 : i32 to vector<1x256xi32>
    %320 = arith.cmpi slt, %316, %319 : vector<1x256xi32>
    %c0_i32_151 = arith.constant 0 : i32
    %321 = arith.cmpi slt, %314, %c0_i32_151 : i32
    %322 = vector.broadcast %321 : i1 to vector<1x256xi1>
    %323 = vector.broadcast %322 : vector<1x256xi1> to vector<1x256xi1>
    %324 = arith.xori %320, %323 : vector<1x256xi1>
    %325 = arith.andi %324, %318 : vector<1x256xi1>
    %326 = vector.broadcast %314 : i32 to vector<1x256xi32>
    %327 = arith.addi %316, %326 : vector<1x256xi32>
    %328 = arith.select %325, %327, %316 : vector<1x256xi1>, vector<1x256xi32>
    %c1_i32_152 = arith.constant 1 : i32
    %329 = vector.broadcast %c1_i32_152 : i32 to vector<1x256xi32>
    %330 = arith.cmpi sge, %328, %329 : vector<1x256xi32>
    %331 = arith.extui %330 : vector<1x256xi1> to vector<1x256xi32>
    %332 = arith.sitofp %331 : vector<1x256xi32> to vector<1x256xf32>
    %c14_i32 = arith.constant 14 : i32
    %333 = vector.broadcast %c14_i32 : i32 to vector<1x256xi32>
    %334 = arith.cmpi sle, %328, %333 : vector<1x256xi32>
    %335 = arith.extui %334 : vector<1x256xi1> to vector<1x256xi32>
    %336 = arith.sitofp %335 : vector<1x256xi32> to vector<1x256xf32>
    %c0_153 = arith.constant 0 : index
    %c0_154 = arith.constant 0 : index
    %c0_155 = arith.constant 0 : index
    %337 = vector.load %arg12[%c0_153, %c0_154, %c0_155] : memref<9x16x1xf32, #tpu.memory_space<vmem>>, vector<9x16x1xf32>
    %c0_156 = arith.constant 0 : index
    %c0_157 = arith.constant 0 : index
    %338 = vector.load %arg23[%c0_156, %c0_157] : memref<16x290xf32, #tpu.memory_space<vmem>>, vector<16x256xf32>
    %339 = vector.broadcast %332 : vector<1x256xf32> to vector<16x256xf32>
    %340 = arith.mulf %338, %339 : vector<16x256xf32>
    %341 = vector.extract_strided_slice %337 {offsets = [0, 0, 0], sizes = [1, 16, 1], strides = [1, 1, 1]} : vector<9x16x1xf32> to vector<1x16x1xf32>
    %342 = vector.shape_cast %341 : vector<1x16x1xf32> to vector<16x1xf32>
    %343 = vector.broadcast %342 : vector<16x1xf32> to vector<16x256xf32>
    %344 = arith.mulf %343, %340 : vector<16x256xf32>
    %c0_158 = arith.constant 0 : index
    %c1_159 = arith.constant 1 : index
    %345 = vector.load %arg23[%c0_158, %c1_159] : memref<16x290xf32, #tpu.memory_space<vmem>>, vector<16x256xf32>
    %346 = vector.extract_strided_slice %337 {offsets = [1, 0, 0], sizes = [1, 16, 1], strides = [1, 1, 1]} : vector<9x16x1xf32> to vector<1x16x1xf32>
    %347 = vector.shape_cast %346 : vector<1x16x1xf32> to vector<16x1xf32>
    %348 = vector.broadcast %347 : vector<16x1xf32> to vector<16x256xf32>
    %349 = arith.mulf %348, %345 : vector<16x256xf32>
    %350 = arith.addf %344, %349 : vector<16x256xf32>
    %c0_160 = arith.constant 0 : index
    %c2_161 = arith.constant 2 : index
    %351 = vector.load %arg23[%c0_160, %c2_161] : memref<16x290xf32, #tpu.memory_space<vmem>>, vector<16x256xf32>
    %352 = vector.broadcast %336 : vector<1x256xf32> to vector<16x256xf32>
    %353 = arith.mulf %351, %352 : vector<16x256xf32>
    %354 = vector.extract_strided_slice %337 {offsets = [2, 0, 0], sizes = [1, 16, 1], strides = [1, 1, 1]} : vector<9x16x1xf32> to vector<1x16x1xf32>
    %355 = vector.shape_cast %354 : vector<1x16x1xf32> to vector<16x1xf32>
    %356 = vector.broadcast %355 : vector<16x1xf32> to vector<16x256xf32>
    %357 = arith.mulf %356, %353 : vector<16x256xf32>
    %358 = arith.addf %350, %357 : vector<16x256xf32>
    %c0_162 = arith.constant 0 : index
    %c16_163 = arith.constant 16 : index
    %359 = vector.load %arg23[%c0_162, %c16_163] : memref<16x290xf32, #tpu.memory_space<vmem>>, vector<16x256xf32>
    %360 = vector.broadcast %332 : vector<1x256xf32> to vector<16x256xf32>
    %361 = arith.mulf %359, %360 : vector<16x256xf32>
    %362 = vector.extract_strided_slice %337 {offsets = [3, 0, 0], sizes = [1, 16, 1], strides = [1, 1, 1]} : vector<9x16x1xf32> to vector<1x16x1xf32>
    %363 = vector.shape_cast %362 : vector<1x16x1xf32> to vector<16x1xf32>
    %364 = vector.broadcast %363 : vector<16x1xf32> to vector<16x256xf32>
    %365 = arith.mulf %364, %361 : vector<16x256xf32>
    %366 = arith.addf %358, %365 : vector<16x256xf32>
    %c0_164 = arith.constant 0 : index
    %c17_165 = arith.constant 17 : index
    %367 = vector.load %arg23[%c0_164, %c17_165] : memref<16x290xf32, #tpu.memory_space<vmem>>, vector<16x256xf32>
    %368 = vector.extract_strided_slice %337 {offsets = [4, 0, 0], sizes = [1, 16, 1], strides = [1, 1, 1]} : vector<9x16x1xf32> to vector<1x16x1xf32>
    %369 = vector.shape_cast %368 : vector<1x16x1xf32> to vector<16x1xf32>
    %370 = vector.broadcast %369 : vector<16x1xf32> to vector<16x256xf32>
    %371 = arith.mulf %370, %367 : vector<16x256xf32>
    %372 = arith.addf %366, %371 : vector<16x256xf32>
    %c0_166 = arith.constant 0 : index
    %c18_167 = arith.constant 18 : index
    %373 = vector.load %arg23[%c0_166, %c18_167] : memref<16x290xf32, #tpu.memory_space<vmem>>, vector<16x256xf32>
    %374 = vector.broadcast %336 : vector<1x256xf32> to vector<16x256xf32>
    %375 = arith.mulf %373, %374 : vector<16x256xf32>
    %376 = vector.extract_strided_slice %337 {offsets = [5, 0, 0], sizes = [1, 16, 1], strides = [1, 1, 1]} : vector<9x16x1xf32> to vector<1x16x1xf32>
    %377 = vector.shape_cast %376 : vector<1x16x1xf32> to vector<16x1xf32>
    %378 = vector.broadcast %377 : vector<16x1xf32> to vector<16x256xf32>
    %379 = arith.mulf %378, %375 : vector<16x256xf32>
    %380 = arith.addf %372, %379 : vector<16x256xf32>
    %c0_168 = arith.constant 0 : index
    %c32_169 = arith.constant 32 : index
    %381 = vector.load %arg23[%c0_168, %c32_169] : memref<16x290xf32, #tpu.memory_space<vmem>>, vector<16x256xf32>
    %382 = vector.broadcast %332 : vector<1x256xf32> to vector<16x256xf32>
    %383 = arith.mulf %381, %382 : vector<16x256xf32>
    %384 = vector.extract_strided_slice %337 {offsets = [6, 0, 0], sizes = [1, 16, 1], strides = [1, 1, 1]} : vector<9x16x1xf32> to vector<1x16x1xf32>
    %385 = vector.shape_cast %384 : vector<1x16x1xf32> to vector<16x1xf32>
    %386 = vector.broadcast %385 : vector<16x1xf32> to vector<16x256xf32>
    %387 = arith.mulf %386, %383 : vector<16x256xf32>
    %388 = arith.addf %380, %387 : vector<16x256xf32>
    %c0_170 = arith.constant 0 : index
    %c33 = arith.constant 33 : index
    %389 = vector.load %arg23[%c0_170, %c33] : memref<16x290xf32, #tpu.memory_space<vmem>>, vector<16x256xf32>
    %390 = vector.extract_strided_slice %337 {offsets = [7, 0, 0], sizes = [1, 16, 1], strides = [1, 1, 1]} : vector<9x16x1xf32> to vector<1x16x1xf32>
    %391 = vector.shape_cast %390 : vector<1x16x1xf32> to vector<16x1xf32>
    %392 = vector.broadcast %391 : vector<16x1xf32> to vector<16x256xf32>
    %393 = arith.mulf %392, %389 : vector<16x256xf32>
    %394 = arith.addf %388, %393 : vector<16x256xf32>
    %c0_171 = arith.constant 0 : index
    %c34 = arith.constant 34 : index
    %395 = vector.load %arg23[%c0_171, %c34] : memref<16x290xf32, #tpu.memory_space<vmem>>, vector<16x256xf32>
    %396 = vector.broadcast %336 : vector<1x256xf32> to vector<16x256xf32>
    %397 = arith.mulf %395, %396 : vector<16x256xf32>
    %398 = vector.extract_strided_slice %337 {offsets = [8, 0, 0], sizes = [1, 16, 1], strides = [1, 1, 1]} : vector<9x16x1xf32> to vector<1x16x1xf32>
    %399 = vector.shape_cast %398 : vector<1x16x1xf32> to vector<16x1xf32>
    %400 = vector.broadcast %399 : vector<16x1xf32> to vector<16x256xf32>
    %401 = arith.mulf %400, %397 : vector<16x256xf32>
    %402 = arith.addf %394, %401 : vector<16x256xf32>
    %c0_172 = arith.constant 0 : index
    %c0_173 = arith.constant 0 : index
    %403 = vector.load %arg13[%c0_172, %c0_173] : memref<16x1xf32, #tpu.memory_space<vmem>>, vector<16x1xf32>
    %404 = vector.broadcast %403 : vector<16x1xf32> to vector<16x256xf32>
    %405 = arith.addf %402, %404 : vector<16x256xf32>
    %cst_174 = arith.constant 1.000000e-01 : f32
    %406 = vector.broadcast %cst_174 : f32 to vector<16x256xf32>
    %407 = arith.mulf %406, %405 : vector<16x256xf32>
    %408 = arith.maximumf %405, %407 : vector<16x256xf32>
    %c0_175 = arith.constant 0 : index
    %c0_176 = arith.constant 0 : index
    %409 = vector.load %arg14[%c0_175, %c0_176] : memref<32x16xbf16, #tpu.memory_space<vmem>>, vector<32x16xbf16>
    %410 = arith.truncf %408 : vector<16x256xf32> to vector<16x256xbf16>
    %cst_177 = arith.constant dense<0.000000e+00> : vector<32x256xf32>
    %411 = tpu.matmul %409, %410, %cst_177 {dimension_numbers = #tpu.dot_dimension_numbers<[1], [0], [0], [1], [0, 0, 1, 1], [], []>} : vector<32x16xbf16>, vector<16x256xbf16>, vector<32x256xf32> -> vector<32x256xf32>
    %c0_178 = arith.constant 0 : index
    %c0_179 = arith.constant 0 : index
    %412 = vector.load %arg15[%c0_178, %c0_179] : memref<32x1xf32, #tpu.memory_space<vmem>>, vector<32x1xf32>
    %413 = vector.broadcast %412 : vector<32x1xf32> to vector<32x256xf32>
    %414 = arith.addf %411, %413 : vector<32x256xf32>
    %cst_180 = arith.constant 1.000000e-01 : f32
    %415 = vector.broadcast %cst_180 : f32 to vector<32x256xf32>
    %416 = arith.mulf %415, %414 : vector<32x256xf32>
    %417 = arith.maximumf %414, %416 : vector<32x256xf32>
    %c0_181 = arith.constant 0 : index
    %c0_182 = arith.constant 0 : index
    %418 = vector.load %arg26[%c0_181, %c0_182] : memref<32x256xf32, #tpu.memory_space<vmem>>, vector<32x256xf32>
    tpu.vector_store %arg26[%c0_181, %c0_182], %417 {strides = array<i32>} : memref<32x256xf32, #tpu.memory_space<vmem>>, vector<32x256xf32>,
    %c0_183 = arith.constant 0 : index
    %c0_184 = arith.constant 0 : index
    %419 = vector.load %arg17[%c0_183, %c0_184] : memref<8x16xbf16, #tpu.memory_space<vmem>>, vector<8x16xbf16>
    %c0_185 = arith.constant 0 : index
    %c0_186 = arith.constant 0 : index
    %420 = vector.load %arg25[%c0_185, %c0_186] : memref<32x64xf32, #tpu.memory_space<vmem>>, vector<32x8xf32>
    %421 = arith.truncf %420 : vector<32x8xf32> to vector<32x8xbf16>
    %cst_187 = arith.constant dense<0.000000e+00> : vector<32x16xf32>
    %422 = tpu.matmul %421, %419, %cst_187 {dimension_numbers = #tpu.dot_dimension_numbers<[1], [0], [0], [1], [0, 0, 1, 1], [], []>} : vector<32x8xbf16>, vector<8x16xbf16>, vector<32x16xf32> -> vector<32x16xf32>
    %c0_188 = arith.constant 0 : index
    %c8_189 = arith.constant 8 : index
    %423 = vector.load %arg25[%c0_188, %c8_189] : memref<32x64xf32, #tpu.memory_space<vmem>>, vector<32x8xf32>
    %424 = arith.truncf %423 : vector<32x8xf32> to vector<32x8xbf16>
    %cst_190 = arith.constant dense<0.000000e+00> : vector<32x16xf32>
    %425 = tpu.matmul %424, %419, %cst_190 {dimension_numbers = #tpu.dot_dimension_numbers<[1], [0], [0], [1], [0, 0, 1, 1], [], []>} : vector<32x8xbf16>, vector<8x16xbf16>, vector<32x16xf32> -> vector<32x16xf32>
    %c0_191 = arith.constant 0 : index
    %c0_192 = arith.constant 0 : index
    %426 = vector.load %arg26[%c0_191, %c0_192] : memref<32x256xf32, #tpu.memory_space<vmem>>, vector<32x16xf32>
    %cst_193 = arith.constant 2.500000e-01 : f32
    %427 = vector.broadcast %cst_193 : f32 to vector<32x16xf32>
    %428 = arith.mulf %427, %422 : vector<32x16xf32>
    %cst_194 = arith.constant 7.500000e-01 : f32
    %429 = vector.broadcast %cst_194 : f32 to vector<32x16xf32>
    %430 = arith.mulf %429, %422 : vector<32x16xf32>
    %431 = arith.addf %428, %430 : vector<32x16xf32>
    %432 = arith.addf %426, %431 : vector<32x16xf32>
    %c0_195 = arith.constant 0 : index
    %c0_196 = arith.constant 0 : index
    %433 = vector.load %arg26[%c0_195, %c0_196] : memref<32x256xf32, #tpu.memory_space<vmem>>, vector<32x16xf32>
    tpu.vector_store %arg26[%c0_195, %c0_196], %432 {strides = array<i32>} : memref<32x256xf32, #tpu.memory_space<vmem>>, vector<32x16xf32>,
    %c0_197 = arith.constant 0 : index
    %c16_198 = arith.constant 16 : index
    %434 = vector.load %arg26[%c0_197, %c16_198] : memref<32x256xf32, #tpu.memory_space<vmem>>, vector<32x16xf32>
    %cst_199 = arith.constant 7.500000e-01 : f32
    %435 = vector.broadcast %cst_199 : f32 to vector<32x16xf32>
    %436 = arith.mulf %435, %422 : vector<32x16xf32>
    %cst_200 = arith.constant 2.500000e-01 : f32
    %437 = vector.broadcast %cst_200 : f32 to vector<32x16xf32>
    %438 = arith.mulf %437, %425 : vector<32x16xf32>
    %439 = arith.addf %436, %438 : vector<32x16xf32>
    %440 = arith.addf %434, %439 : vector<32x16xf32>
    %c0_201 = arith.constant 0 : index
    %c16_202 = arith.constant 16 : index
    %441 = vector.load %arg26[%c0_201, %c16_202] : memref<32x256xf32, #tpu.memory_space<vmem>>, vector<32x16xf32>
    tpu.vector_store %arg26[%c0_201, %c16_202], %440 {strides = array<i32>} : memref<32x256xf32, #tpu.memory_space<vmem>>, vector<32x16xf32>,
    %c0_203 = arith.constant 0 : index
    %c16_204 = arith.constant 16 : index
    %442 = vector.load %arg25[%c0_203, %c16_204] : memref<32x64xf32, #tpu.memory_space<vmem>>, vector<32x8xf32>
    %443 = arith.truncf %442 : vector<32x8xf32> to vector<32x8xbf16>
    %cst_205 = arith.constant dense<0.000000e+00> : vector<32x16xf32>
    %444 = tpu.matmul %443, %419, %cst_205 {dimension_numbers = #tpu.dot_dimension_numbers<[1], [0], [0], [1], [0, 0, 1, 1], [], []>} : vector<32x8xbf16>, vector<8x16xbf16>, vector<32x16xf32> -> vector<32x16xf32>
    %c0_206 = arith.constant 0 : index
    %c32_207 = arith.constant 32 : index
    %445 = vector.load %arg26[%c0_206, %c32_207] : memref<32x256xf32, #tpu.memory_space<vmem>>, vector<32x16xf32>
    %cst_208 = arith.constant 2.500000e-01 : f32
    %446 = vector.broadcast %cst_208 : f32 to vector<32x16xf32>
    %447 = arith.mulf %446, %422 : vector<32x16xf32>
    %cst_209 = arith.constant 7.500000e-01 : f32
    %448 = vector.broadcast %cst_209 : f32 to vector<32x16xf32>
    %449 = arith.mulf %448, %425 : vector<32x16xf32>
    %450 = arith.addf %447, %449 : vector<32x16xf32>
    %451 = arith.addf %445, %450 : vector<32x16xf32>
    %c0_210 = arith.constant 0 : index
    %c32_211 = arith.constant 32 : index
    %452 = vector.load %arg26[%c0_210, %c32_211] : memref<32x256xf32, #tpu.memory_space<vmem>>, vector<32x16xf32>
    tpu.vector_store %arg26[%c0_210, %c32_211], %451 {strides = array<i32>} : memref<32x256xf32, #tpu.memory_space<vmem>>, vector<32x16xf32>,
    %c0_212 = arith.constant 0 : index
    %c48_213 = arith.constant 48 : index
    %453 = vector.load %arg26[%c0_212, %c48_213] : memref<32x256xf32, #tpu.memory_space<vmem>>, vector<32x16xf32>
    %cst_214 = arith.constant 7.500000e-01 : f32
    %454 = vector.broadcast %cst_214 : f32 to vector<32x16xf32>
    %455 = arith.mulf %454, %425 : vector<32x16xf32>
    %cst_215 = arith.constant 2.500000e-01 : f32
    %456 = vector.broadcast %cst_215 : f32 to vector<32x16xf32>
    %457 = arith.mulf %456, %444 : vector<32x16xf32>
    %458 = arith.addf %455, %457 : vector<32x16xf32>
    %459 = arith.addf %453, %458 : vector<32x16xf32>
    %c0_216 = arith.constant 0 : index
    %c48_217 = arith.constant 48 : index
    %460 = vector.load %arg26[%c0_216, %c48_217] : memref<32x256xf32, #tpu.memory_space<vmem>>, vector<32x16xf32>
    tpu.vector_store %arg26[%c0_216, %c48_217], %459 {strides = array<i32>} : memref<32x256xf32, #tpu.memory_space<vmem>>, vector<32x16xf32>,
    %c0_218 = arith.constant 0 : index
    %c24_219 = arith.constant 24 : index
    %461 = vector.load %arg25[%c0_218, %c24_219] : memref<32x64xf32, #tpu.memory_space<vmem>>, vector<32x8xf32>
    %462 = arith.truncf %461 : vector<32x8xf32> to vector<32x8xbf16>
    %cst_220 = arith.constant dense<0.000000e+00> : vector<32x16xf32>
    %463 = tpu.matmul %462, %419, %cst_220 {dimension_numbers = #tpu.dot_dimension_numbers<[1], [0], [0], [1], [0, 0, 1, 1], [], []>} : vector<32x8xbf16>, vector<8x16xbf16>, vector<32x16xf32> -> vector<32x16xf32>
    %c0_221 = arith.constant 0 : index
    %c64 = arith.constant 64 : index
    %464 = vector.load %arg26[%c0_221, %c64] : memref<32x256xf32, #tpu.memory_space<vmem>>, vector<32x16xf32>
    %cst_222 = arith.constant 2.500000e-01 : f32
    %465 = vector.broadcast %cst_222 : f32 to vector<32x16xf32>
    %466 = arith.mulf %465, %425 : vector<32x16xf32>
    %cst_223 = arith.constant 7.500000e-01 : f32
    %467 = vector.broadcast %cst_223 : f32 to vector<32x16xf32>
    %468 = arith.mulf %467, %444 : vector<32x16xf32>
    %469 = arith.addf %466, %468 : vector<32x16xf32>
    %470 = arith.addf %464, %469 : vector<32x16xf32>
    %c0_224 = arith.constant 0 : index
    %c64_225 = arith.constant 64 : index
    %471 = vector.load %arg26[%c0_224, %c64_225] : memref<32x256xf32, #tpu.memory_space<vmem>>, vector<32x16xf32>
    tpu.vector_store %arg26[%c0_224, %c64_225], %470 {strides = array<i32>} : memref<32x256xf32, #tpu.memory_space<vmem>>, vector<32x16xf32>,
    %c0_226 = arith.constant 0 : index
    %c80 = arith.constant 80 : index
    %472 = vector.load %arg26[%c0_226, %c80] : memref<32x256xf32, #tpu.memory_space<vmem>>, vector<32x16xf32>
    %cst_227 = arith.constant 7.500000e-01 : f32
    %473 = vector.broadcast %cst_227 : f32 to vector<32x16xf32>
    %474 = arith.mulf %473, %444 : vector<32x16xf32>
    %cst_228 = arith.constant 2.500000e-01 : f32
    %475 = vector.broadcast %cst_228 : f32 to vector<32x16xf32>
    %476 = arith.mulf %475, %463 : vector<32x16xf32>
    %477 = arith.addf %474, %476 : vector<32x16xf32>
    %478 = arith.addf %472, %477 : vector<32x16xf32>
    %c0_229 = arith.constant 0 : index
    %c80_230 = arith.constant 80 : index
    %479 = vector.load %arg26[%c0_229, %c80_230] : memref<32x256xf32, #tpu.memory_space<vmem>>, vector<32x16xf32>
    tpu.vector_store %arg26[%c0_229, %c80_230], %478 {strides = array<i32>} : memref<32x256xf32, #tpu.memory_space<vmem>>, vector<32x16xf32>,
    %c0_231 = arith.constant 0 : index
    %c32_232 = arith.constant 32 : index
    %480 = vector.load %arg25[%c0_231, %c32_232] : memref<32x64xf32, #tpu.memory_space<vmem>>, vector<32x8xf32>
    %481 = arith.truncf %480 : vector<32x8xf32> to vector<32x8xbf16>
    %cst_233 = arith.constant dense<0.000000e+00> : vector<32x16xf32>
    %482 = tpu.matmul %481, %419, %cst_233 {dimension_numbers = #tpu.dot_dimension_numbers<[1], [0], [0], [1], [0, 0, 1, 1], [], []>} : vector<32x8xbf16>, vector<8x16xbf16>, vector<32x16xf32> -> vector<32x16xf32>
    %c0_234 = arith.constant 0 : index
    %c96 = arith.constant 96 : index
    %483 = vector.load %arg26[%c0_234, %c96] : memref<32x256xf32, #tpu.memory_space<vmem>>, vector<32x16xf32>
    %cst_235 = arith.constant 2.500000e-01 : f32
    %484 = vector.broadcast %cst_235 : f32 to vector<32x16xf32>
    %485 = arith.mulf %484, %444 : vector<32x16xf32>
    %cst_236 = arith.constant 7.500000e-01 : f32
    %486 = vector.broadcast %cst_236 : f32 to vector<32x16xf32>
    %487 = arith.mulf %486, %463 : vector<32x16xf32>
    %488 = arith.addf %485, %487 : vector<32x16xf32>
    %489 = arith.addf %483, %488 : vector<32x16xf32>
    %c0_237 = arith.constant 0 : index
    %c96_238 = arith.constant 96 : index
    %490 = vector.load %arg26[%c0_237, %c96_238] : memref<32x256xf32, #tpu.memory_space<vmem>>, vector<32x16xf32>
    tpu.vector_store %arg26[%c0_237, %c96_238], %489 {strides = array<i32>} : memref<32x256xf32, #tpu.memory_space<vmem>>, vector<32x16xf32>,
    %c0_239 = arith.constant 0 : index
    %c112 = arith.constant 112 : index
    %491 = vector.load %arg26[%c0_239, %c112] : memref<32x256xf32, #tpu.memory_space<vmem>>, vector<32x16xf32>
    %cst_240 = arith.constant 7.500000e-01 : f32
    %492 = vector.broadcast %cst_240 : f32 to vector<32x16xf32>
    %493 = arith.mulf %492, %463 : vector<32x16xf32>
    %cst_241 = arith.constant 2.500000e-01 : f32
    %494 = vector.broadcast %cst_241 : f32 to vector<32x16xf32>
    %495 = arith.mulf %494, %482 : vector<32x16xf32>
    %496 = arith.addf %493, %495 : vector<32x16xf32>
    %497 = arith.addf %491, %496 : vector<32x16xf32>
    %c0_242 = arith.constant 0 : index
    %c112_243 = arith.constant 112 : index
    %498 = vector.load %arg26[%c0_242, %c112_243] : memref<32x256xf32, #tpu.memory_space<vmem>>, vector<32x16xf32>
    tpu.vector_store %arg26[%c0_242, %c112_243], %497 {strides = array<i32>} : memref<32x256xf32, #tpu.memory_space<vmem>>, vector<32x16xf32>,
    %c0_244 = arith.constant 0 : index
    %c40_245 = arith.constant 40 : index
    %499 = vector.load %arg25[%c0_244, %c40_245] : memref<32x64xf32, #tpu.memory_space<vmem>>, vector<32x8xf32>
    %500 = arith.truncf %499 : vector<32x8xf32> to vector<32x8xbf16>
    %cst_246 = arith.constant dense<0.000000e+00> : vector<32x16xf32>
    %501 = tpu.matmul %500, %419, %cst_246 {dimension_numbers = #tpu.dot_dimension_numbers<[1], [0], [0], [1], [0, 0, 1, 1], [], []>} : vector<32x8xbf16>, vector<8x16xbf16>, vector<32x16xf32> -> vector<32x16xf32>
    %c0_247 = arith.constant 0 : index
    %c128 = arith.constant 128 : index
    %502 = vector.load %arg26[%c0_247, %c128] : memref<32x256xf32, #tpu.memory_space<vmem>>, vector<32x16xf32>
    %cst_248 = arith.constant 2.500000e-01 : f32
    %503 = vector.broadcast %cst_248 : f32 to vector<32x16xf32>
    %504 = arith.mulf %503, %463 : vector<32x16xf32>
    %cst_249 = arith.constant 7.500000e-01 : f32
    %505 = vector.broadcast %cst_249 : f32 to vector<32x16xf32>
    %506 = arith.mulf %505, %482 : vector<32x16xf32>
    %507 = arith.addf %504, %506 : vector<32x16xf32>
    %508 = arith.addf %502, %507 : vector<32x16xf32>
    %c0_250 = arith.constant 0 : index
    %c128_251 = arith.constant 128 : index
    %509 = vector.load %arg26[%c0_250, %c128_251] : memref<32x256xf32, #tpu.memory_space<vmem>>, vector<32x16xf32>
    tpu.vector_store %arg26[%c0_250, %c128_251], %508 {strides = array<i32>} : memref<32x256xf32, #tpu.memory_space<vmem>>, vector<32x16xf32>,
    %c0_252 = arith.constant 0 : index
    %c144 = arith.constant 144 : index
    %510 = vector.load %arg26[%c0_252, %c144] : memref<32x256xf32, #tpu.memory_space<vmem>>, vector<32x16xf32>
    %cst_253 = arith.constant 7.500000e-01 : f32
    %511 = vector.broadcast %cst_253 : f32 to vector<32x16xf32>
    %512 = arith.mulf %511, %482 : vector<32x16xf32>
    %cst_254 = arith.constant 2.500000e-01 : f32
    %513 = vector.broadcast %cst_254 : f32 to vector<32x16xf32>
    %514 = arith.mulf %513, %501 : vector<32x16xf32>
    %515 = arith.addf %512, %514 : vector<32x16xf32>
    %516 = arith.addf %510, %515 : vector<32x16xf32>
    %c0_255 = arith.constant 0 : index
    %c144_256 = arith.constant 144 : index
    %517 = vector.load %arg26[%c0_255, %c144_256] : memref<32x256xf32, #tpu.memory_space<vmem>>, vector<32x16xf32>
    tpu.vector_store %arg26[%c0_255, %c144_256], %516 {strides = array<i32>} : memref<32x256xf32, #tpu.memory_space<vmem>>, vector<32x16xf32>,
    %c0_257 = arith.constant 0 : index
    %c48_258 = arith.constant 48 : index
    %518 = vector.load %arg25[%c0_257, %c48_258] : memref<32x64xf32, #tpu.memory_space<vmem>>, vector<32x8xf32>
    %519 = arith.truncf %518 : vector<32x8xf32> to vector<32x8xbf16>
    %cst_259 = arith.constant dense<0.000000e+00> : vector<32x16xf32>
    %520 = tpu.matmul %519, %419, %cst_259 {dimension_numbers = #tpu.dot_dimension_numbers<[1], [0], [0], [1], [0, 0, 1, 1], [], []>} : vector<32x8xbf16>, vector<8x16xbf16>, vector<32x16xf32> -> vector<32x16xf32>
    %c0_260 = arith.constant 0 : index
    %c160 = arith.constant 160 : index
    %521 = vector.load %arg26[%c0_260, %c160] : memref<32x256xf32, #tpu.memory_space<vmem>>, vector<32x16xf32>
    %cst_261 = arith.constant 2.500000e-01 : f32
    %522 = vector.broadcast %cst_261 : f32 to vector<32x16xf32>
    %523 = arith.mulf %522, %482 : vector<32x16xf32>
    %cst_262 = arith.constant 7.500000e-01 : f32
    %524 = vector.broadcast %cst_262 : f32 to vector<32x16xf32>
    %525 = arith.mulf %524, %501 : vector<32x16xf32>
    %526 = arith.addf %523, %525 : vector<32x16xf32>
    %527 = arith.addf %521, %526 : vector<32x16xf32>
    %c0_263 = arith.constant 0 : index
    %c160_264 = arith.constant 160 : index
    %528 = vector.load %arg26[%c0_263, %c160_264] : memref<32x256xf32, #tpu.memory_space<vmem>>, vector<32x16xf32>
    tpu.vector_store %arg26[%c0_263, %c160_264], %527 {strides = array<i32>} : memref<32x256xf32, #tpu.memory_space<vmem>>, vector<32x16xf32>,
    %c0_265 = arith.constant 0 : index
    %c176 = arith.constant 176 : index
    %529 = vector.load %arg26[%c0_265, %c176] : memref<32x256xf32, #tpu.memory_space<vmem>>, vector<32x16xf32>
    %cst_266 = arith.constant 7.500000e-01 : f32
    %530 = vector.broadcast %cst_266 : f32 to vector<32x16xf32>
    %531 = arith.mulf %530, %501 : vector<32x16xf32>
    %cst_267 = arith.constant 2.500000e-01 : f32
    %532 = vector.broadcast %cst_267 : f32 to vector<32x16xf32>
    %533 = arith.mulf %532, %520 : vector<32x16xf32>
    %534 = arith.addf %531, %533 : vector<32x16xf32>
    %535 = arith.addf %529, %534 : vector<32x16xf32>
    %c0_268 = arith.constant 0 : index
    %c176_269 = arith.constant 176 : index
    %536 = vector.load %arg26[%c0_268, %c176_269] : memref<32x256xf32, #tpu.memory_space<vmem>>, vector<32x16xf32>
    tpu.vector_store %arg26[%c0_268, %c176_269], %535 {strides = array<i32>} : memref<32x256xf32, #tpu.memory_space<vmem>>, vector<32x16xf32>,
    %c0_270 = arith.constant 0 : index
    %c56_271 = arith.constant 56 : index
    %537 = vector.load %arg25[%c0_270, %c56_271] : memref<32x64xf32, #tpu.memory_space<vmem>>, vector<32x8xf32>
    %538 = arith.truncf %537 : vector<32x8xf32> to vector<32x8xbf16>
    %cst_272 = arith.constant dense<0.000000e+00> : vector<32x16xf32>
    %539 = tpu.matmul %538, %419, %cst_272 {dimension_numbers = #tpu.dot_dimension_numbers<[1], [0], [0], [1], [0, 0, 1, 1], [], []>} : vector<32x8xbf16>, vector<8x16xbf16>, vector<32x16xf32> -> vector<32x16xf32>
    %c0_273 = arith.constant 0 : index
    %c192 = arith.constant 192 : index
    %540 = vector.load %arg26[%c0_273, %c192] : memref<32x256xf32, #tpu.memory_space<vmem>>, vector<32x16xf32>
    %cst_274 = arith.constant 2.500000e-01 : f32
    %541 = vector.broadcast %cst_274 : f32 to vector<32x16xf32>
    %542 = arith.mulf %541, %501 : vector<32x16xf32>
    %cst_275 = arith.constant 7.500000e-01 : f32
    %543 = vector.broadcast %cst_275 : f32 to vector<32x16xf32>
    %544 = arith.mulf %543, %520 : vector<32x16xf32>
    %545 = arith.addf %542, %544 : vector<32x16xf32>
    %546 = arith.addf %540, %545 : vector<32x16xf32>
    %c0_276 = arith.constant 0 : index
    %c192_277 = arith.constant 192 : index
    %547 = vector.load %arg26[%c0_276, %c192_277] : memref<32x256xf32, #tpu.memory_space<vmem>>, vector<32x16xf32>
    tpu.vector_store %arg26[%c0_276, %c192_277], %546 {strides = array<i32>} : memref<32x256xf32, #tpu.memory_space<vmem>>, vector<32x16xf32>,
    %c0_278 = arith.constant 0 : index
    %c208 = arith.constant 208 : index
    %548 = vector.load %arg26[%c0_278, %c208] : memref<32x256xf32, #tpu.memory_space<vmem>>, vector<32x16xf32>
    %cst_279 = arith.constant 7.500000e-01 : f32
    %549 = vector.broadcast %cst_279 : f32 to vector<32x16xf32>
    %550 = arith.mulf %549, %520 : vector<32x16xf32>
    %cst_280 = arith.constant 2.500000e-01 : f32
    %551 = vector.broadcast %cst_280 : f32 to vector<32x16xf32>
    %552 = arith.mulf %551, %539 : vector<32x16xf32>
    %553 = arith.addf %550, %552 : vector<32x16xf32>
    %554 = arith.addf %548, %553 : vector<32x16xf32>
    %c0_281 = arith.constant 0 : index
    %c208_282 = arith.constant 208 : index
    %555 = vector.load %arg26[%c0_281, %c208_282] : memref<32x256xf32, #tpu.memory_space<vmem>>, vector<32x16xf32>
    tpu.vector_store %arg26[%c0_281, %c208_282], %554 {strides = array<i32>} : memref<32x256xf32, #tpu.memory_space<vmem>>, vector<32x16xf32>,
    %c0_283 = arith.constant 0 : index
    %c224 = arith.constant 224 : index
    %556 = vector.load %arg26[%c0_283, %c224] : memref<32x256xf32, #tpu.memory_space<vmem>>, vector<32x16xf32>
    %cst_284 = arith.constant 2.500000e-01 : f32
    %557 = vector.broadcast %cst_284 : f32 to vector<32x16xf32>
    %558 = arith.mulf %557, %520 : vector<32x16xf32>
    %cst_285 = arith.constant 7.500000e-01 : f32
    %559 = vector.broadcast %cst_285 : f32 to vector<32x16xf32>
    %560 = arith.mulf %559, %539 : vector<32x16xf32>
    %561 = arith.addf %558, %560 : vector<32x16xf32>
    %562 = arith.addf %556, %561 : vector<32x16xf32>
    %c0_286 = arith.constant 0 : index
    %c224_287 = arith.constant 224 : index
    %563 = vector.load %arg26[%c0_286, %c224_287] : memref<32x256xf32, #tpu.memory_space<vmem>>, vector<32x16xf32>
    tpu.vector_store %arg26[%c0_286, %c224_287], %562 {strides = array<i32>} : memref<32x256xf32, #tpu.memory_space<vmem>>, vector<32x16xf32>,
    %c0_288 = arith.constant 0 : index
    %c240 = arith.constant 240 : index
    %564 = vector.load %arg26[%c0_288, %c240] : memref<32x256xf32, #tpu.memory_space<vmem>>, vector<32x16xf32>
    %cst_289 = arith.constant 7.500000e-01 : f32
    %565 = vector.broadcast %cst_289 : f32 to vector<32x16xf32>
    %566 = arith.mulf %565, %539 : vector<32x16xf32>
    %cst_290 = arith.constant 2.500000e-01 : f32
    %567 = vector.broadcast %cst_290 : f32 to vector<32x16xf32>
    %568 = arith.mulf %567, %539 : vector<32x16xf32>
    %569 = arith.addf %566, %568 : vector<32x16xf32>
    %570 = arith.addf %564, %569 : vector<32x16xf32>
    %c0_291 = arith.constant 0 : index
    %c240_292 = arith.constant 240 : index
    %571 = vector.load %arg26[%c0_291, %c240_292] : memref<32x256xf32, #tpu.memory_space<vmem>>, vector<32x16xf32>
    tpu.vector_store %arg26[%c0_291, %c240_292], %570 {strides = array<i32>} : memref<32x256xf32, #tpu.memory_space<vmem>>, vector<32x16xf32>,
    %c0_293 = arith.constant 0 : index
    %c0_294 = arith.constant 0 : index
    %572 = vector.load %arg18[%c0_293, %c0_294] : memref<13x32xbf16, #tpu.memory_space<vmem>>, vector<13x32xbf16>
    %c0_295 = arith.constant 0 : index
    %c0_296 = arith.constant 0 : index
    %573 = vector.load %arg19[%c0_295, %c0_296] : memref<13x1xf32, #tpu.memory_space<vmem>>, vector<13x1xf32>
    %c0_297 = arith.constant 0 : index
    %c0_298 = arith.constant 0 : index
    %574 = vector.load %arg26[%c0_297, %c0_298] : memref<32x256xf32, #tpu.memory_space<vmem>>, vector<32x256xf32>
    %575 = arith.truncf %574 : vector<32x256xf32> to vector<32x256xbf16>
    %cst_299 = arith.constant dense<0.000000e+00> : vector<13x256xf32>
    %576 = tpu.matmul %572, %575, %cst_299 {dimension_numbers = #tpu.dot_dimension_numbers<[1], [0], [0], [1], [0, 0, 1, 1], [], []>} : vector<13x32xbf16>, vector<32x256xbf16>, vector<13x256xf32> -> vector<13x256xf32>
    %577 = vector.broadcast %573 : vector<13x1xf32> to vector<13x256xf32>
    %578 = arith.addf %576, %577 : vector<13x256xf32>
    %c0_300 = arith.constant 0 : index
    %c0_301 = arith.constant 0 : index
    %c0_302 = arith.constant 0 : index
    %579 = vector.load %arg20[%c0_300, %c0_301, %c0_302] : memref<1x13x256xf32, #tpu.memory_space<vmem>>, vector<1x13x256xf32>
    %580 = vector.shape_cast %579 : vector<1x13x256xf32> to vector<13x256xf32>
    %581 = vector.shape_cast %578 : vector<13x256xf32> to vector<1x13x256xf32>
    tpu.vector_store %arg20[%c0_300, %c0_301, %c0_302], %581 {strides = array<i32>} : memref<1x13x256xf32, #tpu.memory_space<vmem>>, vector<1x13x256xf32>,
    return
  }
  func.func @transform_0(%arg0: i32) -> (i32, i32, i32) {
    %c0_i32 = arith.constant 0 : i32
    %c0_i32_0 = arith.constant 0 : i32
    %c0_i32_1 = arith.constant 0 : i32
    return %arg0, %c0_i32, %c0_i32_0 : i32, i32, i32
  }
  func.func @transform_1(%arg0: i32) -> (i32, i32, i32) {
    %c0_i32 = arith.constant 0 : i32
    %c0_i32_0 = arith.constant 0 : i32
    %c0_i32_1 = arith.constant 0 : i32
    return %arg0, %c0_i32, %c0_i32_0 : i32, i32, i32
  }
  func.func @transform_2(%arg0: i32) -> (i32, i32, i32) {
    %c0_i32 = arith.constant 0 : i32
    %c0_i32_0 = arith.constant 0 : i32
    %c0_i32_1 = arith.constant 0 : i32
    return %arg0, %c0_i32, %c0_i32_0 : i32, i32, i32
  }
  func.func @transform_3(%arg0: i32) -> (i32, i32, i32) {
    %c0_i32 = arith.constant 0 : i32
    %c0_i32_0 = arith.constant 0 : i32
    %c0_i32_1 = arith.constant 0 : i32
    %c0_i32_2 = arith.constant 0 : i32
    return %c0_i32, %c0_i32_0, %c0_i32_1 : i32, i32, i32
  }
  func.func @transform_4(%arg0: i32) -> (i32, i32) {
    %c0_i32 = arith.constant 0 : i32
    %c0_i32_0 = arith.constant 0 : i32
    %c0_i32_1 = arith.constant 0 : i32
    return %c0_i32, %c0_i32_0 : i32, i32
  }
  func.func @transform_5(%arg0: i32) -> (i32, i32) {
    %c0_i32 = arith.constant 0 : i32
    %c0_i32_0 = arith.constant 0 : i32
    %c0_i32_1 = arith.constant 0 : i32
    return %c0_i32, %c0_i32_0 : i32, i32
  }
  func.func @transform_6(%arg0: i32) -> (i32, i32) {
    %c0_i32 = arith.constant 0 : i32
    %c0_i32_0 = arith.constant 0 : i32
    %c0_i32_1 = arith.constant 0 : i32
    return %c0_i32, %c0_i32_0 : i32, i32
  }
  func.func @transform_7(%arg0: i32) -> (i32, i32, i32) {
    %c0_i32 = arith.constant 0 : i32
    %c0_i32_0 = arith.constant 0 : i32
    %c0_i32_1 = arith.constant 0 : i32
    %c0_i32_2 = arith.constant 0 : i32
    return %c0_i32, %c0_i32_0, %c0_i32_1 : i32, i32, i32
  }
  func.func @transform_8(%arg0: i32) -> (i32, i32) {
    %c0_i32 = arith.constant 0 : i32
    %c0_i32_0 = arith.constant 0 : i32
    %c0_i32_1 = arith.constant 0 : i32
    return %c0_i32, %c0_i32_0 : i32, i32
  }
  func.func @transform_9(%arg0: i32) -> (i32, i32) {
    %c0_i32 = arith.constant 0 : i32
    %c0_i32_0 = arith.constant 0 : i32
    %c0_i32_1 = arith.constant 0 : i32
    return %c0_i32, %c0_i32_0 : i32, i32
  }
  func.func @transform_10(%arg0: i32) -> (i32, i32) {
    %c0_i32 = arith.constant 0 : i32
    %c0_i32_0 = arith.constant 0 : i32
    %c0_i32_1 = arith.constant 0 : i32
    return %c0_i32, %c0_i32_0 : i32, i32
  }
  func.func @transform_11(%arg0: i32) -> (i32, i32, i32) {
    %c0_i32 = arith.constant 0 : i32
    %c0_i32_0 = arith.constant 0 : i32
    %c0_i32_1 = arith.constant 0 : i32
    %c0_i32_2 = arith.constant 0 : i32
    return %c0_i32, %c0_i32_0, %c0_i32_1 : i32, i32, i32
  }
  func.func @transform_12(%arg0: i32) -> (i32, i32) {
    %c0_i32 = arith.constant 0 : i32
    %c0_i32_0 = arith.constant 0 : i32
    %c0_i32_1 = arith.constant 0 : i32
    return %c0_i32, %c0_i32_0 : i32, i32
  }
  func.func @transform_13(%arg0: i32) -> (i32, i32) {
    %c0_i32 = arith.constant 0 : i32
    %c0_i32_0 = arith.constant 0 : i32
    %c0_i32_1 = arith.constant 0 : i32
    return %c0_i32, %c0_i32_0 : i32, i32
  }
  func.func @transform_14(%arg0: i32) -> (i32, i32) {
    %c0_i32 = arith.constant 0 : i32
    %c0_i32_0 = arith.constant 0 : i32
    %c0_i32_1 = arith.constant 0 : i32
    return %c0_i32, %c0_i32_0 : i32, i32
  }
  func.func @transform_15(%arg0: i32) -> (i32, i32) {
    %c0_i32 = arith.constant 0 : i32
    %c0_i32_0 = arith.constant 0 : i32
    %c0_i32_1 = arith.constant 0 : i32
    return %c0_i32, %c0_i32_0 : i32, i32
  }
  func.func @transform_16(%arg0: i32) -> (i32, i32) {
    %c0_i32 = arith.constant 0 : i32
    %c0_i32_0 = arith.constant 0 : i32
    %c0_i32_1 = arith.constant 0 : i32
    return %c0_i32, %c0_i32_0 : i32, i32
  }
  func.func @transform_17(%arg0: i32) -> (i32, i32) {
    %c0_i32 = arith.constant 0 : i32
    %c0_i32_0 = arith.constant 0 : i32
    %c0_i32_1 = arith.constant 0 : i32
    return %c0_i32, %c0_i32_0 : i32, i32
  }
  func.func @transform_18(%arg0: i32) -> (i32, i32) {
    %c0_i32 = arith.constant 0 : i32
    %c0_i32_0 = arith.constant 0 : i32
    %c0_i32_1 = arith.constant 0 : i32
    return %c0_i32, %c0_i32_0 : i32, i32
  }
  func.func @transform_19(%arg0: i32) -> (i32, i32, i32) {
    %c0_i32 = arith.constant 0 : i32
    %c0_i32_0 = arith.constant 0 : i32
    %c0_i32_1 = arith.constant 0 : i32
    return %arg0, %c0_i32, %c0_i32_0 : i32, i32, i32
  }
}

</mosaic_0001>

<llo_original>
// kernel: semantic_head_stuff_forward.1
$region0: #{semantic_head_stuff_forward.1}
  #allocation0 [shape = 'u32[]', space=smem, size = 0x4, offset = 0x4, fixed_abs, tag = 'smem constant byte address 0x4 - core index']
  #allocation1 [shape = 'u32[72,128]{1,0:T(1,128)}', space=vmem, size = 0x9000, scoped, tag = 'internal scratch']
  #allocation2 [shape = 'f32[16,26]{1,0:T(8,128)}', space=vmem, size = 0x2000, scoped, tag = 'scratch operand']
  #allocation3 [shape = 'f32[16,82]{1,0:T(8,128)}', space=vmem, size = 0x2000, scoped, tag = 'scratch operand']
  #allocation4 [shape = 'f32[16,290]{1,0:T(8,128)}', space=vmem, size = 0x6000, scoped, tag = 'scratch operand']
  #allocation5 [shape = 'f32[32,16]{1,0:T(8,128)}', space=vmem, size = 0x4000, scoped, tag = 'scratch operand']
  #allocation6 [shape = 'f32[32,64]{1,0:T(8,128)}', space=vmem, size = 0x4000, scoped, tag = 'scratch operand']
  #allocation7 [shape = 'f32[32,256]{1,0:T(8,128)}', space=vmem, size = 0x8000, scoped, tag = 'scratch operand']
  %s0 = inlined_call_operand.vmem [shape: f32[2,16,16], index: 0, kind: input, shape index: {}]
  %s1 = inlined_call_operand.vmem [shape: f32[2,16,64], index: 1, kind: input, shape index: {}]
  %s2 = inlined_call_operand.vmem [shape: f32[2,16,256], index: 2, kind: input, shape index: {}]
  %s3 = inlined_call_operand.vmem [shape: f32[9,16,1], index: 3, kind: input, shape index: {}]
  %s4 = inlined_call_operand.vmem [shape: f32[16,1], index: 4, kind: input, shape index: {}]
  %s5 = inlined_call_operand.vmem [shape: bf16[32,16], index: 5, kind: input, shape index: {}]
  %s6 = inlined_call_operand.vmem [shape: f32[32,1], index: 6, kind: input, shape index: {}]
  %s7 = inlined_call_operand.vmem [shape: f32[9,16,1], index: 7, kind: input, shape index: {}]
  %s8 = inlined_call_operand.vmem [shape: f32[16,1], index: 8, kind: input, shape index: {}]
  %s9 = inlined_call_operand.vmem [shape: bf16[32,16], index: 9, kind: input, shape index: {}]
  %s10 = inlined_call_operand.vmem [shape: f32[32,1], index: 10, kind: input, shape index: {}]
  %s11 = inlined_call_operand.vmem [shape: f32[9,16,1], index: 11, kind: input, shape index: {}]
  %s12 = inlined_call_operand.vmem [shape: f32[16,1], index: 12, kind: input, shape index: {}]
  %s13 = inlined_call_operand.vmem [shape: bf16[32,16], index: 13, kind: input, shape index: {}]
  %s14 = inlined_call_operand.vmem [shape: f32[32,1], index: 14, kind: input, shape index: {}]
  %s15 = inlined_call_operand.vmem [shape: bf16[4,8], index: 15, kind: input, shape index: {}]
  %s16 = inlined_call_operand.vmem [shape: bf16[8,16], index: 16, kind: input, shape index: {}]
  %s17 = inlined_call_operand.vmem [shape: bf16[13,32], index: 17, kind: input, shape index: {}]
  %s18 = inlined_call_operand.vmem [shape: f32[13,1], index: 18, kind: input, shape index: {}]
  %s19 = inlined_call_operand.vmem [shape: f32[2,13,256], index: 19, kind: output, shape index: {}]
  %s20 = sld [smem:[#allocation0]]
  $region109: #{semantic_head_stuff_forward.1} parent=0
    _
  %s22 = ssub.s32 1, %s20
  %s23 = scalar_select 0, %s22, %s20
  loop: start=0, step=1, limit=4
  $region2: #{semantic_head_stuff_forward.1} parent=0 // loop_pre_header
    _
  $region3: #{semantic_head_stuff_forward.1} parent=0 // loop_header
    %s25 = sphi 0, %s29
    %p26 = scmp.ge.s32.totalorder %s25, 4
    %s35 = sphi 0, %s37
    %s38 = sphi 0, %s35
    %s39 = sphi 0, %s38
    %s55 = sphi 0, %s39
    %s61 = sphi 0, %s63
    %s64 = sphi 0, %s61
    %s65 = sphi 0, %s64
    %s81 = sphi 0, %s65
    %s87 = sphi 0, %s89
    %s90 = sphi 0, %s87
    %s91 = sphi 0, %s90
    %s107 = sphi 0, %s91
    %s111 = sphi 0, %s111
    %s113 = sphi 0, %s111
    %s114 = sphi 0, %s113
    %s128 = sphi 0, %s114
    %s132 = sphi 0, %s132
    %s134 = sphi 0, %s132
    %s135 = sphi 0, %s134
    %s149 = sphi 0, %s135
    %s153 = sphi 0, %s153
    %s155 = sphi 0, %s153
    %s156 = sphi 0, %s155
    %s170 = sphi 0, %s156
    %s174 = sphi 0, %s174
    %s176 = sphi 0, %s174
    %s177 = sphi 0, %s176
    %s191 = sphi 0, %s177
    %s195 = sphi 0, %s195
    %s197 = sphi 0, %s195
    %s198 = sphi 0, %s197
    %s212 = sphi 0, %s198
    %s216 = sphi 0, %s216
    %s218 = sphi 0, %s216
    %s219 = sphi 0, %s218
    %s233 = sphi 0, %s219
    %s237 = sphi 0, %s237
    %s239 = sphi 0, %s237
    %s240 = sphi 0, %s239
    %s254 = sphi 0, %s240
    %s258 = sphi 0, %s258
    %s260 = sphi 0, %s258
    %s261 = sphi 0, %s260
    %s275 = sphi 0, %s261
    %s279 = sphi 0, %s279
    %s281 = sphi 0, %s279
    %s282 = sphi 0, %s281
    %s296 = sphi 0, %s282
    %s300 = sphi 0, %s300
    %s302 = sphi 0, %s300
    %s303 = sphi 0, %s302
    %s317 = sphi 0, %s303
    %s321 = sphi 0, %s321
    %s323 = sphi 0, %s321
    %s324 = sphi 0, %s323
    %s338 = sphi 0, %s324
    %s342 = sphi 0, %s342
    %s344 = sphi 0, %s342
    %s345 = sphi 0, %s344
    %s359 = sphi 0, %s345
    %s363 = sphi 0, %s363
    %s365 = sphi 0, %s363
    %s366 = sphi 0, %s365
    %s380 = sphi 0, %s366
    %s384 = sphi 0, %s384
    %s386 = sphi 0, %s384
    %s387 = sphi 0, %s386
    %s401 = sphi 0, %s387
    %s405 = sphi 0, %s405
    %s407 = sphi 0, %s405
    %s408 = sphi 0, %s407
    %s422 = sphi 0, %s408
    %s426 = sphi 0, %s426
    %s428 = sphi 0, %s426
    %s429 = sphi 0, %s428
    %s443 = sphi 0, %s429
    %s449 = sphi 0, %s451
    %s452 = sphi 0, %s449
    %s453 = sphi 0, %s452
    %s469 = sphi 0, %s453
  $region4: #{semantic_head_stuff_forward.1} parent=0 // loop_header_branch
    %28 = sbr.rel (%p26) target = $region8
  $region5: #{semantic_head_stuff_forward.1} parent=0 // loop_body
    %s30 = ssub.s32 %s25, 1
    %s31 = ssub.s32 %s25, 2
    %s32 = sadd.s32 %s25, 1
    %s33 = ssub.s32 %s25, %s32
    %p34 = scmp.eq.s32.totalorder %s33, 0
    %s36 = sadd.s32 %s35, 1
    %s37 = scalar_select %p34, %s35, %s36
    %p40 = pneg %p34
    %p41 = scmp.eq.s32.totalorder %s25, 1
    %p42 = por %p40, %p41
    %p43 = scmp.ne.s32.totalorder %s35, %s38
    %p44 = scmp.eq.s32.totalorder %s25, 0
    %p45 = por %p43, %p44
    %p46 = scmp.ne.s32.totalorder %s35, %s38
    %p47 = scmp.eq.s32.totalorder %s30, 1
    %p48 = por %p46, %p47
    %p49 = scmp.ne.s32.totalorder %s38, %s39
    %p50 = scmp.eq.s32.totalorder %s30, 0
    %p51 = por %p49, %p50
    %p52 = scmp.ne.s32.totalorder %s38, %s39
    %p53 = scmp.eq.s32.totalorder %s31, 1
    %p54 = por %p52, %p53
    %p56 = scmp.ne.s32.totalorder %s39, %s55
    %p57 = scmp.eq.s32.totalorder %s31, 0
    %p58 = por %p56, %p57
    %s59 = ssub.s32 %s25, %s32
    %p60 = scmp.eq.s32.totalorder %s59, 0
    %s62 = sadd.s32 %s61, 1
    %s63 = scalar_select %p60, %s61, %s62
    %p66 = pneg %p60
    %p67 = scmp.eq.s32.totalorder %s25, 1
    %p68 = por %p66, %p67
    %p69 = scmp.ne.s32.totalorder %s61, %s64
    %p70 = scmp.eq.s32.totalorder %s25, 0
    %p71 = por %p69, %p70
    %p72 = scmp.ne.s32.totalorder %s61, %s64
    %p73 = scmp.eq.s32.totalorder %s30, 1
    %p74 = por %p72, %p73
    %p75 = scmp.ne.s32.totalorder %s64, %s65
    %p76 = scmp.eq.s32.totalorder %s30, 0
    %p77 = por %p75, %p76
    %p78 = scmp.ne.s32.totalorder %s64, %s65
    %p79 = scmp.eq.s32.totalorder %s31, 1
    %p80 = por %p78, %p79
    %p82 = scmp.ne.s32.totalorder %s65, %s81
    %p83 = scmp.eq.s32.totalorder %s31, 0
    %p84 = por %p82, %p83
    %s85 = ssub.s32 %s25, %s32
    %p86 = scmp.eq.s32.totalorder %s85, 0
    %s88 = sadd.s32 %s87, 1
    %s89 = scalar_select %p86, %s87, %s88
    %p92 = pneg %p86
    %p93 = scmp.eq.s32.totalorder %s25, 1
    %p94 = por %p92, %p93
    %p95 = scmp.ne.s32.totalorder %s87, %s90
    %p96 = scmp.eq.s32.totalorder %s25, 0
    %p97 = por %p95, %p96
    %p98 = scmp.ne.s32.totalorder %s87, %s90
    %p99 = scmp.eq.s32.totalorder %s30, 1
    %p100 = por %p98, %p99
    %p101 = scmp.ne.s32.totalorder %s90, %s91
    %p102 = scmp.eq.s32.totalorder %s30, 0
    %p103 = por %p101, %p102
    %p104 = scmp.ne.s32.totalorder %s90, %s91
    %p105 = scmp.eq.s32.totalorder %s31, 1
    %p106 = por %p104, %p105
    %p108 = scmp.ne.s32.totalorder %s91, %s107
    %p109 = scmp.eq.s32.totalorder %s31, 0
    %p110 = por %p108, %p109
    %s112 = sadd.s32 %s111, 1
    %p115 = scmp.eq.s32.totalorder %s25, 1
    %p116 = scmp.ne.s32.totalorder %s111, %s113
    %p117 = scmp.eq.s32.totalorder %s25, 0
    %p118 = por %p116, %p117
    %p119 = scmp.ne.s32.totalorder %s111, %s113
    %p120 = scmp.eq.s32.totalorder %s30, 1
    %p121 = por %p119, %p120
    %p122 = scmp.ne.s32.totalorder %s113, %s114
    %p123 = scmp.eq.s32.totalorder %s30, 0
    %p124 = por %p122, %p123
    %p125 = scmp.ne.s32.totalorder %s113, %s114
    %p126 = scmp.eq.s32.totalorder %s31, 1
    %p127 = por %p125, %p126
    %p129 = scmp.ne.s32.totalorder %s114, %s128
    %p130 = scmp.eq.s32.totalorder %s31, 0
    %p131 = por %p129, %p130
    %s133 = sadd.s32 %s132, 1
    %p136 = scmp.eq.s32.totalorder %s25, 1
    %p137 = scmp.ne.s32.totalorder %s132, %s134
    %p138 = scmp.eq.s32.totalorder %s25, 0
    %p139 = por %p137, %p138
    %p140 = scmp.ne.s32.totalorder %s132, %s134
    %p141 = scmp.eq.s32.totalorder %s30, 1
    %p142 = por %p140, %p141
    %p143 = scmp.ne.s32.totalorder %s134, %s135
    %p144 = scmp.eq.s32.totalorder %s30, 0
    %p145 = por %p143, %p144
    %p146 = scmp.ne.s32.totalorder %s134, %s135
    %p147 = scmp.eq.s32.totalorder %s31, 1
    %p148 = por %p146, %p147
    %p150 = scmp.ne.s32.totalorder %s135, %s149
    %p151 = scmp.eq.s32.totalorder %s31, 0
    %p152 = por %p150, %p151
    %s154 = sadd.s32 %s153, 1
    %p157 = scmp.eq.s32.totalorder %s25, 1
    %p158 = scmp.ne.s32.totalorder %s153, %s155
    %p159 = scmp.eq.s32.totalorder %s25, 0
    %p160 = por %p158, %p159
    %p161 = scmp.ne.s32.totalorder %s153, %s155
    %p162 = scmp.eq.s32.totalorder %s30, 1
    %p163 = por %p161, %p162
    %p164 = scmp.ne.s32.totalorder %s155, %s156
    %p165 = scmp.eq.s32.totalorder %s30, 0
    %p166 = por %p164, %p165
    %p167 = scmp.ne.s32.totalorder %s155, %s156
    %p168 = scmp.eq.s32.totalorder %s31, 1
    %p169 = por %p167, %p168
    %p171 = scmp.ne.s32.totalorder %s156, %s170
    %p172 = scmp.eq.s32.totalorder %s31, 0
    %p173 = por %p171, %p172
    %s175 = sadd.s32 %s174, 1
    %p178 = scmp.eq.s32.totalorder %s25, 1
    %p179 = scmp.ne.s32.totalorder %s174, %s176
    %p180 = scmp.eq.s32.totalorder %s25, 0
    %p181 = por %p179, %p180
    %p182 = scmp.ne.s32.totalorder %s174, %s176
    %p183 = scmp.eq.s32.totalorder %s30, 1
    %p184 = por %p182, %p183
    %p185 = scmp.ne.s32.totalorder %s176, %s177
    %p186 = scmp.eq.s32.totalorder %s30, 0
    %p187 = por %p185, %p186
    %p188 = scmp.ne.s32.totalorder %s176, %s177
    %p189 = scmp.eq.s32.totalorder %s31, 1
    %p190 = por %p188, %p189
    %p192 = scmp.ne.s32.totalorder %s177, %s191
    %p193 = scmp.eq.s32.totalorder %s31, 0
    %p194 = por %p192, %p193
    %s196 = sadd.s32 %s195, 1
    %p199 = scmp.eq.s32.totalorder %s25, 1
    %p200 = scmp.ne.s32.totalorder %s195, %s197
    %p201 = scmp.eq.s32.totalorder %s25, 0
    %p202 = por %p200, %p201
    %p203 = scmp.ne.s32.totalorder %s195, %s197
    %p204 = scmp.eq.s32.totalorder %s30, 1
    %p205 = por %p203, %p204
    %p206 = scmp.ne.s32.totalorder %s197, %s198
    %p207 = scmp.eq.s32.totalorder %s30, 0
    %p208 = por %p206, %p207
    %p209 = scmp.ne.s32.totalorder %s197, %s198
    %p210 = scmp.eq.s32.totalorder %s31, 1
    %p211 = por %p209, %p210
    %p213 = scmp.ne.s32.totalorder %s198, %s212
    %p214 = scmp.eq.s32.totalorder %s31, 0
    %p215 = por %p213, %p214
    %s217 = sadd.s32 %s216, 1
    %p220 = scmp.eq.s32.totalorder %s25, 1
    %p221 = scmp.ne.s32.totalorder %s216, %s218
    %p222 = scmp.eq.s32.totalorder %s25, 0
    %p223 = por %p221, %p222
    %p224 = scmp.ne.s32.totalorder %s216, %s218
    %p225 = scmp.eq.s32.totalorder %s30, 1
    %p226 = por %p224, %p225
    %p227 = scmp.ne.s32.totalorder %s218, %s219
    %p228 = scmp.eq.s32.totalorder %s30, 0
    %p229 = por %p227, %p228
    %p230 = scmp.ne.s32.totalorder %s218, %s219
    %p231 = scmp.eq.s32.totalorder %s31, 1
    %p232 = por %p230, %p231
    %p234 = scmp.ne.s32.totalorder %s219, %s233
    %p235 = scmp.eq.s32.totalorder %s31, 0
    %p236 = por %p234, %p235
    %s238 = sadd.s32 %s237, 1
    %p241 = scmp.eq.s32.totalorder %s25, 1
    %p242 = scmp.ne.s32.totalorder %s237, %s239
    %p243 = scmp.eq.s32.totalorder %s25, 0
    %p244 = por %p242, %p243
    %p245 = scmp.ne.s32.totalorder %s237, %s239
    %p246 = scmp.eq.s32.totalorder %s30, 1
    %p247 = por %p245, %p246
    %p248 = scmp.ne.s32.totalorder %s239, %s240
    %p249 = scmp.eq.s32.totalorder %s30, 0
    %p250 = por %p248, %p249
    %p251 = scmp.ne.s32.totalorder %s239, %s240
    %p252 = scmp.eq.s32.totalorder %s31, 1
    %p253 = por %p251, %p252
    %p255 = scmp.ne.s32.totalorder %s240, %s254
    %p256 = scmp.eq.s32.totalorder %s31, 0
    %p257 = por %p255, %p256
    %s259 = sadd.s32 %s258, 1
    %p262 = scmp.eq.s32.totalorder %s25, 1
    %p263 = scmp.ne.s32.totalorder %s258, %s260
    %p264 = scmp.eq.s32.totalorder %s25, 0
    %p265 = por %p263, %p264
    %p266 = scmp.ne.s32.totalorder %s258, %s260
    %p267 = scmp.eq.s32.totalorder %s30, 1
    %p268 = por %p266, %p267
    %p269 = scmp.ne.s32.totalorder %s260, %s261
    %p270 = scmp.eq.s32.totalorder %s30, 0
    %p271 = por %p269, %p270
    %p272 = scmp.ne.s32.totalorder %s260, %s261
    %p273 = scmp.eq.s32.totalorder %s31, 1
    %p274 = por %p272, %p273
    %p276 = scmp.ne.s32.totalorder %s261, %s275
    %p277 = scmp.eq.s32.totalorder %s31, 0
    %p278 = por %p276, %p277
    %s280 = sadd.s32 %s279, 1
    %p283 = scmp.eq.s32.totalorder %s25, 1
    %p284 = scmp.ne.s32.totalorder %s279, %s281
    %p285 = scmp.eq.s32.totalorder %s25, 0
    %p286 = por %p284, %p285
    %p287 = scmp.ne.s32.totalorder %s279, %s281
    %p288 = scmp.eq.s32.totalorder %s30, 1
    %p289 = por %p287, %p288
    %p290 = scmp.ne.s32.totalorder %s281, %s282
    %p291 = scmp.eq.s32.totalorder %s30, 0
    %p292 = por %p290, %p291
    %p293 = scmp.ne.s32.totalorder %s281, %s282
    %p294 = scmp.eq.s32.totalorder %s31, 1
    %p295 = por %p293, %p294
    %p297 = scmp.ne.s32.totalorder %s282, %s296
    %p298 = scmp.eq.s32.totalorder %s31, 0
    %p299 = por %p297, %p298
    %s301 = sadd.s32 %s300, 1
    %p304 = scmp.eq.s32.totalorder %s25, 1
    %p305 = scmp.ne.s32.totalorder %s300, %s302
    %p306 = scmp.eq.s32.totalorder %s25, 0
    %p307 = por %p305, %p306
    %p308 = scmp.ne.s32.totalorder %s300, %s302
    %p309 = scmp.eq.s32.totalorder %s30, 1
    %p310 = por %p308, %p309
    %p311 = scmp.ne.s32.totalorder %s302, %s303
    %p312 = scmp.eq.s32.totalorder %s30, 0
    %p313 = por %p311, %p312
    %p314 = scmp.ne.s32.totalorder %s302, %s303
    %p315 = scmp.eq.s32.totalorder %s31, 1
    %p316 = por %p314, %p315
    %p318 = scmp.ne.s32.totalorder %s303, %s317
    %p319 = scmp.eq.s32.totalorder %s31, 0
    %p320 = por %p318, %p319
    %s322 = sadd.s32 %s321, 1
    %p325 = scmp.eq.s32.totalorder %s25, 1
    %p326 = scmp.ne.s32.totalorder %s321, %s323
    %p327 = scmp.eq.s32.totalorder %s25, 0
    %p328 = por %p326, %p327
    %p329 = scmp.ne.s32.totalorder %s321, %s323
    %p330 = scmp.eq.s32.totalorder %s30, 1
    %p331 = por %p329, %p330
    %p332 = scmp.ne.s32.totalorder %s323, %s324
    %p333 = scmp.eq.s32.totalorder %s30, 0
    %p334 = por %p332, %p333
    %p335 = scmp.ne.s32.totalorder %s323, %s324
    %p336 = scmp.eq.s32.totalorder %s31, 1
    %p337 = por %p335, %p336
    %p339 = scmp.ne.s32.totalorder %s324, %s338
    %p340 = scmp.eq.s32.totalorder %s31, 0
    %p341 = por %p339, %p340
    %s343 = sadd.s32 %s342, 1
    %p346 = scmp.eq.s32.totalorder %s25, 1
    %p347 = scmp.ne.s32.totalorder %s342, %s344
    %p348 = scmp.eq.s32.totalorder %s25, 0
    %p349 = por %p347, %p348
    %p350 = scmp.ne.s32.totalorder %s342, %s344
    %p351 = scmp.eq.s32.totalorder %s30, 1
    %p352 = por %p350, %p351
    %p353 = scmp.ne.s32.totalorder %s344, %s345
    %p354 = scmp.eq.s32.totalorder %s30, 0
    %p355 = por %p353, %p354
    %p356 = scmp.ne.s32.totalorder %s344, %s345
    %p357 = scmp.eq.s32.totalorder %s31, 1
    %p358 = por %p356, %p357
    %p360 = scmp.ne.s32.totalorder %s345, %s359
    %p361 = scmp.eq.s32.totalorder %s31, 0
    %p362 = por %p360, %p361
    %s364 = sadd.s32 %s363, 1
    %p367 = scmp.eq.s32.totalorder %s25, 1
    %p368 = scmp.ne.s32.totalorder %s363, %s365
    %p369 = scmp.eq.s32.totalorder %s25, 0
    %p370 = por %p368, %p369
    %p371 = scmp.ne.s32.totalorder %s363, %s365
    %p372 = scmp.eq.s32.totalorder %s30, 1
    %p373 = por %p371, %p372
    %p374 = scmp.ne.s32.totalorder %s365, %s366
    %p375 = scmp.eq.s32.totalorder %s30, 0
    %p376 = por %p374, %p375
    %p377 = scmp.ne.s32.totalorder %s365, %s366
    %p378 = scmp.eq.s32.totalorder %s31, 1
    %p379 = por %p377, %p378
    %p381 = scmp.ne.s32.totalorder %s366, %s380
    %p382 = scmp.eq.s32.totalorder %s31, 0
    %p383 = por %p381, %p382
    %s385 = sadd.s32 %s384, 1
    %p388 = scmp.eq.s32.totalorder %s25, 1
    %p389 = scmp.ne.s32.totalorder %s384, %s386
    %p390 = scmp.eq.s32.totalorder %s25, 0
    %p391 = por %p389, %p390
    %p392 = scmp.ne.s32.totalorder %s384, %s386
    %p393 = scmp.eq.s32.totalorder %s30, 1
    %p394 = por %p392, %p393
    %p395 = scmp.ne.s32.totalorder %s386, %s387
    %p396 = scmp.eq.s32.totalorder %s30, 0
    %p397 = por %p395, %p396
    %p398 = scmp.ne.s32.totalorder %s386, %s387
    %p399 = scmp.eq.s32.totalorder %s31, 1
    %p400 = por %p398, %p399
    %p402 = scmp.ne.s32.totalorder %s387, %s401
    %p403 = scmp.eq.s32.totalorder %s31, 0
    %p404 = por %p402, %p403
    %s406 = sadd.s32 %s405, 1
    %p409 = scmp.eq.s32.totalorder %s25, 1
    %p410 = scmp.ne.s32.totalorder %s405, %s407
    %p411 = scmp.eq.s32.totalorder %s25, 0
    %p412 = por %p410, %p411
    %p413 = scmp.ne.s32.totalorder %s405, %s407
    %p414 = scmp.eq.s32.totalorder %s30, 1
    %p415 = por %p413, %p414
    %p416 = scmp.ne.s32.totalorder %s407, %s408
    %p417 = scmp.eq.s32.totalorder %s30, 0
    %p418 = por %p416, %p417
    %p419 = scmp.ne.s32.totalorder %s407, %s408
    %p420 = scmp.eq.s32.totalorder %s31, 1
    %p421 = por %p419, %p420
    %p423 = scmp.ne.s32.totalorder %s408, %s422
    %p424 = scmp.eq.s32.totalorder %s31, 0
    %p425 = por %p423, %p424
    %s427 = sadd.s32 %s426, 1
    %p430 = scmp.eq.s32.totalorder %s25, 1
    %p431 = scmp.ne.s32.totalorder %s426, %s428
    %p432 = scmp.eq.s32.totalorder %s25, 0
    %p433 = por %p431, %p432
    %p434 = scmp.ne.s32.totalorder %s426, %s428
    %p435 = scmp.eq.s32.totalorder %s30, 1
    %p436 = por %p434, %p435
    %p437 = scmp.ne.s32.totalorder %s428, %s429
    %p438 = scmp.eq.s32.totalorder %s30, 0
    %p439 = por %p437, %p438
    %p440 = scmp.ne.s32.totalorder %s428, %s429
    %p441 = scmp.eq.s32.totalorder %s31, 1
    %p442 = por %p440, %p441
    %p444 = scmp.ne.s32.totalorder %s429, %s443
    %p445 = scmp.eq.s32.totalorder %s31, 0
    %p446 = por %p444, %p445
    %s447 = ssub.s32 %s25, %s32
    %p448 = scmp.eq.s32.totalorder %s447, 0
    %s450 = sadd.s32 %s449, 1
    %s451 = scalar_select %p448, %s449, %s450
    %p454 = pneg %p448
    %p455 = scmp.eq.s32.totalorder %s25, 1
    %p456 = por %p454, %p455
    %p457 = scmp.ne.s32.totalorder %s449, %s452
    %p458 = scmp.eq.s32.totalorder %s25, 0
    %p459 = por %p457, %p458
    %p460 = scmp.ne.s32.totalorder %s449, %s452
    %p461 = scmp.eq.s32.totalorder %s30, 1
    %p462 = por %p460, %p461
    %p463 = scmp.ne.s32.totalorder %s452, %s453
    %p464 = scmp.eq.s32.totalorder %s30, 0
    %p465 = por %p463, %p464
    %p466 = scmp.ne.s32.totalorder %s452, %s453
    %p467 = scmp.eq.s32.totalorder %s31, 1
    %p468 = por %p466, %p467
    %p470 = scmp.ne.s32.totalorder %s453, %s469
    %p471 = scmp.eq.s32.totalorder %s31, 0
    %p472 = por %p470, %p471
    %p473 = scmp.le.s32.totalorder 1, %s25
    %p474 = scmp.lt.s32.totalorder %s25, 3
    %p475 = pnand %p473, %p474
    %p476 = pneg %p475
    // Predicated region
    $region9: #{semantic_head_stuff_forward.1} parent=5 // pred_check
      _
    $region10: #{semantic_head_stuff_forward.1} parent=5 // pred_check_branch
      %478 = sbr.rel (%p475) target = $region12
    $region11: #{semantic_head_stuff_forward.1} parent=5 // pred_region
      %s479 = ssub.s32 %s25, 1
      // Predicated region
      $region13: #{semantic_head_stuff_forward.1} parent=11 // pred_check
        %p480 = pneg %p124
      $region14: #{semantic_head_stuff_forward.1} parent=11 // pred_check_branch
        %482 = sbr.rel (%p480) target = $region16
      $region15: #{semantic_head_stuff_forward.1} parent=11 // pred_region
        _
      $region16: #{semantic_head_stuff_forward.1} parent=11 // pred_fallthru
        _
      // Predicated region
      $region17: #{semantic_head_stuff_forward.1} parent=11 // pred_check
        %p483 = pneg %p145
      $region18: #{semantic_head_stuff_forward.1} parent=11 // pred_check_branch
        %485 = sbr.rel (%p483) target = $region20
      $region19: #{semantic_head_stuff_forward.1} parent=11 // pred_region
        _
      $region20: #{semantic_head_stuff_forward.1} parent=11 // pred_fallthru
        _
      // Predicated region
      $region21: #{semantic_head_stuff_forward.1} parent=11 // pred_check
        %p486 = pneg %p166
      $region22: #{semantic_head_stuff_forward.1} parent=11 // pred_check_branch
        %488 = sbr.rel (%p486) target = $region24
      $region23: #{semantic_head_stuff_forward.1} parent=11 // pred_region
        _
      $region24: #{semantic_head_stuff_forward.1} parent=11 // pred_fallthru
        _
      // Predicated region
      $region25: #{semantic_head_stuff_forward.1} parent=11 // pred_check
        %p489 = pneg %p187
      $region26: #{semantic_head_stuff_forward.1} parent=11 // pred_check_branch
        %491 = sbr.rel (%p489) target = $region28
      $region27: #{semantic_head_stuff_forward.1} parent=11 // pred_region
        _
      $region28: #{semantic_head_stuff_forward.1} parent=11 // pred_fallthru
        _
      // Predicated region
      $region29: #{semantic_head_stuff_forward.1} parent=11 // pred_check
        %p492 = pneg %p208
      $region30: #{semantic_head_stuff_forward.1} parent=11 // pred_check_branch
        %494 = sbr.rel (%p492) target = $region32
      $region31: #{semantic_head_stuff_forward.1} parent=11 // pred_region
        _
      $region32: #{semantic_head_stuff_forward.1} parent=11 // pred_fallthru
        _
      // Predicated region
      $region33: #{semantic_head_stuff_forward.1} parent=11 // pred_check
        %p495 = pneg %p229
      $region34: #{semantic_head_stuff_forward.1} parent=11 // pred_check_branch
        %497 = sbr.rel (%p495) target = $region36
      $region35: #{semantic_head_stuff_forward.1} parent=11 // pred_region
        _
      $region36: #{semantic_head_stuff_forward.1} parent=11 // pred_fallthru
        _
      // Predicated region
      $region37: #{semantic_head_stuff_forward.1} parent=11 // pred_check
        %p498 = pneg %p250
      $region38: #{semantic_head_stuff_forward.1} parent=11 // pred_check_branch
        %500 = sbr.rel (%p498) target = $region40
      $region39: #{semantic_head_stuff_forward.1} parent=11 // pred_region
        _
      $region40: #{semantic_head_stuff_forward.1} parent=11 // pred_fallthru
        _
      // Predicated region
      $region41: #{semantic_head_stuff_forward.1} parent=11 // pred_check
        %p501 = pneg %p271
      $region42: #{semantic_head_stuff_forward.1} parent=11 // pred_check_branch
        %503 = sbr.rel (%p501) target = $region44
      $region43: #{semantic_head_stuff_forward.1} parent=11 // pred_region
        _
      $region44: #{semantic_head_stuff_forward.1} parent=11 // pred_fallthru
        _
      // Predicated region
      $region45: #{semantic_head_stuff_forward.1} parent=11 // pred_check
        %p504 = pneg %p292
      $region46: #{semantic_head_stuff_forward.1} parent=11 // pred_check_branch
        %506 = sbr.rel (%p504) target = $region48
      $region47: #{semantic_head_stuff_forward.1} parent=11 // pred_region
        _
      $region48: #{semantic_head_stuff_forward.1} parent=11 // pred_fallthru
        _
      // Predicated region
      $region49: #{semantic_head_stuff_forward.1} parent=11 // pred_check
        %p507 = pneg %p313
      $region50: #{semantic_head_stuff_forward.1} parent=11 // pred_check_branch
        %509 = sbr.rel (%p507) target = $region52
      $region51: #{semantic_head_stuff_forward.1} parent=11 // pred_region
        _
      $region52: #{semantic_head_stuff_forward.1} parent=11 // pred_fallthru
        _
      // Predicated region
      $region53: #{semantic_head_stuff_forward.1} parent=11 // pred_check
        %p510 = pneg %p334
      $region54: #{semantic_head_stuff_forward.1} parent=11 // pred_check_branch
        %512 = sbr.rel (%p510) target = $region56
      $region55: #{semantic_head_stuff_forward.1} parent=11 // pred_region
        _
      $region56: #{semantic_head_stuff_forward.1} parent=11 // pred_fallthru
        _
      // Predicated region
      $region57: #{semantic_head_stuff_forward.1} parent=11 // pred_check
        %p513 = pneg %p355
      $region58: #{semantic_head_stuff_forward.1} parent=11 // pred_check_branch
        %515 = sbr.rel (%p513) target = $region60
      $region59: #{semantic_head_stuff_forward.1} parent=11 // pred_region
        _
      $region60: #{semantic_head_stuff_forward.1} parent=11 // pred_fallthru
        _
      // Predicated region
      $region61: #{semantic_head_stuff_forward.1} parent=11 // pred_check
        %p516 = pneg %p376
      $region62: #{semantic_head_stuff_forward.1} parent=11 // pred_check_branch
        %518 = sbr.rel (%p516) target = $region64
      $region63: #{semantic_head_stuff_forward.1} parent=11 // pred_region
        _
      $region64: #{semantic_head_stuff_forward.1} parent=11 // pred_fallthru
        _
      // Predicated region
      $region65: #{semantic_head_stuff_forward.1} parent=11 // pred_check
        %p519 = pneg %p397
      $region66: #{semantic_head_stuff_forward.1} parent=11 // pred_check_branch
        %521 = sbr.rel (%p519) target = $region68
      $region67: #{semantic_head_stuff_forward.1} parent=11 // pred_region
        _
      $region68: #{semantic_head_stuff_forward.1} parent=11 // pred_fallthru
        _
      // Predicated region
      $region69: #{semantic_head_stuff_forward.1} parent=11 // pred_check
        %p522 = pneg %p418
      $region70: #{semantic_head_stuff_forward.1} parent=11 // pred_check_branch
        %524 = sbr.rel (%p522) target = $region72
      $region71: #{semantic_head_stuff_forward.1} parent=11 // pred_region
        _
      $region72: #{semantic_head_stuff_forward.1} parent=11 // pred_fallthru
        _
      // Predicated region
      $region73: #{semantic_head_stuff_forward.1} parent=11 // pred_check
        %p525 = pneg %p439
      $region74: #{semantic_head_stuff_forward.1} parent=11 // pred_check_branch
        %527 = sbr.rel (%p525) target = $region76
      $region75: #{semantic_head_stuff_forward.1} parent=11 // pred_region
        _
      $region76: #{semantic_head_stuff_forward.1} parent=11 // pred_fallthru
        _
    $region12: #{semantic_head_stuff_forward.1} parent=5 // pred_fallthru
      _
    %p528 = scmp.lt.s32.totalorder %s25, 2
    // Predicated region
    $region77: #{semantic_head_stuff_forward.1} parent=5 // pred_check
      %p529 = pneg %p528
    $region78: #{semantic_head_stuff_forward.1} parent=5 // pred_check_branch
      %531 = sbr.rel (%p529) target = $region80
    $region79: #{semantic_head_stuff_forward.1} parent=5 // pred_region
      // Predicated region
      $region81: #{semantic_head_stuff_forward.1} parent=79 // pred_check
        %p532 = pneg %p45
      $region82: #{semantic_head_stuff_forward.1} parent=79 // pred_check_branch
        %534 = sbr.rel (%p532) target = $region84
      $region83: #{semantic_head_stuff_forward.1} parent=79 // pred_region
        %p535 = scmp.lt.s32.totalorder %s25, 1
        %s536 = scalar_select %p535, %s25, 1
        %s537 = smul.addr %s536, 2
        %s538 = smul.addr %s537, 8
        %s539 = scalar_lea.vmem %s0, %s538
      $region84: #{semantic_head_stuff_forward.1} parent=79 // pred_fallthru
        _
      // Predicated region
      $region85: #{semantic_head_stuff_forward.1} parent=79 // pred_check
        %p540 = pneg %p71
      $region86: #{semantic_head_stuff_forward.1} parent=79 // pred_check_branch
        %542 = sbr.rel (%p540) target = $region88
      $region87: #{semantic_head_stuff_forward.1} parent=79 // pred_region
        %p543 = scmp.lt.s32.totalorder %s25, 1
        %s544 = scalar_select %p543, %s25, 1
        %s545 = smul.addr %s544, 2
        %s546 = smul.addr %s545, 8
        %s547 = scalar_lea.vmem %s1, %s546
      $region88: #{semantic_head_stuff_forward.1} parent=79 // pred_fallthru
        _
      // Predicated region
      $region89: #{semantic_head_stuff_forward.1} parent=79 // pred_check
        %p548 = pneg %p97
      $region90: #{semantic_head_stuff_forward.1} parent=79 // pred_check_branch
        %550 = sbr.rel (%p548) target = $region92
      $region91: #{semantic_head_stuff_forward.1} parent=79 // pred_region
        %p551 = scmp.lt.s32.totalorder %s25, 1
        %s552 = scalar_select %p551, %s25, 1
        %s553 = smul.addr %s552, 4
        %s554 = smul.addr %s553, 8
        %s555 = scalar_lea.vmem %s2, %s554
      $region92: #{semantic_head_stuff_forward.1} parent=79 // pred_fallthru
        _
    $region80: #{semantic_head_stuff_forward.1} parent=5 // pred_fallthru
      _
    %p556 = scmp.le.s32.totalorder 1, %s25
    %p557 = scmp.lt.s32.totalorder %s25, 3
    %p558 = pnand %p556, %p557
    %p559 = pneg %p558
    // Predicated region
    $region93: #{semantic_head_stuff_forward.1} parent=5 // pred_check
      _
    $region94: #{semantic_head_stuff_forward.1} parent=5 // pred_check_branch
      %561 = sbr.rel (%p558) target = $region96
    $region95: #{semantic_head_stuff_forward.1} parent=5 // pred_region
      %s562 = ssub.s32 %s25, 1
      %p563 = scmp.lt.s32.totalorder %s30, 1
      %s564 = scalar_select %p563, %s30, 1
      %s565 = smul.addr %s564, 2
      %s566 = smul.addr %s565, 8
      %s567 = scalar_lea.vmem %s0, %s566
      %p568 = pneg %p51
      %p569 = pneg %p48
      %p570 = scmp.lt.s32.totalorder %s30, 1
      %s571 = scalar_select %p570, %s30, 1
      %s572 = smul.addr %s571, 2
      %s573 = smul.addr %s572, 8
      %s574 = scalar_lea.vmem %s1, %s573
      %p575 = pneg %p77
      %p576 = pneg %p74
      %p577 = scmp.lt.s32.totalorder %s30, 1
      %s578 = scalar_select %p577, %s30, 1
      %s579 = smul.addr %s578, 4
      %s580 = smul.addr %s579, 8
      %s581 = scalar_lea.vmem %s2, %s580
      %p582 = pneg %p103
      %p583 = pneg %p100
      %p584 = pneg %p124
      %p585 = pneg %p121
      %p586 = pneg %p145
      %p587 = pneg %p142
      %p588 = pneg %p166
      %p589 = pneg %p163
      %p590 = pneg %p187
      %p591 = pneg %p184
      %p592 = pneg %p208
      %p593 = pneg %p205
      %p594 = pneg %p229
      %p595 = pneg %p226
      %p596 = pneg %p250
      %p597 = pneg %p247
      %p598 = pneg %p271
      %p599 = pneg %p268
      %p600 = pneg %p292
      %p601 = pneg %p289
      %p602 = pneg %p313
      %p603 = pneg %p310
      %p604 = pneg %p334
      %p605 = pneg %p331
      %p606 = pneg %p355
      %p607 = pneg %p352
      %p608 = pneg %p376
      %p609 = pneg %p373
      %p610 = pneg %p397
      %p611 = pneg %p394
      %p612 = pneg %p418
      %p613 = pneg %p415
      %p614 = pneg %p439
      %p615 = pneg %p436
      %p616 = pneg %p465
      %p617 = pneg %p462
      %p618 = scmp.lt.s32.totalorder %s30, 1
      %s619 = scalar_select %p618, %s30, 1
      %s620 = smul.addr %s619, 4
      %s621 = smul.addr %s620, 8
      %s622 = scalar_lea.vmem %s19, %s621
      %p623 = scmp.lt.s32.totalorder %s30, 1
      %s624 = scalar_select %p623, %s30, 1
      %s625 = smul.addr %s624, 2
      %s626 = smul.addr %s625, 8
      %s627 = scalar_lea.vmem %s0, %s626
      %p628 = scmp.lt.s32.totalorder %s30, 1
      %s629 = scalar_select %p628, %s30, 1
      %s630 = smul.addr %s629, 2
      %s631 = smul.addr %s630, 8
      %s632 = scalar_lea.vmem %s1, %s631
      %p633 = scmp.lt.s32.totalorder %s30, 1
      %s634 = scalar_select %p633, %s30, 1
      %s635 = smul.addr %s634, 4
      %s636 = smul.addr %s635, 8
      %s637 = scalar_lea.vmem %s2, %s636
      %p638 = scmp.lt.s32.totalorder %s30, 1
      %s639 = scalar_select %p638, %s30, 1
      %s640 = smul.addr %s639, 4
      %s641 = smul.addr %s640, 8
      %s642 = scalar_lea.vmem %s19, %s641
      %vm644 = vcmask 39936
      %645 = vst.msk [vmem:[#allocation2] sm:$0xff] %vm644, 0.0
      %646 = vst.msk [vmem:[#allocation2 + $0x8] sm:$0xff] %vm644, 0.0
      %vm647 = vcmask 212136
      %648 = vst.msk [vmem:[#allocation2] sm:$0xff] %vm647, 0.0
      %649 = vst.msk [vmem:[#allocation2 + $0x8] sm:$0xff] %vm647, 0.0
      %v650 = vld [vmem:[%s627] sm:$0xff]
      %v651 = vld [vmem:[%s627 + $0x8] sm:$0xff]
      %654 = vrot.lane.b32.xlu0 %v650, 5
      %v655 = vpop.permute.xlu0 %654
      %656 = vrot.lane.b32.xlu0 %v651, 5
      %v657 = vpop.permute.xlu0 %656
      %vm660 = vcmask 171048
      %661 = vst.msk [vmem:[#allocation2] sm:$0xff] %vm660, %v655
      %662 = vst.msk [vmem:[#allocation2 + $0x8] sm:$0xff] %vm660, %v657
      %v663 = vlaneseq
      %v664 = vand.u32 %v663, 127
      %vm665 = vcmp.lt.s32.totalorder %v664, 0
      %v666 = vsub.s32 0, %v664
      %v667 = vsel %vm665, %v666, %v664
      %v668 = vshrl.u32 %v667, 2
      %v669 = vand.u32 %v667, 3
      %v670 = vsub.s32 0, %v669
      %v671 = vsel %vm665, %v670, %v669
      %vm672 = vcmp.ne.s32.totalorder %v671, 0
      %vm673 = vcmp.lt.s32.totalorder %v671, 0
      %vm674 = vmand %vm673, %vm672
      %v675 = vadd.s32 %v671, 4
      %v676 = vsel %vm674, %v675, %v671
      %vm677 = vcmp.ge.s32.totalorder %v676, 1
      %v678 = vsel %vm677, 1, 0
      %v679 = vcvt.s32.f32 %v678
      %vm680 = vcmp.le.s32.totalorder %v676, 2
      %v681 = vsel %vm680, 1, 0
      %v682 = vcvt.s32.f32 %v681
      %v683 = vld [vmem:[%s3] sm:$0xff]
      %v684 = vld [vmem:[%s3 + $0x8] sm:$0xff]
      %v685 = vld [vmem:[%s3 + $0x10] sm:$0xff]
      %v686 = vld [vmem:[%s3 + $0x18] sm:$0xff]
      %v687 = vld [vmem:[%s3 + $0x20] sm:$0xff]
      %v688 = vld [vmem:[%s3 + $0x28] sm:$0xff]
      %v689 = vld [vmem:[%s3 + $0x30] sm:$0xff]
      %v690 = vld [vmem:[%s3 + $0x38] sm:$0xff]
      %v691 = vld [vmem:[%s3 + $0x40] sm:$0xff]
      %v692 = vld [vmem:[%s3 + $0x48] sm:$0xff]
      %v693 = vld [vmem:[%s3 + $0x50] sm:$0xff]
      %v694 = vld [vmem:[%s3 + $0x58] sm:$0xff]
      %v695 = vld [vmem:[%s3 + $0x60] sm:$0xff]
      %v696 = vld [vmem:[%s3 + $0x68] sm:$0xff]
      %v697 = vld [vmem:[%s3 + $0x70] sm:$0xff]
      %v698 = vld [vmem:[%s3 + $0x78] sm:$0xff]
      %v699 = vld [vmem:[%s3 + $0x80] sm:$0xff]
      %v700 = vld [vmem:[%s3 + $0x88] sm:$0xff]
      %v701 = vld [vmem:[#allocation2] sm:$0xff]
      %v702 = vld [vmem:[#allocation2 + $0x8] sm:$0xff]
      %v703 = vmul.f32 %v701, %v679
      %v704 = vmul.f32 %v702, %v679
      %706 = vset.pattern.permute.xlu0 0
      %707 = vperm.xlu0 %706, %v683
      %v708 = vpop.permute.xlu0 %707
      %711 = vset.pattern.permute.xlu0 0
      %712 = vperm.xlu0 %711, %v684
      %v713 = vpop.permute.xlu0 %712
      %v715 = vmul.f32 %v708, %v703
      %v716 = vmul.f32 %v713, %v704
      %718 = vset.pattern.permute.xlu0 0
      %719 = vperm.xlu0 %718, %v685
      %v720 = vpop.permute.xlu0 %719
      %723 = vset.pattern.permute.xlu0 0
      %724 = vperm.xlu0 %723, %v686
      %v725 = vpop.permute.xlu0 %724
      %v727 = vmul.f32 %v720, %v701
      %v728 = vmul.f32 %v725, %v702
      %731 = vrot.lane.b32.xlu0 %v727, 127
      %v732 = vpop.permute.xlu0 %731
      %733 = vrot.lane.b32.xlu0 %v728, 127
      %v734 = vpop.permute.xlu0 %733
      %v737 = vadd.f32 %v715, %v732
      %v738 = vadd.f32 %v716, %v734
      %740 = vrot.lane.b32.xlu0 %v682, 2
      %v741 = vpop.permute.xlu0 %740
      %v743 = vmul.f32 %v701, %v741
      %v744 = vmul.f32 %v702, %v741
      %746 = vset.pattern.permute.xlu0 0
      %747 = vperm.xlu0 %746, %v687
      %v748 = vpop.permute.xlu0 %747
      %751 = vset.pattern.permute.xlu0 0
      %752 = vperm.xlu0 %751, %v688
      %v753 = vpop.permute.xlu0 %752
      %v755 = vmul.f32 %v748, %v743
      %v756 = vmul.f32 %v753, %v744
      %759 = vrot.lane.b32.xlu0 %v755, 126
      %v760 = vpop.permute.xlu0 %759
      %761 = vrot.lane.b32.xlu0 %v756, 126
      %v762 = vpop.permute.xlu0 %761
      %v765 = vadd.f32 %v737, %v760
      %v766 = vadd.f32 %v738, %v762
      %768 = vrot.lane.b32.xlu0 %v679, 4
      %v769 = vpop.permute.xlu0 %768
      %v771 = vmul.f32 %v701, %v769
      %v772 = vmul.f32 %v702, %v769
      %774 = vset.pattern.permute.xlu0 0
      %775 = vperm.xlu0 %774, %v689
      %v776 = vpop.permute.xlu0 %775
      %779 = vset.pattern.permute.xlu0 0
      %780 = vperm.xlu0 %779, %v690
      %v781 = vpop.permute.xlu0 %780
      %v783 = vmul.f32 %v776, %v771
      %v784 = vmul.f32 %v781, %v772
      %787 = vrot.lane.b32.xlu0 %v783, 124
      %v788 = vpop.permute.xlu0 %787
      %789 = vrot.lane.b32.xlu0 %v784, 124
      %v790 = vpop.permute.xlu0 %789
      %v793 = vadd.f32 %v765, %v788
      %v794 = vadd.f32 %v766, %v790
      %796 = vset.pattern.permute.xlu0 0
      %797 = vperm.xlu0 %796, %v691
      %v798 = vpop.permute.xlu0 %797
      %801 = vset.pattern.permute.xlu0 0
      %802 = vperm.xlu0 %801, %v692
      %v803 = vpop.permute.xlu0 %802
      %v805 = vmul.f32 %v798, %v701
      %v806 = vmul.f32 %v803, %v702
      %809 = vrot.lane.b32.xlu0 %v805, 123
      %v810 = vpop.permute.xlu0 %809
      %811 = vrot.lane.b32.xlu0 %v806, 123
      %v812 = vpop.permute.xlu0 %811
      %v815 = vadd.f32 %v793, %v810
      %v816 = vadd.f32 %v794, %v812
      %817 = vrot.lane.b32.xlu0 %v682, 6
      %v818 = vpop.permute.xlu0 %817
      %v820 = vmul.f32 %v701, %v818
      %v821 = vmul.f32 %v702, %v818
      %823 = vset.pattern.permute.xlu0 0
      %824 = vperm.xlu0 %823, %v693
      %v825 = vpop.permute.xlu0 %824
      %828 = vset.pattern.permute.xlu0 0
      %829 = vperm.xlu0 %828, %v694
      %v830 = vpop.permute.xlu0 %829
      %v832 = vmul.f32 %v825, %v820
      %v833 = vmul.f32 %v830, %v821
      %836 = vrot.lane.b32.xlu0 %v832, 122
      %v837 = vpop.permute.xlu0 %836
      %838 = vrot.lane.b32.xlu0 %v833, 122
      %v839 = vpop.permute.xlu0 %838
      %v842 = vadd.f32 %v815, %v837
      %v843 = vadd.f32 %v816, %v839
      %844 = vrot.lane.b32.xlu0 %v679, 8
      %v845 = vpop.permute.xlu0 %844
      %v847 = vmul.f32 %v701, %v845
      %v848 = vmul.f32 %v702, %v845
      %850 = vset.pattern.permute.xlu0 0
      %851 = vperm.xlu0 %850, %v695
      %v852 = vpop.permute.xlu0 %851
      %855 = vset.pattern.permute.xlu0 0
      %856 = vperm.xlu0 %855, %v696
      %v857 = vpop.permute.xlu0 %856
      %v859 = vmul.f32 %v852, %v847
      %v860 = vmul.f32 %v857, %v848
      %863 = vrot.lane.b32.xlu0 %v859, 120
      %v864 = vpop.permute.xlu0 %863
      %865 = vrot.lane.b32.xlu0 %v860, 120
      %v866 = vpop.permute.xlu0 %865
      %v869 = vadd.f32 %v842, %v864
      %v870 = vadd.f32 %v843, %v866
      %872 = vset.pattern.permute.xlu0 0
      %873 = vperm.xlu0 %872, %v697
      %v874 = vpop.permute.xlu0 %873
      %877 = vset.pattern.permute.xlu0 0
      %878 = vperm.xlu0 %877, %v698
      %v879 = vpop.permute.xlu0 %878
      %v881 = vmul.f32 %v874, %v701
      %v882 = vmul.f32 %v879, %v702
      %885 = vrot.lane.b32.xlu0 %v881, 119
      %v886 = vpop.permute.xlu0 %885
      %887 = vrot.lane.b32.xlu0 %v882, 119
      %v888 = vpop.permute.xlu0 %887
      %v891 = vadd.f32 %v869, %v886
      %v892 = vadd.f32 %v870, %v888
      %893 = vrot.lane.b32.xlu0 %v682, 10
      %v894 = vpop.permute.xlu0 %893
      %v896 = vmul.f32 %v701, %v894
      %v897 = vmul.f32 %v702, %v894
      %899 = vset.pattern.permute.xlu0 0
      %900 = vperm.xlu0 %899, %v699
      %v901 = vpop.permute.xlu0 %900
      %904 = vset.pattern.permute.xlu0 0
      %905 = vperm.xlu0 %904, %v700
      %v906 = vpop.permute.xlu0 %905
      %v908 = vmul.f32 %v901, %v896
      %v909 = vmul.f32 %v906, %v897
      %912 = vrot.lane.b32.xlu0 %v908, 118
      %v913 = vpop.permute.xlu0 %912
      %914 = vrot.lane.b32.xlu0 %v909, 118
      %v915 = vpop.permute.xlu0 %914
      %v918 = vadd.f32 %v891, %v913
      %v919 = vadd.f32 %v892, %v915
      %v920 = vld [vmem:[%s4] sm:$0xff]
      %v921 = vld [vmem:[%s4 + $0x8] sm:$0xff]
      %923 = vset.pattern.permute.xlu0 0
      %924 = vperm.xlu0 %923, %v920
      %v925 = vpop.permute.xlu0 %924
      %928 = vset.pattern.permute.xlu0 0
      %929 = vperm.xlu0 %928, %v921
      %v930 = vpop.permute.xlu0 %929
      %v932 = vadd.f32 %v918, %v925
      %v933 = vadd.f32 %v919, %v930
      %v934 = vmul.f32 %v932, 0.1
      %v935 = vmul.f32 %v933, 0.1
      %v936 = vmax.f32 %v932, %v934
      %v937 = vmax.f32 %v933, %v935
      %v938 = vld [vmem:[%s5] sm:$0xf]
      %v939 = vld [vmem:[%s5 + $0x4] sm:$0xf]
      %v940 = vld [vmem:[%s5 + $0x8] sm:$0xf]
      %v941 = vld [vmem:[%s5 + $0xc] sm:$0xf]
      %v942 = vpack.c.bf16 %v937, %v936
      %v943 = vld [vmem:[%s6] sm:$0xff]
      %v944 = vld [vmem:[%s6 + $0x8] sm:$0xff]
      %v945 = vld [vmem:[%s6 + $0x10] sm:$0xff]
      %v946 = vld [vmem:[%s6 + $0x18] sm:$0xff]
      %948 = vset.pattern.permute.xlu0 0
      %949 = vperm.xlu0 %948, %v943
      %v950 = vpop.permute.xlu0 %949
      %953 = vset.pattern.permute.xlu0 0
      %954 = vperm.xlu0 %953, %v944
      %v955 = vpop.permute.xlu0 %954
      %958 = vset.pattern.permute.xlu0 0
      %959 = vperm.xlu0 %958, %v945
      %v960 = vpop.permute.xlu0 %959
      %963 = vset.pattern.permute.xlu0 0
      %964 = vperm.xlu0 %963, %v946
      %v965 = vpop.permute.xlu0 %964
      %v971 = vunpack.c.l.b16 %v938
      %v972 = vunpack.c.l.b16 %v939
      %v973 = vunpack.c.l.b16 %v940
      %v974 = vunpack.c.l.b16 %v941
      %v975 = vpack.c.b16 %v972, %v971
      %v976 = vpack.c.b16 %v974, %v973
      %vm977 = vcmask 130048
      %v979 = vsel %vm977, %v975, 0
      %v982 = vsel %vm977, %v976, 0
      %984 = vmatpush.bf16.msra.mxu0 0
      %985 = vmatpush.bf16.msra.mxu0 0
      %986 = vmatpush.bf16.msra.mxu0 0
      %987 = vmatpush.bf16.msra.mxu0 0
      %988 = vmatpush.bf16.msra.mxu0 0
      %989 = vmatpush.bf16.msra.mxu0 0
      %990 = vmatpush.bf16.msra.mxu0 0
      %991 = vmatpush.bf16.msra.mxu0 %v942
      %992 = vmatmul.bf16.gmra.mxu0 %v979
      %v993 = vpop.f32.mrf.mxu0
      %v994 = vadd.f32 %v950, %v993
      %v995 = vpop.f32.mrf.mxu0
      %v996 = vadd.f32 %v955, %v995
      %997 = vmatmul.bf16.gmra.mxu0 %v982
      %v998 = vpop.f32.mrf.mxu0
      %v999 = vadd.f32 %v960, %v998
      %v1000 = vpop.f32.mrf.mxu0
      %v1001 = vadd.f32 %v965, %v1000
      %1002 = vdwg.mxu0
      %v1003 = vmul.f32 %v994, 0.1
      %v1004 = vmul.f32 %v996, 0.1
      %v1005 = vmul.f32 %v999, 0.1
      %v1006 = vmul.f32 %v1001, 0.1
      %v1007 = vmax.f32 %v994, %v1003
      %v1008 = vmax.f32 %v996, %v1004
      %v1009 = vmax.f32 %v999, %v1005
      %v1010 = vmax.f32 %v1001, %v1006
      %1011 = vst.msk [vmem:[#allocation5] sm:$0xff] %vm977, %v1007
      %1012 = vst.msk [vmem:[#allocation5 + $0x8] sm:$0xff] %vm977, %v1008
      %1013 = vst.msk [vmem:[#allocation5 + $0x10] sm:$0xff] %vm977, %v1009
      %1014 = vst.msk [vmem:[#allocation5 + $0x18] sm:$0xff] %vm977, %v1010
      %vm1015 = vcmask 72704
      %1016 = vst.msk [vmem:[#allocation3] sm:$0xff] %vm1015, 0.0
      %1017 = vst.msk [vmem:[#allocation3 + $0x8] sm:$0xff] %vm1015, 0.0
      %vm1018 = vcmask 671304
      %1019 = vst.msk [vmem:[#allocation3] sm:$0xff] %vm1018, 0.0
      %1020 = vst.msk [vmem:[#allocation3 + $0x8] sm:$0xff] %vm1018, 0.0
      %v1021 = vld [vmem:[%s632] sm:$0xff]
      %v1022 = vld [vmem:[%s632 + $0x8] sm:$0xff]
      %1025 = vrot.lane.b32.xlu0 %v1021, 9
      %v1026 = vpop.permute.xlu0 %1025
      %1027 = vrot.lane.b32.xlu0 %v1022, 9
      %v1028 = vpop.permute.xlu0 %1027
      %vm1031 = vcmask 597064
      %1032 = vst.msk [vmem:[#allocation3] sm:$0xff] %vm1031, %v1026
      %1033 = vst.msk [vmem:[#allocation3 + $0x8] sm:$0xff] %vm1031, %v1028
      %vm1034 = vcmp.lt.s32.totalorder %v664, 0
      %v1035 = vsub.s32 0, %v664
      %v1036 = vsel %vm1034, %v1035, %v664
      %v1037 = vshrl.u32 %v1036, 3
      %v1038 = vand.u32 %v1036, 7
      %v1039 = vsub.s32 0, %v1038
      %v1040 = vsel %vm1034, %v1039, %v1038
      %vm1041 = vcmp.ne.s32.totalorder %v1040, 0
      %vm1042 = vcmp.lt.s32.totalorder %v1040, 0
      %vm1043 = vmand %vm1042, %vm1041
      %v1044 = vadd.s32 %v1040, 8
      %v1045 = vsel %vm1043, %v1044, %v1040
      %vm1046 = vcmp.ge.s32.totalorder %v1045, 1
      %v1047 = vsel %vm1046, 1, 0
      %v1048 = vcvt.s32.f32 %v1047
      %vm1049 = vcmp.le.s32.totalorder %v1045, 6
      %v1050 = vsel %vm1049, 1, 0
      %v1051 = vcvt.s32.f32 %v1050
      %v1052 = vld [vmem:[%s7] sm:$0xff]
      %v1053 = vld [vmem:[%s7 + $0x8] sm:$0xff]
      %v1054 = vld [vmem:[%s7 + $0x10] sm:$0xff]
      %v1055 = vld [vmem:[%s7 + $0x18] sm:$0xff]
      %v1056 = vld [vmem:[%s7 + $0x20] sm:$0xff]
      %v1057 = vld [vmem:[%s7 + $0x28] sm:$0xff]
      %v1058 = vld [vmem:[%s7 + $0x30] sm:$0xff]
      %v1059 = vld [vmem:[%s7 + $0x38] sm:$0xff]
      %v1060 = vld [vmem:[%s7 + $0x40] sm:$0xff]
      %v1061 = vld [vmem:[%s7 + $0x48] sm:$0xff]
      %v1062 = vld [vmem:[%s7 + $0x50] sm:$0xff]
      %v1063 = vld [vmem:[%s7 + $0x58] sm:$0xff]
      %v1064 = vld [vmem:[%s7 + $0x60] sm:$0xff]
      %v1065 = vld [vmem:[%s7 + $0x68] sm:$0xff]
      %v1066 = vld [vmem:[%s7 + $0x70] sm:$0xff]
      %v1067 = vld [vmem:[%s7 + $0x78] sm:$0xff]
      %v1068 = vld [vmem:[%s7 + $0x80] sm:$0xff]
      %v1069 = vld [vmem:[%s7 + $0x88] sm:$0xff]
      %v1070 = vld [vmem:[#allocation3] sm:$0xff]
      %v1071 = vld [vmem:[#allocation3 + $0x8] sm:$0xff]
      %v1072 = vmul.f32 %v1070, %v1048
      %v1073 = vmul.f32 %v1071, %v1048
      %1075 = vset.pattern.permute.xlu0 0
      %1076 = vperm.xlu0 %1075, %v1052
      %v1077 = vpop.permute.xlu0 %1076
      %1080 = vset.pattern.permute.xlu0 0
      %1081 = vperm.xlu0 %1080, %v1053
      %v1082 = vpop.permute.xlu0 %1081
      %v1084 = vmul.f32 %v1077, %v1072
      %v1085 = vmul.f32 %v1082, %v1073
      %1087 = vset.pattern.permute.xlu0 0
      %1088 = vperm.xlu0 %1087, %v1054
      %v1089 = vpop.permute.xlu0 %1088
      %1092 = vset.pattern.permute.xlu0 0
      %1093 = vperm.xlu0 %1092, %v1055
      %v1094 = vpop.permute.xlu0 %1093
      %v1096 = vmul.f32 %v1089, %v1070
      %v1097 = vmul.f32 %v1094, %v1071
      %1100 = vrot.lane.b32.xlu0 %v1096, 127
      %v1101 = vpop.permute.xlu0 %1100
      %1102 = vrot.lane.b32.xlu0 %v1097, 127
      %v1103 = vpop.permute.xlu0 %1102
      %v1106 = vadd.f32 %v1084, %v1101
      %v1107 = vadd.f32 %v1085, %v1103
      %1109 = vrot.lane.b32.xlu0 %v1051, 2
      %v1110 = vpop.permute.xlu0 %1109
      %v1112 = vmul.f32 %v1070, %v1110
      %v1113 = vmul.f32 %v1071, %v1110
      %1115 = vset.pattern.permute.xlu0 0
      %1116 = vperm.xlu0 %1115, %v1056
      %v1117 = vpop.permute.xlu0 %1116
      %1120 = vset.pattern.permute.xlu0 0
      %1121 = vperm.xlu0 %1120, %v1057
      %v1122 = vpop.permute.xlu0 %1121
      %v1124 = vmul.f32 %v1117, %v1112
      %v1125 = vmul.f32 %v1122, %v1113
      %1128 = vrot.lane.b32.xlu0 %v1124, 126
      %v1129 = vpop.permute.xlu0 %1128
      %1130 = vrot.lane.b32.xlu0 %v1125, 126
      %v1131 = vpop.permute.xlu0 %1130
      %v1134 = vadd.f32 %v1106, %v1129
      %v1135 = vadd.f32 %v1107, %v1131
      %1137 = vrot.lane.b32.xlu0 %v1048, 8
      %v1138 = vpop.permute.xlu0 %1137
      %v1140 = vmul.f32 %v1070, %v1138
      %v1141 = vmul.f32 %v1071, %v1138
      %1143 = vset.pattern.permute.xlu0 0
      %1144 = vperm.xlu0 %1143, %v1058
      %v1145 = vpop.permute.xlu0 %1144
      %1148 = vset.pattern.permute.xlu0 0
      %1149 = vperm.xlu0 %1148, %v1059
      %v1150 = vpop.permute.xlu0 %1149
      %v1152 = vmul.f32 %v1145, %v1140
      %v1153 = vmul.f32 %v1150, %v1141
      %1156 = vrot.lane.b32.xlu0 %v1152, 120
      %v1157 = vpop.permute.xlu0 %1156
      %1158 = vrot.lane.b32.xlu0 %v1153, 120
      %v1159 = vpop.permute.xlu0 %1158
      %v1162 = vadd.f32 %v1134, %v1157
      %v1163 = vadd.f32 %v1135, %v1159
      %1165 = vset.pattern.permute.xlu0 0
      %1166 = vperm.xlu0 %1165, %v1060
      %v1167 = vpop.permute.xlu0 %1166
      %1170 = vset.pattern.permute.xlu0 0
      %1171 = vperm.xlu0 %1170, %v1061
      %v1172 = vpop.permute.xlu0 %1171
      %v1174 = vmul.f32 %v1167, %v1070
      %v1175 = vmul.f32 %v1172, %v1071
      %1178 = vrot.lane.b32.xlu0 %v1174, 119
      %v1179 = vpop.permute.xlu0 %1178
      %1180 = vrot.lane.b32.xlu0 %v1175, 119
      %v1181 = vpop.permute.xlu0 %1180
      %v1184 = vadd.f32 %v1162, %v1179
      %v1185 = vadd.f32 %v1163, %v1181
      %1186 = vrot.lane.b32.xlu0 %v1051, 10
      %v1187 = vpop.permute.xlu0 %1186
      %v1189 = vmul.f32 %v1070, %v1187
      %v1190 = vmul.f32 %v1071, %v1187
      %1192 = vset.pattern.permute.xlu0 0
      %1193 = vperm.xlu0 %1192, %v1062
      %v1194 = vpop.permute.xlu0 %1193
      %1197 = vset.pattern.permute.xlu0 0
      %1198 = vperm.xlu0 %1197, %v1063
      %v1199 = vpop.permute.xlu0 %1198
      %v1201 = vmul.f32 %v1194, %v1189
      %v1202 = vmul.f32 %v1199, %v1190
      %1205 = vrot.lane.b32.xlu0 %v1201, 118
      %v1206 = vpop.permute.xlu0 %1205
      %1207 = vrot.lane.b32.xlu0 %v1202, 118
      %v1208 = vpop.permute.xlu0 %1207
      %v1211 = vadd.f32 %v1184, %v1206
      %v1212 = vadd.f32 %v1185, %v1208
      %1213 = vrot.lane.b32.xlu0 %v1048, 16
      %v1214 = vpop.permute.xlu0 %1213
      %v1216 = vmul.f32 %v1070, %v1214
      %v1217 = vmul.f32 %v1071, %v1214
      %1219 = vset.pattern.permute.xlu0 0
      %1220 = vperm.xlu0 %1219, %v1064
      %v1221 = vpop.permute.xlu0 %1220
      %1224 = vset.pattern.permute.xlu0 0
      %1225 = vperm.xlu0 %1224, %v1065
      %v1226 = vpop.permute.xlu0 %1225
      %v1228 = vmul.f32 %v1221, %v1216
      %v1229 = vmul.f32 %v1226, %v1217
      %1232 = vrot.lane.b32.xlu0 %v1228, 112
      %v1233 = vpop.permute.xlu0 %1232
      %1234 = vrot.lane.b32.xlu0 %v1229, 112
      %v1235 = vpop.permute.xlu0 %1234
      %v1238 = vadd.f32 %v1211, %v1233
      %v1239 = vadd.f32 %v1212, %v1235
      %1241 = vset.pattern.permute.xlu0 0
      %1242 = vperm.xlu0 %1241, %v1066
      %v1243 = vpop.permute.xlu0 %1242
      %1246 = vset.pattern.permute.xlu0 0
      %1247 = vperm.xlu0 %1246, %v1067
      %v1248 = vpop.permute.xlu0 %1247
      %v1250 = vmul.f32 %v1243, %v1070
      %v1251 = vmul.f32 %v1248, %v1071
      %1254 = vrot.lane.b32.xlu0 %v1250, 111
      %v1255 = vpop.permute.xlu0 %1254
      %1256 = vrot.lane.b32.xlu0 %v1251, 111
      %v1257 = vpop.permute.xlu0 %1256
      %v1260 = vadd.f32 %v1238, %v1255
      %v1261 = vadd.f32 %v1239, %v1257
      %1262 = vrot.lane.b32.xlu0 %v1051, 18
      %v1263 = vpop.permute.xlu0 %1262
      %v1265 = vmul.f32 %v1070, %v1263
      %v1266 = vmul.f32 %v1071, %v1263
      %1268 = vset.pattern.permute.xlu0 0
      %1269 = vperm.xlu0 %1268, %v1068
      %v1270 = vpop.permute.xlu0 %1269
      %1273 = vset.pattern.permute.xlu0 0
      %1274 = vperm.xlu0 %1273, %v1069
      %v1275 = vpop.permute.xlu0 %1274
      %v1277 = vmul.f32 %v1270, %v1265
      %v1278 = vmul.f32 %v1275, %v1266
      %1281 = vrot.lane.b32.xlu0 %v1277, 110
      %v1282 = vpop.permute.xlu0 %1281
      %1283 = vrot.lane.b32.xlu0 %v1278, 110
      %v1284 = vpop.permute.xlu0 %1283
      %v1287 = vadd.f32 %v1260, %v1282
      %v1288 = vadd.f32 %v1261, %v1284
      %v1289 = vld [vmem:[%s8] sm:$0xff]
      %v1290 = vld [vmem:[%s8 + $0x8] sm:$0xff]
      %1292 = vset.pattern.permute.xlu0 0
      %1293 = vperm.xlu0 %1292, %v1289
      %v1294 = vpop.permute.xlu0 %1293
      %1297 = vset.pattern.permute.xlu0 0
      %1298 = vperm.xlu0 %1297, %v1290
      %v1299 = vpop.permute.xlu0 %1298
      %v1301 = vadd.f32 %v1287, %v1294
      %v1302 = vadd.f32 %v1288, %v1299
      %v1303 = vmul.f32 %v1301, 0.1
      %v1304 = vmul.f32 %v1302, 0.1
      %v1305 = vmax.f32 %v1301, %v1303
      %v1306 = vmax.f32 %v1302, %v1304
      %v1307 = vld [vmem:[%s9] sm:$0xf]
      %v1308 = vld [vmem:[%s9 + $0x4] sm:$0xf]
      %v1309 = vld [vmem:[%s9 + $0x8] sm:$0xf]
      %v1310 = vld [vmem:[%s9 + $0xc] sm:$0xf]
      %v1311 = vpack.c.bf16 %v1306, %v1305
      %v1312 = vld [vmem:[%s10] sm:$0xff]
      %v1313 = vld [vmem:[%s10 + $0x8] sm:$0xff]
      %v1314 = vld [vmem:[%s10 + $0x10] sm:$0xff]
      %v1315 = vld [vmem:[%s10 + $0x18] sm:$0xff]
      %1317 = vset.pattern.permute.xlu0 0
      %1318 = vperm.xlu0 %1317, %v1312
      %v1319 = vpop.permute.xlu0 %1318
      %1322 = vset.pattern.permute.xlu0 0
      %1323 = vperm.xlu0 %1322, %v1313
      %v1324 = vpop.permute.xlu0 %1323
      %1327 = vset.pattern.permute.xlu0 0
      %1328 = vperm.xlu0 %1327, %v1314
      %v1329 = vpop.permute.xlu0 %1328
      %1332 = vset.pattern.permute.xlu0 0
      %1333 = vperm.xlu0 %1332, %v1315
      %v1334 = vpop.permute.xlu0 %1333
      %v1340 = vunpack.c.l.b16 %v1307
      %v1341 = vunpack.c.l.b16 %v1308
      %v1342 = vunpack.c.l.b16 %v1309
      %v1343 = vunpack.c.l.b16 %v1310
      %v1344 = vpack.c.b16 %v1341, %v1340
      %v1345 = vpack.c.b16 %v1343, %v1342
      %v1347 = vsel %vm977, %v1344, 0
      %v1350 = vsel %vm977, %v1345, 0
      %1352 = vmatpush.bf16.msra.mxu0 0
      %1353 = vmatpush.bf16.msra.mxu0 0
      %1354 = vmatpush.bf16.msra.mxu0 0
      %1355 = vmatpush.bf16.msra.mxu0 0
      %1356 = vmatpush.bf16.msra.mxu0 0
      %1357 = vmatpush.bf16.msra.mxu0 0
      %1358 = vmatpush.bf16.msra.mxu0 0
      %1359 = vmatpush.bf16.msra.mxu0 %v1311
      %1360 = vmatmul.bf16.gmra.mxu0 %v1347
      %v1361 = vpop.f32.mrf.mxu0
      %v1362 = vadd.f32 %v1319, %v1361
      %v1363 = vpop.f32.mrf.mxu0
      %v1364 = vadd.f32 %v1324, %v1363
      %1365 = vmatmul.bf16.gmra.mxu0 %v1350
      %v1366 = vpop.f32.mrf.mxu0
      %v1367 = vadd.f32 %v1329, %v1366
      %v1368 = vpop.f32.mrf.mxu0
      %v1369 = vadd.f32 %v1334, %v1368
      %1370 = vdwg.mxu0
      %v1371 = vmul.f32 %v1362, 0.1
      %v1372 = vmul.f32 %v1364, 0.1
      %v1373 = vmul.f32 %v1367, 0.1
      %v1374 = vmul.f32 %v1369, 0.1
      %v1375 = vmax.f32 %v1362, %v1371
      %v1376 = vmax.f32 %v1364, %v1372
      %v1377 = vmax.f32 %v1367, %v1373
      %v1378 = vmax.f32 %v1369, %v1374
      %vm1379 = vcmask 523264
      %1380 = vst.msk [vmem:[#allocation6] sm:$0xff] %vm1379, %v1375
      %1381 = vst.msk [vmem:[#allocation6 + $0x8] sm:$0xff] %vm1379, %v1376
      %1382 = vst.msk [vmem:[#allocation6 + $0x10] sm:$0xff] %vm1379, %v1377
      %1383 = vst.msk [vmem:[#allocation6 + $0x18] sm:$0xff] %vm1379, %v1378
      %v1384 = vld [vmem:[%s15] sm:$0x3]
      %v1385 = vld [vmem:[#allocation5] sm:$0xff]
      %v1386 = vld [vmem:[#allocation5 + $0x8] sm:$0xff]
      %v1387 = vld [vmem:[#allocation5 + $0x10] sm:$0xff]
      %v1388 = vld [vmem:[#allocation5 + $0x18] sm:$0xff]
      %v1389 = vpack.c.bf16 %v1386, %v1385
      %v1390 = vpack.c.bf16 %v1388, %v1387
      %vm1391 = vcmask 31744
      %v1393 = vsel %vm1391, %v1389, 0
      %v1396 = vsel %vm1391, %v1390, 0
      %vm1398 = vcmask 1041408
      %v1400 = vsel %vm1398, %v1384, 0
      %1402 = vmatpush.bf16.msra.mxu0 0
      %1403 = vmatpush.bf16.msra.mxu0 0
      %1404 = vmatpush.bf16.msra.mxu0 0
      %1405 = vmatpush.bf16.msra.mxu0 0
      %1406 = vmatpush.bf16.msra.mxu0 0
      %1407 = vmatpush.bf16.msra.mxu0 0
      %1408 = vmatpush.bf16.msra.mxu0 0
      %1409 = vmatpush.bf16.msra.mxu0 %v1400
      %1410 = vmatmul.bf16.gmra.mxu0 %v1393
      %v1411 = vpop.f32.mrf.mxu0
      %v1412 = vadd.f32 0.0, %v1411
      %v1413 = vpop.f32.mrf.mxu0
      %v1414 = vadd.f32 0.0, %v1413
      %1415 = vmatmul.bf16.gmra.mxu0 %v1396
      %v1416 = vpop.f32.mrf.mxu0
      %v1417 = vadd.f32 0.0, %v1416
      %v1418 = vpop.f32.mrf.mxu0
      %v1419 = vadd.f32 0.0, %v1418
      %1420 = vdwg.mxu0
      %1423 = vrot.lane.b32.xlu0 %v1389, 124
      %v1424 = vpop.permute.xlu0 %1423
      %1425 = vrot.lane.b32.xlu0 %v1390, 124
      %v1426 = vpop.permute.xlu0 %1425
      %v1428 = vsel %vm1391, %v1424, 0
      %v1431 = vsel %vm1391, %v1426, 0
      %1433 = vmatpush.bf16.msra.mxu0 0
      %1434 = vmatpush.bf16.msra.mxu0 0
      %1435 = vmatpush.bf16.msra.mxu0 0
      %1436 = vmatpush.bf16.msra.mxu0 0
      %1437 = vmatpush.bf16.msra.mxu0 0
      %1438 = vmatpush.bf16.msra.mxu0 0
      %1439 = vmatpush.bf16.msra.mxu0 0
      %1440 = vmatpush.bf16.msra.mxu0 %v1400
      %1441 = vmatmul.bf16.gmra.mxu0 %v1428
      %v1442 = vpop.f32.mrf.mxu0
      %v1443 = vadd.f32 0.0, %v1442
      %v1444 = vpop.f32.mrf.mxu0
      %v1445 = vadd.f32 0.0, %v1444
      %1446 = vmatmul.bf16.gmra.mxu0 %v1431
      %v1447 = vpop.f32.mrf.mxu0
      %v1448 = vadd.f32 0.0, %v1447
      %v1449 = vpop.f32.mrf.mxu0
      %v1450 = vadd.f32 0.0, %v1449
      %1451 = vdwg.mxu0
      %v1452 = vld [vmem:[#allocation6] sm:$0xff]
      %v1453 = vld [vmem:[#allocation6 + $0x8] sm:$0xff]
      %v1454 = vld [vmem:[#allocation6 + $0x10] sm:$0xff]
      %v1455 = vld [vmem:[#allocation6 + $0x18] sm:$0xff]
      %v1456 = vmul.f32 %v1412, 0.25
      %v1457 = vmul.f32 %v1414, 0.25
      %v1458 = vmul.f32 %v1417, 0.25
      %v1459 = vmul.f32 %v1419, 0.25
      %v1460 = vmul.f32 %v1412, 0.75
      %v1461 = vmul.f32 %v1414, 0.75
      %v1462 = vmul.f32 %v1417, 0.75
      %v1463 = vmul.f32 %v1419, 0.75
      %v1464 = vadd.f32 %v1456, %v1460
      %v1465 = vadd.f32 %v1457, %v1461
      %v1466 = vadd.f32 %v1458, %v1462
      %v1467 = vadd.f32 %v1459, %v1463
      %v1468 = vadd.f32 %v1452, %v1464
      %v1469 = vadd.f32 %v1453, %v1465
      %v1470 = vadd.f32 %v1454, %v1466
      %v1471 = vadd.f32 %v1455, %v1467
      %vm1472 = vcmask 64512
      %1473 = vst.msk [vmem:[#allocation6] sm:$0xff] %vm1472, %v1468
      %1474 = vst.msk [vmem:[#allocation6 + $0x8] sm:$0xff] %vm1472, %v1469
      %1475 = vst.msk [vmem:[#allocation6 + $0x10] sm:$0xff] %vm1472, %v1470
      %1476 = vst.msk [vmem:[#allocation6 + $0x18] sm:$0xff] %vm1472, %v1471
      %v1477 = vld [vmem:[#allocation6] sm:$0xff]
      %v1478 = vld [vmem:[#allocation6 + $0x8] sm:$0xff]
      %v1479 = vld [vmem:[#allocation6 + $0x10] sm:$0xff]
      %v1480 = vld [vmem:[#allocation6 + $0x18] sm:$0xff]
      %v1481 = vmul.f32 %v1443, 0.25
      %v1482 = vmul.f32 %v1445, 0.25
      %v1483 = vmul.f32 %v1448, 0.25
      %v1484 = vmul.f32 %v1450, 0.25
      %v1485 = vadd.f32 %v1460, %v1481
      %v1486 = vadd.f32 %v1461, %v1482
      %v1487 = vadd.f32 %v1462, %v1483
      %v1488 = vadd.f32 %v1463, %v1484
      %1493 = vrot.lane.b32.xlu0 %v1485, 8
      %v1494 = vpop.permute.xlu0 %1493
      %1495 = vrot.lane.b32.xlu0 %v1486, 8
      %v1496 = vpop.permute.xlu0 %1495
      %1497 = vrot.lane.b32.xlu0 %v1487, 8
      %v1498 = vpop.permute.xlu0 %1497
      %1499 = vrot.lane.b32.xlu0 %v1488, 8
      %v1500 = vpop.permute.xlu0 %1499
      %v1505 = vadd.f32 %v1477, %v1494
      %v1506 = vadd.f32 %v1478, %v1496
      %v1507 = vadd.f32 %v1479, %v1498
      %v1508 = vadd.f32 %v1480, %v1500
      %vm1509 = vcmask 130112
      %1510 = vst.msk [vmem:[#allocation6] sm:$0xff] %vm1509, %v1505
      %1511 = vst.msk [vmem:[#allocation6 + $0x8] sm:$0xff] %vm1509, %v1506
      %1512 = vst.msk [vmem:[#allocation6 + $0x10] sm:$0xff] %vm1509, %v1507
      %1513 = vst.msk [vmem:[#allocation6 + $0x18] sm:$0xff] %vm1509, %v1508
      %v1514 = vld [vmem:[#allocation5] sm:$0xff]
      %v1515 = vld [vmem:[#allocation5 + $0x8] sm:$0xff]
      %v1516 = vld [vmem:[#allocation5 + $0x10] sm:$0xff]
      %v1517 = vld [vmem:[#allocation5 + $0x18] sm:$0xff]
      %v1518 = vpack.c.bf16 %v1515, %v1514
      %v1519 = vpack.c.bf16 %v1517, %v1516
      %1522 = vrot.lane.b32.xlu0 %v1518, 120
      %v1523 = vpop.permute.xlu0 %1522
      %1524 = vrot.lane.b32.xlu0 %v1519, 120
      %v1525 = vpop.permute.xlu0 %1524
      %v1527 = vsel %vm1391, %v1523, 0
      %v1530 = vsel %vm1391, %v1525, 0
      %1532 = vmatpush.bf16.msra.mxu0 0
      %1533 = vmatpush.bf16.msra.mxu0 0
      %1534 = vmatpush.bf16.msra.mxu0 0
      %1535 = vmatpush.bf16.msra.mxu0 0
      %1536 = vmatpush.bf16.msra.mxu0 0
      %1537 = vmatpush.bf16.msra.mxu0 0
      %1538 = vmatpush.bf16.msra.mxu0 0
      %1539 = vmatpush.bf16.msra.mxu0 %v1400
      %1540 = vmatmul.bf16.gmra.mxu0 %v1527
      %v1541 = vpop.f32.mrf.mxu0
      %v1542 = vadd.f32 0.0, %v1541
      %v1543 = vpop.f32.mrf.mxu0
      %v1544 = vadd.f32 0.0, %v1543
      %1545 = vmatmul.bf16.gmra.mxu0 %v1530
      %v1546 = vpop.f32.mrf.mxu0
      %v1547 = vadd.f32 0.0, %v1546
      %v1548 = vpop.f32.mrf.mxu0
      %v1549 = vadd.f32 0.0, %v1548
      %1550 = vdwg.mxu0
      %v1551 = vld [vmem:[#allocation6] sm:$0xff]
      %v1552 = vld [vmem:[#allocation6 + $0x8] sm:$0xff]
      %v1553 = vld [vmem:[#allocation6 + $0x10] sm:$0xff]
      %v1554 = vld [vmem:[#allocation6 + $0x18] sm:$0xff]
      %v1555 = vmul.f32 %v1443, 0.75
      %v1556 = vmul.f32 %v1445, 0.75
      %v1557 = vmul.f32 %v1448, 0.75
      %v1558 = vmul.f32 %v1450, 0.75
      %v1559 = vadd.f32 %v1456, %v1555
      %v1560 = vadd.f32 %v1457, %v1556
      %v1561 = vadd.f32 %v1458, %v1557
      %v1562 = vadd.f32 %v1459, %v1558
      %1567 = vrot.lane.b32.xlu0 %v1559, 16
      %v1568 = vpop.permute.xlu0 %1567
      %1569 = vrot.lane.b32.xlu0 %v1560, 16
      %v1570 = vpop.permute.xlu0 %1569
      %1571 = vrot.lane.b32.xlu0 %v1561, 16
      %v1572 = vpop.permute.xlu0 %1571
      %1573 = vrot.lane.b32.xlu0 %v1562, 16
      %v1574 = vpop.permute.xlu0 %1573
      %v1579 = vadd.f32 %v1551, %v1568
      %v1580 = vadd.f32 %v1552, %v1570
      %v1581 = vadd.f32 %v1553, %v1572
      %v1582 = vadd.f32 %v1554, %v1574
      %vm1583 = vcmask 195712
      %1584 = vst.msk [vmem:[#allocation6] sm:$0xff] %vm1583, %v1579
      %1585 = vst.msk [vmem:[#allocation6 + $0x8] sm:$0xff] %vm1583, %v1580
      %1586 = vst.msk [vmem:[#allocation6 + $0x10] sm:$0xff] %vm1583, %v1581
      %1587 = vst.msk [vmem:[#allocation6 + $0x18] sm:$0xff] %vm1583, %v1582
      %v1588 = vld [vmem:[#allocation6] sm:$0xff]
      %v1589 = vld [vmem:[#allocation6 + $0x8] sm:$0xff]
      %v1590 = vld [vmem:[#allocation6 + $0x10] sm:$0xff]
      %v1591 = vld [vmem:[#allocation6 + $0x18] sm:$0xff]
      %v1592 = vmul.f32 %v1542, 0.25
      %v1593 = vmul.f32 %v1544, 0.25
      %v1594 = vmul.f32 %v1547, 0.25
      %v1595 = vmul.f32 %v1549, 0.25
      %v1596 = vadd.f32 %v1555, %v1592
      %v1597 = vadd.f32 %v1556, %v1593
      %v1598 = vadd.f32 %v1557, %v1594
      %v1599 = vadd.f32 %v1558, %v1595
      %1604 = vrot.lane.b32.xlu0 %v1596, 24
      %v1605 = vpop.permute.xlu0 %1604
      %1606 = vrot.lane.b32.xlu0 %v1597, 24
      %v1607 = vpop.permute.xlu0 %1606
      %1608 = vrot.lane.b32.xlu0 %v1598, 24
      %v1609 = vpop.permute.xlu0 %1608
      %1610 = vrot.lane.b32.xlu0 %v1599, 24
      %v1611 = vpop.permute.xlu0 %1610
      %v1616 = vadd.f32 %v1588, %v1605
      %v1617 = vadd.f32 %v1589, %v1607
      %v1618 = vadd.f32 %v1590, %v1609
      %v1619 = vadd.f32 %v1591, %v1611
      %vm1620 = vcmask 261312
      %1621 = vst.msk [vmem:[#allocation6] sm:$0xff] %vm1620, %v1616
      %1622 = vst.msk [vmem:[#allocation6 + $0x8] sm:$0xff] %vm1620, %v1617
      %1623 = vst.msk [vmem:[#allocation6 + $0x10] sm:$0xff] %vm1620, %v1618
      %1624 = vst.msk [vmem:[#allocation6 + $0x18] sm:$0xff] %vm1620, %v1619
      %v1625 = vld [vmem:[#allocation5] sm:$0xff]
      %v1626 = vld [vmem:[#allocation5 + $0x8] sm:$0xff]
      %v1627 = vld [vmem:[#allocation5 + $0x10] sm:$0xff]
      %v1628 = vld [vmem:[#allocation5 + $0x18] sm:$0xff]
      %v1629 = vpack.c.bf16 %v1626, %v1625
      %v1630 = vpack.c.bf16 %v1628, %v1627
      %1633 = vrot.lane.b32.xlu0 %v1629, 116
      %v1634 = vpop.permute.xlu0 %1633
      %1635 = vrot.lane.b32.xlu0 %v1630, 116
      %v1636 = vpop.permute.xlu0 %1635
      %v1638 = vsel %vm1391, %v1634, 0
      %v1641 = vsel %vm1391, %v1636, 0
      %1643 = vmatpush.bf16.msra.mxu0 0
      %1644 = vmatpush.bf16.msra.mxu0 0
      %1645 = vmatpush.bf16.msra.mxu0 0
      %1646 = vmatpush.bf16.msra.mxu0 0
      %1647 = vmatpush.bf16.msra.mxu0 0
      %1648 = vmatpush.bf16.msra.mxu0 0
      %1649 = vmatpush.bf16.msra.mxu0 0
      %1650 = vmatpush.bf16.msra.mxu0 %v1400
      %1651 = vmatmul.bf16.gmra.mxu0 %v1638
      %v1652 = vpop.f32.mrf.mxu0
      %v1653 = vadd.f32 0.0, %v1652
      %v1654 = vpop.f32.mrf.mxu0
      %v1655 = vadd.f32 0.0, %v1654
      %1656 = vmatmul.bf16.gmra.mxu0 %v1641
      %v1657 = vpop.f32.mrf.mxu0
      %v1658 = vadd.f32 0.0, %v1657
      %v1659 = vpop.f32.mrf.mxu0
      %v1660 = vadd.f32 0.0, %v1659
      %1661 = vdwg.mxu0
      %v1662 = vld [vmem:[#allocation6] sm:$0xff]
      %v1663 = vld [vmem:[#allocation6 + $0x8] sm:$0xff]
      %v1664 = vld [vmem:[#allocation6 + $0x10] sm:$0xff]
      %v1665 = vld [vmem:[#allocation6 + $0x18] sm:$0xff]
      %v1666 = vmul.f32 %v1542, 0.75
      %v1667 = vmul.f32 %v1544, 0.75
      %v1668 = vmul.f32 %v1547, 0.75
      %v1669 = vmul.f32 %v1549, 0.75
      %v1670 = vadd.f32 %v1481, %v1666
      %v1671 = vadd.f32 %v1482, %v1667
      %v1672 = vadd.f32 %v1483, %v1668
      %v1673 = vadd.f32 %v1484, %v1669
      %1678 = vrot.lane.b32.xlu0 %v1670, 32
      %v1679 = vpop.permute.xlu0 %1678
      %1680 = vrot.lane.b32.xlu0 %v1671, 32
      %v1681 = vpop.permute.xlu0 %1680
      %1682 = vrot.lane.b32.xlu0 %v1672, 32
      %v1683 = vpop.permute.xlu0 %1682
      %1684 = vrot.lane.b32.xlu0 %v1673, 32
      %v1685 = vpop.permute.xlu0 %1684
      %v1690 = vadd.f32 %v1662, %v1679
      %v1691 = vadd.f32 %v1663, %v1681
      %v1692 = vadd.f32 %v1664, %v1683
      %v1693 = vadd.f32 %v1665, %v1685
      %vm1694 = vcmask 326912
      %1695 = vst.msk [vmem:[#allocation6] sm:$0xff] %vm1694, %v1690
      %1696 = vst.msk [vmem:[#allocation6 + $0x8] sm:$0xff] %vm1694, %v1691
      %1697 = vst.msk [vmem:[#allocation6 + $0x10] sm:$0xff] %vm1694, %v1692
      %1698 = vst.msk [vmem:[#allocation6 + $0x18] sm:$0xff] %vm1694, %v1693
      %v1699 = vld [vmem:[#allocation6] sm:$0xff]
      %v1700 = vld [vmem:[#allocation6 + $0x8] sm:$0xff]
      %v1701 = vld [vmem:[#allocation6 + $0x10] sm:$0xff]
      %v1702 = vld [vmem:[#allocation6 + $0x18] sm:$0xff]
      %v1703 = vmul.f32 %v1653, 0.25
      %v1704 = vmul.f32 %v1655, 0.25
      %v1705 = vmul.f32 %v1658, 0.25
      %v1706 = vmul.f32 %v1660, 0.25
      %v1707 = vadd.f32 %v1666, %v1703
      %v1708 = vadd.f32 %v1667, %v1704
      %v1709 = vadd.f32 %v1668, %v1705
      %v1710 = vadd.f32 %v1669, %v1706
      %1715 = vrot.lane.b32.xlu0 %v1707, 40
      %v1716 = vpop.permute.xlu0 %1715
      %1717 = vrot.lane.b32.xlu0 %v1708, 40
      %v1718 = vpop.permute.xlu0 %1717
      %1719 = vrot.lane.b32.xlu0 %v1709, 40
      %v1720 = vpop.permute.xlu0 %1719
      %1721 = vrot.lane.b32.xlu0 %v1710, 40
      %v1722 = vpop.permute.xlu0 %1721
      %v1727 = vadd.f32 %v1699, %v1716
      %v1728 = vadd.f32 %v1700, %v1718
      %v1729 = vadd.f32 %v1701, %v1720
      %v1730 = vadd.f32 %v1702, %v1722
      %vm1731 = vcmask 392512
      %1732 = vst.msk [vmem:[#allocation6] sm:$0xff] %vm1731, %v1727
      %1733 = vst.msk [vmem:[#allocation6 + $0x8] sm:$0xff] %vm1731, %v1728
      %1734 = vst.msk [vmem:[#allocation6 + $0x10] sm:$0xff] %vm1731, %v1729
      %1735 = vst.msk [vmem:[#allocation6 + $0x18] sm:$0xff] %vm1731, %v1730
      %v1736 = vld [vmem:[#allocation6] sm:$0xff]
      %v1737 = vld [vmem:[#allocation6 + $0x8] sm:$0xff]
      %v1738 = vld [vmem:[#allocation6 + $0x10] sm:$0xff]
      %v1739 = vld [vmem:[#allocation6 + $0x18] sm:$0xff]
      %v1740 = vmul.f32 %v1653, 0.75
      %v1741 = vmul.f32 %v1655, 0.75
      %v1742 = vmul.f32 %v1658, 0.75
      %v1743 = vmul.f32 %v1660, 0.75
      %v1744 = vadd.f32 %v1592, %v1740
      %v1745 = vadd.f32 %v1593, %v1741
      %v1746 = vadd.f32 %v1594, %v1742
      %v1747 = vadd.f32 %v1595, %v1743
      %1752 = vrot.lane.b32.xlu0 %v1744, 48
      %v1753 = vpop.permute.xlu0 %1752
      %1754 = vrot.lane.b32.xlu0 %v1745, 48
      %v1755 = vpop.permute.xlu0 %1754
      %1756 = vrot.lane.b32.xlu0 %v1746, 48
      %v1757 = vpop.permute.xlu0 %1756
      %1758 = vrot.lane.b32.xlu0 %v1747, 48
      %v1759 = vpop.permute.xlu0 %1758
      %v1764 = vadd.f32 %v1736, %v1753
      %v1765 = vadd.f32 %v1737, %v1755
      %v1766 = vadd.f32 %v1738, %v1757
      %v1767 = vadd.f32 %v1739, %v1759
      %vm1768 = vcmask 458112
      %1769 = vst.msk [vmem:[#allocation6] sm:$0xff] %vm1768, %v1764
      %1770 = vst.msk [vmem:[#allocation6 + $0x8] sm:$0xff] %vm1768, %v1765
      %1771 = vst.msk [vmem:[#allocation6 + $0x10] sm:$0xff] %vm1768, %v1766
      %1772 = vst.msk [vmem:[#allocation6 + $0x18] sm:$0xff] %vm1768, %v1767
      %v1773 = vld [vmem:[#allocation6] sm:$0xff]
      %v1774 = vld [vmem:[#allocation6 + $0x8] sm:$0xff]
      %v1775 = vld [vmem:[#allocation6 + $0x10] sm:$0xff]
      %v1776 = vld [vmem:[#allocation6 + $0x18] sm:$0xff]
      %v1777 = vadd.f32 %v1740, %v1703
      %v1778 = vadd.f32 %v1741, %v1704
      %v1779 = vadd.f32 %v1742, %v1705
      %v1780 = vadd.f32 %v1743, %v1706
      %1785 = vrot.lane.b32.xlu0 %v1777, 56
      %v1786 = vpop.permute.xlu0 %1785
      %1787 = vrot.lane.b32.xlu0 %v1778, 56
      %v1788 = vpop.permute.xlu0 %1787
      %1789 = vrot.lane.b32.xlu0 %v1779, 56
      %v1790 = vpop.permute.xlu0 %1789
      %1791 = vrot.lane.b32.xlu0 %v1780, 56
      %v1792 = vpop.permute.xlu0 %1791
      %v1797 = vadd.f32 %v1773, %v1786
      %v1798 = vadd.f32 %v1774, %v1788
      %v1799 = vadd.f32 %v1775, %v1790
      %v1800 = vadd.f32 %v1776, %v1792
      %vm1801 = vcmask 523712
      %1802 = vst.msk [vmem:[#allocation6] sm:$0xff] %vm1801, %v1797
      %1803 = vst.msk [vmem:[#allocation6 + $0x8] sm:$0xff] %vm1801, %v1798
      %1804 = vst.msk [vmem:[#allocation6 + $0x10] sm:$0xff] %vm1801, %v1799
      %1805 = vst.msk [vmem:[#allocation6 + $0x18] sm:$0xff] %vm1801, %v1800
      %vm1806 = vcmask 138240
      %1807 = vst.msk [vmem:[#allocation4] sm:$0xff] %vm1806, 0.0
      %1808 = vst.msk [vmem:[#allocation4 + $0x18] sm:$0xff] %vm1806, 0.0
      %vm1809 = vcmask 277640
      %1810 = vst.msk [vmem:[#allocation4 + $0x10] sm:$0xff] %vm1809, 0.0
      %1811 = vst.msk [vmem:[#allocation4 + $0x28] sm:$0xff] %vm1809, 0.0
      %v1812 = vld [vmem:[%s637] sm:$0xff]
      %v1813 = vld [vmem:[%s637 + $0x8] sm:$0xff]
      %v1814 = vld [vmem:[%s637 + $0x10] sm:$0xff]
      %v1815 = vld [vmem:[%s637 + $0x18] sm:$0xff]
      %1820 = vrot.lane.b32.xlu0 %v1812, 17
      %v1821 = vpop.permute.xlu0 %1820
      %1822 = vrot.lane.b32.xlu0 %v1813, 17
      %v1823 = vpop.permute.xlu0 %1822
      %1824 = vrot.lane.b32.xlu0 %v1814, 17
      %v1825 = vpop.permute.xlu0 %1824
      %1826 = vrot.lane.b32.xlu0 %v1815, 17
      %v1827 = vpop.permute.xlu0 %1826
      %v1828 = vsel %vm1806, %v1821, %v1823
      %v1829 = vsel %vm1806, %v1825, %v1827
      %vm1836 = vcmask 1047688
      %1837 = vst.msk [vmem:[#allocation4] sm:$0xff] %vm1836, %v1821
      %1838 = vst [vmem:[#allocation4 + $0x8] sm:$0xff] %v1828
      %1839 = vst.msk [vmem:[#allocation4 + $0x10] sm:$0xff] %vm1806, %v1823
      %1840 = vst.msk [vmem:[#allocation4 + $0x18] sm:$0xff] %vm1836, %v1825
      %1841 = vst [vmem:[#allocation4 + $0x20] sm:$0xff] %v1829
      %1842 = vst.msk [vmem:[#allocation4 + $0x28] sm:$0xff] %vm1806, %v1827
      %v1843 = vadd.s32 %v664, 128
      %vm1844 = vcmp.lt.s32.totalorder %v664, 0
      %v1845 = vsub.s32 0, %v664
      %v1846 = vsel %vm1844, %v1845, %v664
      %v1847 = vshrl.u32 %v1846, 4
      %v1848 = vand.u32 %v1846, 15
      %v1849 = vsub.s32 0, %v1848
      %v1850 = vsel %vm1844, %v1849, %v1848
      %vm1851 = vcmp.lt.s32.totalorder %v1843, 0
      %v1852 = vsub.s32 0, %v1843
      %v1853 = vsel %vm1851, %v1852, %v1843
      %v1854 = vshrl.u32 %v1853, 4
      %v1855 = vand.u32 %v1853, 15
      %v1856 = vsub.s32 0, %v1855
      %v1857 = vsel %vm1851, %v1856, %v1855
      %vm1858 = vcmp.ne.s32.totalorder %v1850, 0
      %vm1859 = vcmp.ne.s32.totalorder %v1857, 0
      %vm1860 = vcmp.lt.s32.totalorder %v1850, 0
      %vm1861 = vcmp.lt.s32.totalorder %v1857, 0
      %vm1862 = vmand %vm1860, %vm1858
      %vm1863 = vmand %vm1861, %vm1859
      %v1864 = vadd.s32 %v1850, 16
      %v1865 = vadd.s32 %v1857, 16
      %v1866 = vsel %vm1862, %v1864, %v1850
      %v1867 = vsel %vm1863, %v1865, %v1857
      %vm1868 = vcmp.ge.s32.totalorder %v1866, 1
      %vm1869 = vcmp.ge.s32.totalorder %v1867, 1
      %v1870 = vsel %vm1868, 1, 0
      %v1871 = vsel %vm1869, 1, 0
      %v1872 = vcvt.s32.f32 %v1870
      %v1873 = vcvt.s32.f32 %v1871
      %vm1874 = vcmp.le.s32.totalorder %v1866, 14
      %vm1875 = vcmp.le.s32.totalorder %v1867, 14
      %v1876 = vsel %vm1874, 1, 0
      %v1877 = vsel %vm1875, 1, 0
      %v1878 = vcvt.s32.f32 %v1876
      %v1879 = vcvt.s32.f32 %v1877
      %v1880 = vld [vmem:[%s11] sm:$0xff]
      %v1881 = vld [vmem:[%s11 + $0x8] sm:$0xff]
      %v1882 = vld [vmem:[%s11 + $0x10] sm:$0xff]
      %v1883 = vld [vmem:[%s11 + $0x18] sm:$0xff]
      %v1884 = vld [vmem:[%s11 + $0x20] sm:$0xff]
      %v1885 = vld [vmem:[%s11 + $0x28] sm:$0xff]
      %v1886 = vld [vmem:[%s11 + $0x30] sm:$0xff]
      %v1887 = vld [vmem:[%s11 + $0x38] sm:$0xff]
      %v1888 = vld [vmem:[%s11 + $0x40] sm:$0xff]
      %v1889 = vld [vmem:[%s11 + $0x48] sm:$0xff]
      %v1890 = vld [vmem:[%s11 + $0x50] sm:$0xff]
      %v1891 = vld [vmem:[%s11 + $0x58] sm:$0xff]
      %v1892 = vld [vmem:[%s11 + $0x60] sm:$0xff]
      %v1893 = vld [vmem:[%s11 + $0x68] sm:$0xff]
      %v1894 = vld [vmem:[%s11 + $0x70] sm:$0xff]
      %v1895 = vld [vmem:[%s11 + $0x78] sm:$0xff]
      %v1896 = vld [vmem:[%s11 + $0x80] sm:$0xff]
      %v1897 = vld [vmem:[%s11 + $0x88] sm:$0xff]
      %v1898 = vld [vmem:[#allocation4] sm:$0xff]
      %v1899 = vld [vmem:[#allocation4 + $0x8] sm:$0xff]
      %v1900 = vld [vmem:[#allocation4 + $0x18] sm:$0xff]
      %v1901 = vld [vmem:[#allocation4 + $0x20] sm:$0xff]
      %v1902 = vmul.f32 %v1898, %v1872
      %v1903 = vmul.f32 %v1899, %v1873
      %v1904 = vmul.f32 %v1900, %v1872
      %v1905 = vmul.f32 %v1901, %v1873
      %1907 = vset.pattern.permute.xlu0 0
      %1908 = vperm.xlu0 %1907, %v1880
      %v1909 = vpop.permute.xlu0 %1908
      %1912 = vset.pattern.permute.xlu0 0
      %1913 = vperm.xlu0 %1912, %v1881
      %v1914 = vpop.permute.xlu0 %1913
      %v1916 = vmul.f32 %v1909, %v1902
      %v1917 = vmul.f32 %v1909, %v1903
      %v1918 = vmul.f32 %v1914, %v1904
      %v1919 = vmul.f32 %v1914, %v1905
      %v1920 = vld [vmem:[#allocation4] sm:$0xff]
      %v1921 = vld [vmem:[#allocation4 + $0x8] sm:$0xff]
      %v1922 = vld [vmem:[#allocation4 + $0x10] sm:$0xff]
      %v1923 = vld [vmem:[#allocation4 + $0x18] sm:$0xff]
      %v1924 = vld [vmem:[#allocation4 + $0x20] sm:$0xff]
      %v1925 = vld [vmem:[#allocation4 + $0x28] sm:$0xff]
      %1927 = vset.pattern.permute.xlu0 0
      %1928 = vperm.xlu0 %1927, %v1882
      %v1929 = vpop.permute.xlu0 %1928
      %1932 = vset.pattern.permute.xlu0 0
      %1933 = vperm.xlu0 %1932, %v1883
      %v1934 = vpop.permute.xlu0 %1933
      %v1936 = vmul.f32 %v1929, %v1920
      %v1937 = vmul.f32 %v1929, %v1921
      %v1938 = vmul.f32 %v1929, %v1922
      %v1939 = vmul.f32 %v1934, %v1923
      %v1940 = vmul.f32 %v1934, %v1924
      %v1941 = vmul.f32 %v1934, %v1925
      %1948 = vrot.lane.b32.xlu0 %v1936, 127
      %v1949 = vpop.permute.xlu0 %1948
      %1950 = vrot.lane.b32.xlu0 %v1937, 127
      %v1951 = vpop.permute.xlu0 %1950
      %1952 = vrot.lane.b32.xlu0 %v1938, 127
      %v1953 = vpop.permute.xlu0 %1952
      %1954 = vrot.lane.b32.xlu0 %v1939, 127
      %v1955 = vpop.permute.xlu0 %1954
      %1956 = vrot.lane.b32.xlu0 %v1940, 127
      %v1957 = vpop.permute.xlu0 %1956
      %1958 = vrot.lane.b32.xlu0 %v1941, 127
      %v1959 = vpop.permute.xlu0 %1958
      %vm1960 = vcmask 1039360
      %v1961 = vsel %vm1960, %v1949, %v1951
      %v1962 = vsel %vm1960, %v1951, %v1953
      %v1963 = vsel %vm1960, %v1955, %v1957
      %v1964 = vsel %vm1960, %v1957, %v1959
      %v1969 = vadd.f32 %v1916, %v1961
      %v1970 = vadd.f32 %v1917, %v1962
      %v1971 = vadd.f32 %v1918, %v1963
      %v1972 = vadd.f32 %v1919, %v1964
      %1975 = vrot.lane.b32.xlu0 %v1878, 2
      %v1976 = vpop.permute.xlu0 %1975
      %1977 = vrot.lane.b32.xlu0 %v1879, 2
      %v1978 = vpop.permute.xlu0 %1977
      %vm1979 = vcmask 15360
      %v1980 = vsel %vm1979, %v1976, %v1978
      %v1984 = vmul.f32 %v1920, %v1976
      %v1985 = vmul.f32 %v1921, %v1980
      %v1986 = vmul.f32 %v1922, %v1978
      %v1987 = vmul.f32 %v1923, %v1976
      %v1988 = vmul.f32 %v1924, %v1980
      %v1989 = vmul.f32 %v1925, %v1978
      %1991 = vset.pattern.permute.xlu0 0
      %1992 = vperm.xlu0 %1991, %v1884
      %v1993 = vpop.permute.xlu0 %1992
      %1996 = vset.pattern.permute.xlu0 0
      %1997 = vperm.xlu0 %1996, %v1885
      %v1998 = vpop.permute.xlu0 %1997
      %v2000 = vmul.f32 %v1993, %v1984
      %v2001 = vmul.f32 %v1993, %v1985
      %v2002 = vmul.f32 %v1993, %v1986
      %v2003 = vmul.f32 %v1998, %v1987
      %v2004 = vmul.f32 %v1998, %v1988
      %v2005 = vmul.f32 %v1998, %v1989
      %2012 = vrot.lane.b32.xlu0 %v2000, 126
      %v2013 = vpop.permute.xlu0 %2012
      %2014 = vrot.lane.b32.xlu0 %v2001, 126
      %v2015 = vpop.permute.xlu0 %2014
      %2016 = vrot.lane.b32.xlu0 %v2002, 126
      %v2017 = vpop.permute.xlu0 %2016
      %2018 = vrot.lane.b32.xlu0 %v2003, 126
      %v2019 = vpop.permute.xlu0 %2018
      %2020 = vrot.lane.b32.xlu0 %v2004, 126
      %v2021 = vpop.permute.xlu0 %2020
      %2022 = vrot.lane.b32.xlu0 %v2005, 126
      %v2023 = vpop.permute.xlu0 %2022
      %vm2024 = vcmask 1031168
      %v2025 = vsel %vm2024, %v2013, %v2015
      %v2026 = vsel %vm2024, %v2015, %v2017
      %v2027 = vsel %vm2024, %v2019, %v2021
      %v2028 = vsel %vm2024, %v2021, %v2023
      %v2033 = vadd.f32 %v1969, %v2025
      %v2034 = vadd.f32 %v1970, %v2026
      %v2035 = vadd.f32 %v1971, %v2027
      %v2036 = vadd.f32 %v1972, %v2028
      %2039 = vrot.lane.b32.xlu0 %v1872, 16
      %v2040 = vpop.permute.xlu0 %2039
      %2041 = vrot.lane.b32.xlu0 %v1873, 16
      %v2042 = vpop.permute.xlu0 %2041
      %v2043 = vsel %vm977, %v2040, %v2042
      %v2047 = vmul.f32 %v1920, %v2040
      %v2048 = vmul.f32 %v1921, %v2043
      %v2049 = vmul.f32 %v1922, %v2042
      %v2050 = vmul.f32 %v1923, %v2040
      %v2051 = vmul.f32 %v1924, %v2043
      %v2052 = vmul.f32 %v1925, %v2042
      %2054 = vset.pattern.permute.xlu0 0
      %2055 = vperm.xlu0 %2054, %v1886
      %v2056 = vpop.permute.xlu0 %2055
      %2059 = vset.pattern.permute.xlu0 0
      %2060 = vperm.xlu0 %2059, %v1887
      %v2061 = vpop.permute.xlu0 %2060
      %v2063 = vmul.f32 %v2056, %v2047
      %v2064 = vmul.f32 %v2056, %v2048
      %v2065 = vmul.f32 %v2056, %v2049
      %v2066 = vmul.f32 %v2061, %v2050
      %v2067 = vmul.f32 %v2061, %v2051
      %v2068 = vmul.f32 %v2061, %v2052
      %2075 = vrot.lane.b32.xlu0 %v2063, 112
      %v2076 = vpop.permute.xlu0 %2075
      %2077 = vrot.lane.b32.xlu0 %v2064, 112
      %v2078 = vpop.permute.xlu0 %2077
      %2079 = vrot.lane.b32.xlu0 %v2065, 112
      %v2080 = vpop.permute.xlu0 %2079
      %2081 = vrot.lane.b32.xlu0 %v2066, 112
      %v2082 = vpop.permute.xlu0 %2081
      %2083 = vrot.lane.b32.xlu0 %v2067, 112
      %v2084 = vpop.permute.xlu0 %2083
      %2085 = vrot.lane.b32.xlu0 %v2068, 112
      %v2086 = vpop.permute.xlu0 %2085
      %vm2087 = vcmask 916480
      %v2088 = vsel %vm2087, %v2076, %v2078
      %v2089 = vsel %vm2087, %v2078, %v2080
      %v2090 = vsel %vm2087, %v2082, %v2084
      %v2091 = vsel %vm2087, %v2084, %v2086
      %v2096 = vadd.f32 %v2033, %v2088
      %v2097 = vadd.f32 %v2034, %v2089
      %v2098 = vadd.f32 %v2035, %v2090
      %v2099 = vadd.f32 %v2036, %v2091
      %2101 = vset.pattern.permute.xlu0 0
      %2102 = vperm.xlu0 %2101, %v1888
      %v2103 = vpop.permute.xlu0 %2102
      %2106 = vset.pattern.permute.xlu0 0
      %2107 = vperm.xlu0 %2106, %v1889
      %v2108 = vpop.permute.xlu0 %2107
      %v2110 = vmul.f32 %v2103, %v1920
      %v2111 = vmul.f32 %v2103, %v1921
      %v2112 = vmul.f32 %v2103, %v1922
      %v2113 = vmul.f32 %v2108, %v1923
      %v2114 = vmul.f32 %v2108, %v1924
      %v2115 = vmul.f32 %v2108, %v1925
      %2122 = vrot.lane.b32.xlu0 %v2110, 111
      %v2123 = vpop.permute.xlu0 %2122
      %2124 = vrot.lane.b32.xlu0 %v2111, 111
      %v2125 = vpop.permute.xlu0 %2124
      %2126 = vrot.lane.b32.xlu0 %v2112, 111
      %v2127 = vpop.permute.xlu0 %2126
      %2128 = vrot.lane.b32.xlu0 %v2113, 111
      %v2129 = vpop.permute.xlu0 %2128
      %2130 = vrot.lane.b32.xlu0 %v2114, 111
      %v2131 = vpop.permute.xlu0 %2130
      %2132 = vrot.lane.b32.xlu0 %v2115, 111
      %v2133 = vpop.permute.xlu0 %2132
      %vm2134 = vcmask 908288
      %v2135 = vsel %vm2134, %v2123, %v2125
      %v2136 = vsel %vm2134, %v2125, %v2127
      %v2137 = vsel %vm2134, %v2129, %v2131
      %v2138 = vsel %vm2134, %v2131, %v2133
      %v2143 = vadd.f32 %v2096, %v2135
      %v2144 = vadd.f32 %v2097, %v2136
      %v2145 = vadd.f32 %v2098, %v2137
      %v2146 = vadd.f32 %v2099, %v2138
      %2147 = vrot.lane.b32.xlu0 %v1878, 18
      %v2148 = vpop.permute.xlu0 %2147
      %2149 = vrot.lane.b32.xlu0 %v1879, 18
      %v2150 = vpop.permute.xlu0 %2149
      %vm2151 = vcmask 146432
      %v2152 = vsel %vm2151, %v2148, %v2150
      %v2156 = vmul.f32 %v1920, %v2148
      %v2157 = vmul.f32 %v1921, %v2152
      %v2158 = vmul.f32 %v1922, %v2150
      %v2159 = vmul.f32 %v1923, %v2148
      %v2160 = vmul.f32 %v1924, %v2152
      %v2161 = vmul.f32 %v1925, %v2150
      %2163 = vset.pattern.permute.xlu0 0
      %2164 = vperm.xlu0 %2163, %v1890
      %v2165 = vpop.permute.xlu0 %2164
      %2168 = vset.pattern.permute.xlu0 0
      %2169 = vperm.xlu0 %2168, %v1891
      %v2170 = vpop.permute.xlu0 %2169
      %v2172 = vmul.f32 %v2165, %v2156
      %v2173 = vmul.f32 %v2165, %v2157
      %v2174 = vmul.f32 %v2165, %v2158
      %v2175 = vmul.f32 %v2170, %v2159
      %v2176 = vmul.f32 %v2170, %v2160
      %v2177 = vmul.f32 %v2170, %v2161
      %2184 = vrot.lane.b32.xlu0 %v2172, 110
      %v2185 = vpop.permute.xlu0 %2184
      %2186 = vrot.lane.b32.xlu0 %v2173, 110
      %v2187 = vpop.permute.xlu0 %2186
      %2188 = vrot.lane.b32.xlu0 %v2174, 110
      %v2189 = vpop.permute.xlu0 %2188
      %2190 = vrot.lane.b32.xlu0 %v2175, 110
      %v2191 = vpop.permute.xlu0 %2190
      %2192 = vrot.lane.b32.xlu0 %v2176, 110
      %v2193 = vpop.permute.xlu0 %2192
      %2194 = vrot.lane.b32.xlu0 %v2177, 110
      %v2195 = vpop.permute.xlu0 %2194
      %vm2196 = vcmask 900096
      %v2197 = vsel %vm2196, %v2185, %v2187
      %v2198 = vsel %vm2196, %v2187, %v2189
      %v2199 = vsel %vm2196, %v2191, %v2193
      %v2200 = vsel %vm2196, %v2193, %v2195
      %v2205 = vadd.f32 %v2143, %v2197
      %v2206 = vadd.f32 %v2144, %v2198
      %v2207 = vadd.f32 %v2145, %v2199
      %v2208 = vadd.f32 %v2146, %v2200
      %2209 = vrot.lane.b32.xlu0 %v1872, 32
      %v2210 = vpop.permute.xlu0 %2209
      %2211 = vrot.lane.b32.xlu0 %v1873, 32
      %v2212 = vpop.permute.xlu0 %2211
      %vm2213 = vcmask 261120
      %v2214 = vsel %vm2213, %v2210, %v2212
      %v2218 = vmul.f32 %v1920, %v2210
      %v2219 = vmul.f32 %v1921, %v2214
      %v2220 = vmul.f32 %v1922, %v2212
      %v2221 = vmul.f32 %v1923, %v2210
      %v2222 = vmul.f32 %v1924, %v2214
      %v2223 = vmul.f32 %v1925, %v2212
      %2225 = vset.pattern.permute.xlu0 0
      %2226 = vperm.xlu0 %2225, %v1892
      %v2227 = vpop.permute.xlu0 %2226
      %2230 = vset.pattern.permute.xlu0 0
      %2231 = vperm.xlu0 %2230, %v1893
      %v2232 = vpop.permute.xlu0 %2231
      %v2234 = vmul.f32 %v2227, %v2218
      %v2235 = vmul.f32 %v2227, %v2219
      %v2236 = vmul.f32 %v2227, %v2220
      %v2237 = vmul.f32 %v2232, %v2221
      %v2238 = vmul.f32 %v2232, %v2222
      %v2239 = vmul.f32 %v2232, %v2223
      %2246 = vrot.lane.b32.xlu0 %v2234, 96
      %v2247 = vpop.permute.xlu0 %2246
      %2248 = vrot.lane.b32.xlu0 %v2235, 96
      %v2249 = vpop.permute.xlu0 %2248
      %2250 = vrot.lane.b32.xlu0 %v2236, 96
      %v2251 = vpop.permute.xlu0 %2250
      %2252 = vrot.lane.b32.xlu0 %v2237, 96
      %v2253 = vpop.permute.xlu0 %2252
      %2254 = vrot.lane.b32.xlu0 %v2238, 96
      %v2255 = vpop.permute.xlu0 %2254
      %2256 = vrot.lane.b32.xlu0 %v2239, 96
      %v2257 = vpop.permute.xlu0 %2256
      %vm2258 = vcmask 785408
      %v2259 = vsel %vm2258, %v2247, %v2249
      %v2260 = vsel %vm2258, %v2249, %v2251
      %v2261 = vsel %vm2258, %v2253, %v2255
      %v2262 = vsel %vm2258, %v2255, %v2257
      %v2267 = vadd.f32 %v2205, %v2259
      %v2268 = vadd.f32 %v2206, %v2260
      %v2269 = vadd.f32 %v2207, %v2261
      %v2270 = vadd.f32 %v2208, %v2262
      %2272 = vset.pattern.permute.xlu0 0
      %2273 = vperm.xlu0 %2272, %v1894
      %v2274 = vpop.permute.xlu0 %2273
      %2277 = vset.pattern.permute.xlu0 0
      %2278 = vperm.xlu0 %2277, %v1895
      %v2279 = vpop.permute.xlu0 %2278
      %v2281 = vmul.f32 %v2274, %v1920
      %v2282 = vmul.f32 %v2274, %v1921
      %v2283 = vmul.f32 %v2274, %v1922
      %v2284 = vmul.f32 %v2279, %v1923
      %v2285 = vmul.f32 %v2279, %v1924
      %v2286 = vmul.f32 %v2279, %v1925
      %2293 = vrot.lane.b32.xlu0 %v2281, 95
      %v2294 = vpop.permute.xlu0 %2293
      %2295 = vrot.lane.b32.xlu0 %v2282, 95
      %v2296 = vpop.permute.xlu0 %2295
      %2297 = vrot.lane.b32.xlu0 %v2283, 95
      %v2298 = vpop.permute.xlu0 %2297
      %2299 = vrot.lane.b32.xlu0 %v2284, 95
      %v2300 = vpop.permute.xlu0 %2299
      %2301 = vrot.lane.b32.xlu0 %v2285, 95
      %v2302 = vpop.permute.xlu0 %2301
      %2303 = vrot.lane.b32.xlu0 %v2286, 95
      %v2304 = vpop.permute.xlu0 %2303
      %vm2305 = vcmask 777216
      %v2306 = vsel %vm2305, %v2294, %v2296
      %v2307 = vsel %vm2305, %v2296, %v2298
      %v2308 = vsel %vm2305, %v2300, %v2302
      %v2309 = vsel %vm2305, %v2302, %v2304
      %v2314 = vadd.f32 %v2267, %v2306
      %v2315 = vadd.f32 %v2268, %v2307
      %v2316 = vadd.f32 %v2269, %v2308
      %v2317 = vadd.f32 %v2270, %v2309
      %2318 = vrot.lane.b32.xlu0 %v1878, 34
      %v2319 = vpop.permute.xlu0 %2318
      %2320 = vrot.lane.b32.xlu0 %v1879, 34
      %v2321 = vpop.permute.xlu0 %2320
      %vm2322 = vcmask 277504
      %v2323 = vsel %vm2322, %v2319, %v2321
      %v2327 = vmul.f32 %v1920, %v2319
      %v2328 = vmul.f32 %v1921, %v2323
      %v2329 = vmul.f32 %v1922, %v2321
      %v2330 = vmul.f32 %v1923, %v2319
      %v2331 = vmul.f32 %v1924, %v2323
      %v2332 = vmul.f32 %v1925, %v2321
      %2334 = vset.pattern.permute.xlu0 0
      %2335 = vperm.xlu0 %2334, %v1896
      %v2336 = vpop.permute.xlu0 %2335
      %2339 = vset.pattern.permute.xlu0 0
      %2340 = vperm.xlu0 %2339, %v1897
      %v2341 = vpop.permute.xlu0 %2340
      %v2343 = vmul.f32 %v2336, %v2327
      %v2344 = vmul.f32 %v2336, %v2328
      %v2345 = vmul.f32 %v2336, %v2329
      %v2346 = vmul.f32 %v2341, %v2330
      %v2347 = vmul.f32 %v2341, %v2331
      %v2348 = vmul.f32 %v2341, %v2332
      %2355 = vrot.lane.b32.xlu0 %v2343, 94
      %v2356 = vpop.permute.xlu0 %2355
      %2357 = vrot.lane.b32.xlu0 %v2344, 94
      %v2358 = vpop.permute.xlu0 %2357
      %2359 = vrot.lane.b32.xlu0 %v2345, 94
      %v2360 = vpop.permute.xlu0 %2359
      %2361 = vrot.lane.b32.xlu0 %v2346, 94
      %v2362 = vpop.permute.xlu0 %2361
      %2363 = vrot.lane.b32.xlu0 %v2347, 94
      %v2364 = vpop.permute.xlu0 %2363
      %2365 = vrot.lane.b32.xlu0 %v2348, 94
      %v2366 = vpop.permute.xlu0 %2365
      %vm2367 = vcmask 769024
      %v2368 = vsel %vm2367, %v2356, %v2358
      %v2369 = vsel %vm2367, %v2358, %v2360
      %v2370 = vsel %vm2367, %v2362, %v2364
      %v2371 = vsel %vm2367, %v2364, %v2366
      %v2376 = vadd.f32 %v2314, %v2368
      %v2377 = vadd.f32 %v2315, %v2369
      %v2378 = vadd.f32 %v2316, %v2370
      %v2379 = vadd.f32 %v2317, %v2371
      %v2380 = vld [vmem:[%s12] sm:$0xff]
      %v2381 = vld [vmem:[%s12 + $0x8] sm:$0xff]
      %2383 = vset.pattern.permute.xlu0 0
      %2384 = vperm.xlu0 %2383, %v2380
      %v2385 = vpop.permute.xlu0 %2384
      %2388 = vset.pattern.permute.xlu0 0
      %2389 = vperm.xlu0 %2388, %v2381
      %v2390 = vpop.permute.xlu0 %2389
      %v2392 = vadd.f32 %v2376, %v2385
      %v2393 = vadd.f32 %v2377, %v2385
      %v2394 = vadd.f32 %v2378, %v2390
      %v2395 = vadd.f32 %v2379, %v2390
      %v2396 = vmul.f32 %v2392, 0.1
      %v2397 = vmul.f32 %v2393, 0.1
      %v2398 = vmul.f32 %v2394, 0.1
      %v2399 = vmul.f32 %v2395, 0.1
      %v2400 = vmax.f32 %v2392, %v2396
      %v2401 = vmax.f32 %v2393, %v2397
      %v2402 = vmax.f32 %v2394, %v2398
      %v2403 = vmax.f32 %v2395, %v2399
      %v2404 = vld [vmem:[%s13] sm:$0xf]
      %v2405 = vld [vmem:[%s13 + $0x4] sm:$0xf]
      %v2406 = vld [vmem:[%s13 + $0x8] sm:$0xf]
      %v2407 = vld [vmem:[%s13 + $0xc] sm:$0xf]
      %v2408 = vpack.c.bf16 %v2402, %v2400
      %v2409 = vpack.c.bf16 %v2403, %v2401
      %v2410 = vld [vmem:[%s14] sm:$0xff]
      %v2411 = vld [vmem:[%s14 + $0x8] sm:$0xff]
      %v2412 = vld [vmem:[%s14 + $0x10] sm:$0xff]
      %v2413 = vld [vmem:[%s14 + $0x18] sm:$0xff]
      %2415 = vset.pattern.permute.xlu0 0
      %2416 = vperm.xlu0 %2415, %v2410
      %v2417 = vpop.permute.xlu0 %2416
      %2420 = vset.pattern.permute.xlu0 0
      %2421 = vperm.xlu0 %2420, %v2411
      %v2422 = vpop.permute.xlu0 %2421
      %2425 = vset.pattern.permute.xlu0 0
      %2426 = vperm.xlu0 %2425, %v2412
      %v2427 = vpop.permute.xlu0 %2426
      %2430 = vset.pattern.permute.xlu0 0
      %2431 = vperm.xlu0 %2430, %v2413
      %v2432 = vpop.permute.xlu0 %2431
      %v2438 = vunpack.c.l.b16 %v2404
      %v2439 = vunpack.c.l.b16 %v2405
      %v2440 = vunpack.c.l.b16 %v2406
      %v2441 = vunpack.c.l.b16 %v2407
      %v2442 = vpack.c.b16 %v2439, %v2438
      %v2443 = vpack.c.b16 %v2441, %v2440
      %v2445 = vsel %vm977, %v2442, 0
      %v2448 = vsel %vm977, %v2443, 0
      %2450 = vmatpush.bf16.msra.mxu0 0
      %2451 = vmatpush.bf16.msra.mxu0 0
      %2452 = vmatpush.bf16.msra.mxu0 0
      %2453 = vmatpush.bf16.msra.mxu0 0
      %2454 = vmatpush.bf16.msra.mxu0 0
      %2455 = vmatpush.bf16.msra.mxu0 0
      %2456 = vmatpush.bf16.msra.mxu0 0
      %2457 = vmatpush.bf16.msra.mxu0 %v2408
      %2458 = vmatmul.bf16.gmra.mxu0 %v2445
      %v2459 = vpop.f32.mrf.mxu0
      %v2460 = vadd.f32 %v2417, %v2459
      %v2461 = vpop.f32.mrf.mxu0
      %v2462 = vadd.f32 %v2422, %v2461
      %2463 = vmatmul.bf16.gmra.mxu0 %v2448
      %v2464 = vpop.f32.mrf.mxu0
      %v2465 = vadd.f32 %v2427, %v2464
      %v2466 = vpop.f32.mrf.mxu0
      %v2467 = vadd.f32 %v2432, %v2466
      %2468 = vdwg.mxu0
      %2469 = vmatpush.bf16.msra.mxu0 0
      %2470 = vmatpush.bf16.msra.mxu0 0
      %2471 = vmatpush.bf16.msra.mxu0 0
      %2472 = vmatpush.bf16.msra.mxu0 0
      %2473 = vmatpush.bf16.msra.mxu0 0
      %2474 = vmatpush.bf16.msra.mxu0 0
      %2475 = vmatpush.bf16.msra.mxu0 0
      %2476 = vmatpush.bf16.msra.mxu0 %v2409
      %2477 = vmatmul.bf16.gmra.mxu0 %v2445
      %v2478 = vpop.f32.mrf.mxu0
      %v2479 = vadd.f32 %v2417, %v2478
      %v2480 = vpop.f32.mrf.mxu0
      %v2481 = vadd.f32 %v2422, %v2480
      %2482 = vmatmul.bf16.gmra.mxu0 %v2448
      %v2483 = vpop.f32.mrf.mxu0
      %v2484 = vadd.f32 %v2427, %v2483
      %v2485 = vpop.f32.mrf.mxu0
      %v2486 = vadd.f32 %v2432, %v2485
      %2487 = vdwg.mxu0
      %v2488 = vmul.f32 %v2460, 0.1
      %v2489 = vmul.f32 %v2479, 0.1
      %v2490 = vmul.f32 %v2462, 0.1
      %v2491 = vmul.f32 %v2481, 0.1
      %v2492 = vmul.f32 %v2465, 0.1
      %v2493 = vmul.f32 %v2484, 0.1
      %v2494 = vmul.f32 %v2467, 0.1
      %v2495 = vmul.f32 %v2486, 0.1
      %v2496 = vmax.f32 %v2460, %v2488
      %v2497 = vmax.f32 %v2479, %v2489
      %v2498 = vmax.f32 %v2462, %v2490
      %v2499 = vmax.f32 %v2481, %v2491
      %v2500 = vmax.f32 %v2465, %v2492
      %v2501 = vmax.f32 %v2484, %v2493
      %v2502 = vmax.f32 %v2467, %v2494
      %v2503 = vmax.f32 %v2486, %v2495
      %2504 = vst [vmem:[#allocation7] sm:$0xff] %v2496
      %2505 = vst [vmem:[#allocation7 + $0x8] sm:$0xff] %v2497
      %2506 = vst [vmem:[#allocation7 + $0x10] sm:$0xff] %v2498
      %2507 = vst [vmem:[#allocation7 + $0x18] sm:$0xff] %v2499
      %2508 = vst [vmem:[#allocation7 + $0x20] sm:$0xff] %v2500
      %2509 = vst [vmem:[#allocation7 + $0x28] sm:$0xff] %v2501
      %2510 = vst [vmem:[#allocation7 + $0x30] sm:$0xff] %v2502
      %2511 = vst [vmem:[#allocation7 + $0x38] sm:$0xff] %v2503
      %v2512 = vld [vmem:[%s16] sm:$0xf]
      %v2513 = vld [vmem:[#allocation6] sm:$0xff]
      %v2514 = vld [vmem:[#allocation6 + $0x8] sm:$0xff]
      %v2515 = vld [vmem:[#allocation6 + $0x10] sm:$0xff]
      %v2516 = vld [vmem:[#allocation6 + $0x18] sm:$0xff]
      %v2517 = vpack.c.bf16 %v2514, %v2513
      %v2518 = vpack.c.bf16 %v2516, %v2515
      %v2520 = vsel %vm1472, %v2517, 0
      %v2523 = vsel %vm1472, %v2518, 0
      %vm2525 = vcmask 1043456
      %v2527 = vsel %vm2525, %v2512, 0
      %2529 = vmatpush.bf16.msra.mxu0 0
      %2530 = vmatpush.bf16.msra.mxu0 0
      %2531 = vmatpush.bf16.msra.mxu0 0
      %2532 = vmatpush.bf16.msra.mxu0 0
      %2533 = vmatpush.bf16.msra.mxu0 0
      %2534 = vmatpush.bf16.msra.mxu0 0
      %2535 = vmatpush.bf16.msra.mxu0 0
      %2536 = vmatpush.bf16.msra.mxu0 %v2527
      %2537 = vmatmul.bf16.gmra.mxu0 %v2520
      %v2538 = vpop.f32.mrf.mxu0
      %v2539 = vadd.f32 0.0, %v2538
      %v2540 = vpop.f32.mrf.mxu0
      %v2541 = vadd.f32 0.0, %v2540
      %2542 = vmatmul.bf16.gmra.mxu0 %v2523
      %v2543 = vpop.f32.mrf.mxu0
      %v2544 = vadd.f32 0.0, %v2543
      %v2545 = vpop.f32.mrf.mxu0
      %v2546 = vadd.f32 0.0, %v2545
      %2547 = vdwg.mxu0
      %2550 = vrot.lane.b32.xlu0 %v2517, 120
      %v2551 = vpop.permute.xlu0 %2550
      %2552 = vrot.lane.b32.xlu0 %v2518, 120
      %v2553 = vpop.permute.xlu0 %2552
      %v2555 = vsel %vm1472, %v2551, 0
      %v2558 = vsel %vm1472, %v2553, 0
      %2560 = vmatpush.bf16.msra.mxu0 0
      %2561 = vmatpush.bf16.msra.mxu0 0
      %2562 = vmatpush.bf16.msra.mxu0 0
      %2563 = vmatpush.bf16.msra.mxu0 0
      %2564 = vmatpush.bf16.msra.mxu0 0
      %2565 = vmatpush.bf16.msra.mxu0 0
      %2566 = vmatpush.bf16.msra.mxu0 0
      %2567 = vmatpush.bf16.msra.mxu0 %v2527
      %2568 = vmatmul.bf16.gmra.mxu0 %v2555
      %v2569 = vpop.f32.mrf.mxu0
      %v2570 = vadd.f32 0.0, %v2569
      %v2571 = vpop.f32.mrf.mxu0
      %v2572 = vadd.f32 0.0, %v2571
      %2573 = vmatmul.bf16.gmra.mxu0 %v2558
      %v2574 = vpop.f32.mrf.mxu0
      %v2575 = vadd.f32 0.0, %v2574
      %v2576 = vpop.f32.mrf.mxu0
      %v2577 = vadd.f32 0.0, %v2576
      %2578 = vdwg.mxu0
      %v2579 = vld [vmem:[#allocation7] sm:$0xff]
      %v2580 = vld [vmem:[#allocation7 + $0x10] sm:$0xff]
      %v2581 = vld [vmem:[#allocation7 + $0x20] sm:$0xff]
      %v2582 = vld [vmem:[#allocation7 + $0x30] sm:$0xff]
      %v2583 = vmul.f32 %v2539, 0.25
      %v2584 = vmul.f32 %v2541, 0.25
      %v2585 = vmul.f32 %v2544, 0.25
      %v2586 = vmul.f32 %v2546, 0.25
      %v2587 = vmul.f32 %v2539, 0.75
      %v2588 = vmul.f32 %v2541, 0.75
      %v2589 = vmul.f32 %v2544, 0.75
      %v2590 = vmul.f32 %v2546, 0.75
      %v2591 = vadd.f32 %v2583, %v2587
      %v2592 = vadd.f32 %v2584, %v2588
      %v2593 = vadd.f32 %v2585, %v2589
      %v2594 = vadd.f32 %v2586, %v2590
      %v2595 = vadd.f32 %v2579, %v2591
      %v2596 = vadd.f32 %v2580, %v2592
      %v2597 = vadd.f32 %v2581, %v2593
      %v2598 = vadd.f32 %v2582, %v2594
      %2599 = vst.msk [vmem:[#allocation7] sm:$0xff] %vm977, %v2595
      %2600 = vst.msk [vmem:[#allocation7 + $0x10] sm:$0xff] %vm977, %v2596
      %2601 = vst.msk [vmem:[#allocation7 + $0x20] sm:$0xff] %vm977, %v2597
      %2602 = vst.msk [vmem:[#allocation7 + $0x30] sm:$0xff] %vm977, %v2598
      %v2603 = vld [vmem:[#allocation7] sm:$0xff]
      %v2604 = vld [vmem:[#allocation7 + $0x10] sm:$0xff]
      %v2605 = vld [vmem:[#allocation7 + $0x20] sm:$0xff]
      %v2606 = vld [vmem:[#allocation7 + $0x30] sm:$0xff]
      %v2607 = vmul.f32 %v2570, 0.25
      %v2608 = vmul.f32 %v2572, 0.25
      %v2609 = vmul.f32 %v2575, 0.25
      %v2610 = vmul.f32 %v2577, 0.25
      %v2611 = vadd.f32 %v2587, %v2607
      %v2612 = vadd.f32 %v2588, %v2608
      %v2613 = vadd.f32 %v2589, %v2609
      %v2614 = vadd.f32 %v2590, %v2610
      %2619 = vrot.lane.b32.xlu0 %v2611, 16
      %v2620 = vpop.permute.xlu0 %2619
      %2621 = vrot.lane.b32.xlu0 %v2612, 16
      %v2622 = vpop.permute.xlu0 %2621
      %2623 = vrot.lane.b32.xlu0 %v2613, 16
      %v2624 = vpop.permute.xlu0 %2623
      %2625 = vrot.lane.b32.xlu0 %v2614, 16
      %v2626 = vpop.permute.xlu0 %2625
      %v2631 = vadd.f32 %v2603, %v2620
      %v2632 = vadd.f32 %v2604, %v2622
      %v2633 = vadd.f32 %v2605, %v2624
      %v2634 = vadd.f32 %v2606, %v2626
      %vm2635 = vcmask 261248
      %2636 = vst.msk [vmem:[#allocation7] sm:$0xff] %vm2635, %v2631
      %2637 = vst.msk [vmem:[#allocation7 + $0x10] sm:$0xff] %vm2635, %v2632
      %2638 = vst.msk [vmem:[#allocation7 + $0x20] sm:$0xff] %vm2635, %v2633
      %2639 = vst.msk [vmem:[#allocation7 + $0x30] sm:$0xff] %vm2635, %v2634
      %v2640 = vld [vmem:[#allocation6] sm:$0xff]
      %v2641 = vld [vmem:[#allocation6 + $0x8] sm:$0xff]
      %v2642 = vld [vmem:[#allocation6 + $0x10] sm:$0xff]
      %v2643 = vld [vmem:[#allocation6 + $0x18] sm:$0xff]
      %v2644 = vpack.c.bf16 %v2641, %v2640
      %v2645 = vpack.c.bf16 %v2643, %v2642
      %2648 = vrot.lane.b32.xlu0 %v2644, 112
      %v2649 = vpop.permute.xlu0 %2648
      %2650 = vrot.lane.b32.xlu0 %v2645, 112
      %v2651 = vpop.permute.xlu0 %2650
      %v2653 = vsel %vm1472, %v2649, 0
      %v2656 = vsel %vm1472, %v2651, 0
      %2658 = vmatpush.bf16.msra.mxu0 0
      %2659 = vmatpush.bf16.msra.mxu0 0
      %2660 = vmatpush.bf16.msra.mxu0 0
      %2661 = vmatpush.bf16.msra.mxu0 0
      %2662 = vmatpush.bf16.msra.mxu0 0
      %2663 = vmatpush.bf16.msra.mxu0 0
      %2664 = vmatpush.bf16.msra.mxu0 0
      %2665 = vmatpush.bf16.msra.mxu0 %v2527
      %2666 = vmatmul.bf16.gmra.mxu0 %v2653
      %v2667 = vpop.f32.mrf.mxu0
      %v2668 = vadd.f32 0.0, %v2667
      %v2669 = vpop.f32.mrf.mxu0
      %v2670 = vadd.f32 0.0, %v2669
      %2671 = vmatmul.bf16.gmra.mxu0 %v2656
      %v2672 = vpop.f32.mrf.mxu0
      %v2673 = vadd.f32 0.0, %v2672
      %v2674 = vpop.f32.mrf.mxu0
      %v2675 = vadd.f32 0.0, %v2674
      %2676 = vdwg.mxu0
      %v2677 = vld [vmem:[#allocation7] sm:$0xff]
      %v2678 = vld [vmem:[#allocation7 + $0x10] sm:$0xff]
      %v2679 = vld [vmem:[#allocation7 + $0x20] sm:$0xff]
      %v2680 = vld [vmem:[#allocation7 + $0x30] sm:$0xff]
      %v2681 = vmul.f32 %v2570, 0.75
      %v2682 = vmul.f32 %v2572, 0.75
      %v2683 = vmul.f32 %v2575, 0.75
      %v2684 = vmul.f32 %v2577, 0.75
      %v2685 = vadd.f32 %v2583, %v2681
      %v2686 = vadd.f32 %v2584, %v2682
      %v2687 = vadd.f32 %v2585, %v2683
      %v2688 = vadd.f32 %v2586, %v2684
      %2693 = vrot.lane.b32.xlu0 %v2685, 32
      %v2694 = vpop.permute.xlu0 %2693
      %2695 = vrot.lane.b32.xlu0 %v2686, 32
      %v2696 = vpop.permute.xlu0 %2695
      %2697 = vrot.lane.b32.xlu0 %v2687, 32
      %v2698 = vpop.permute.xlu0 %2697
      %2699 = vrot.lane.b32.xlu0 %v2688, 32
      %v2700 = vpop.permute.xlu0 %2699
      %v2705 = vadd.f32 %v2677, %v2694
      %v2706 = vadd.f32 %v2678, %v2696
      %v2707 = vadd.f32 %v2679, %v2698
      %v2708 = vadd.f32 %v2680, %v2700
      %vm2709 = vcmask 392448
      %2710 = vst.msk [vmem:[#allocation7] sm:$0xff] %vm2709, %v2705
      %2711 = vst.msk [vmem:[#allocation7 + $0x10] sm:$0xff] %vm2709, %v2706
      %2712 = vst.msk [vmem:[#allocation7 + $0x20] sm:$0xff] %vm2709, %v2707
      %2713 = vst.msk [vmem:[#allocation7 + $0x30] sm:$0xff] %vm2709, %v2708
      %v2714 = vld [vmem:[#allocation7] sm:$0xff]
      %v2715 = vld [vmem:[#allocation7 + $0x10] sm:$0xff]
      %v2716 = vld [vmem:[#allocation7 + $0x20] sm:$0xff]
      %v2717 = vld [vmem:[#allocation7 + $0x30] sm:$0xff]
      %v2718 = vmul.f32 %v2668, 0.25
      %v2719 = vmul.f32 %v2670, 0.25
      %v2720 = vmul.f32 %v2673, 0.25
      %v2721 = vmul.f32 %v2675, 0.25
      %v2722 = vadd.f32 %v2681, %v2718
      %v2723 = vadd.f32 %v2682, %v2719
      %v2724 = vadd.f32 %v2683, %v2720
      %v2725 = vadd.f32 %v2684, %v2721
      %2730 = vrot.lane.b32.xlu0 %v2722, 48
      %v2731 = vpop.permute.xlu0 %2730
      %2732 = vrot.lane.b32.xlu0 %v2723, 48
      %v2733 = vpop.permute.xlu0 %2732
      %2734 = vrot.lane.b32.xlu0 %v2724, 48
      %v2735 = vpop.permute.xlu0 %2734
      %2736 = vrot.lane.b32.xlu0 %v2725, 48
      %v2737 = vpop.permute.xlu0 %2736
      %v2742 = vadd.f32 %v2714, %v2731
      %v2743 = vadd.f32 %v2715, %v2733
      %v2744 = vadd.f32 %v2716, %v2735
      %v2745 = vadd.f32 %v2717, %v2737
      %vm2746 = vcmask 523648
      %2747 = vst.msk [vmem:[#allocation7] sm:$0xff] %vm2746, %v2742
      %2748 = vst.msk [vmem:[#allocation7 + $0x10] sm:$0xff] %vm2746, %v2743
      %2749 = vst.msk [vmem:[#allocation7 + $0x20] sm:$0xff] %vm2746, %v2744
      %2750 = vst.msk [vmem:[#allocation7 + $0x30] sm:$0xff] %vm2746, %v2745
      %v2751 = vld [vmem:[#allocation6] sm:$0xff]
      %v2752 = vld [vmem:[#allocation6 + $0x8] sm:$0xff]
      %v2753 = vld [vmem:[#allocation6 + $0x10] sm:$0xff]
      %v2754 = vld [vmem:[#allocation6 + $0x18] sm:$0xff]
      %v2755 = vpack.c.bf16 %v2752, %v2751
      %v2756 = vpack.c.bf16 %v2754, %v2753
      %2759 = vrot.lane.b32.xlu0 %v2755, 104
      %v2760 = vpop.permute.xlu0 %2759
      %2761 = vrot.lane.b32.xlu0 %v2756, 104
      %v2762 = vpop.permute.xlu0 %2761
      %v2764 = vsel %vm1472, %v2760, 0
      %v2767 = vsel %vm1472, %v2762, 0
      %2769 = vmatpush.bf16.msra.mxu0 0
      %2770 = vmatpush.bf16.msra.mxu0 0
      %2771 = vmatpush.bf16.msra.mxu0 0
      %2772 = vmatpush.bf16.msra.mxu0 0
      %2773 = vmatpush.bf16.msra.mxu0 0
      %2774 = vmatpush.bf16.msra.mxu0 0
      %2775 = vmatpush.bf16.msra.mxu0 0
      %2776 = vmatpush.bf16.msra.mxu0 %v2527
      %2777 = vmatmul.bf16.gmra.mxu0 %v2764
      %v2778 = vpop.f32.mrf.mxu0
      %v2779 = vadd.f32 0.0, %v2778
      %v2780 = vpop.f32.mrf.mxu0
      %v2781 = vadd.f32 0.0, %v2780
      %2782 = vmatmul.bf16.gmra.mxu0 %v2767
      %v2783 = vpop.f32.mrf.mxu0
      %v2784 = vadd.f32 0.0, %v2783
      %v2785 = vpop.f32.mrf.mxu0
      %v2786 = vadd.f32 0.0, %v2785
      %2787 = vdwg.mxu0
      %v2788 = vld [vmem:[#allocation7] sm:$0xff]
      %v2789 = vld [vmem:[#allocation7 + $0x10] sm:$0xff]
      %v2790 = vld [vmem:[#allocation7 + $0x20] sm:$0xff]
      %v2791 = vld [vmem:[#allocation7 + $0x30] sm:$0xff]
      %v2792 = vmul.f32 %v2668, 0.75
      %v2793 = vmul.f32 %v2670, 0.75
      %v2794 = vmul.f32 %v2673, 0.75
      %v2795 = vmul.f32 %v2675, 0.75
      %v2796 = vadd.f32 %v2607, %v2792
      %v2797 = vadd.f32 %v2608, %v2793
      %v2798 = vadd.f32 %v2609, %v2794
      %v2799 = vadd.f32 %v2610, %v2795
      %2804 = vrot.lane.b32.xlu0 %v2796, 64
      %v2805 = vpop.permute.xlu0 %2804
      %2806 = vrot.lane.b32.xlu0 %v2797, 64
      %v2807 = vpop.permute.xlu0 %2806
      %2808 = vrot.lane.b32.xlu0 %v2798, 64
      %v2809 = vpop.permute.xlu0 %2808
      %2810 = vrot.lane.b32.xlu0 %v2799, 64
      %v2811 = vpop.permute.xlu0 %2810
      %v2816 = vadd.f32 %v2788, %v2805
      %v2817 = vadd.f32 %v2789, %v2807
      %v2818 = vadd.f32 %v2790, %v2809
      %v2819 = vadd.f32 %v2791, %v2811
      %vm2820 = vcmask 654848
      %2821 = vst.msk [vmem:[#allocation7] sm:$0xff] %vm2820, %v2816
      %2822 = vst.msk [vmem:[#allocation7 + $0x10] sm:$0xff] %vm2820, %v2817
      %2823 = vst.msk [vmem:[#allocation7 + $0x20] sm:$0xff] %vm2820, %v2818
      %2824 = vst.msk [vmem:[#allocation7 + $0x30] sm:$0xff] %vm2820, %v2819
      %v2825 = vld [vmem:[#allocation7] sm:$0xff]
      %v2826 = vld [vmem:[#allocation7 + $0x10] sm:$0xff]
      %v2827 = vld [vmem:[#allocation7 + $0x20] sm:$0xff]
      %v2828 = vld [vmem:[#allocation7 + $0x30] sm:$0xff]
      %v2829 = vmul.f32 %v2779, 0.25
      %v2830 = vmul.f32 %v2781, 0.25
      %v2831 = vmul.f32 %v2784, 0.25
      %v2832 = vmul.f32 %v2786, 0.25
      %v2833 = vadd.f32 %v2792, %v2829
      %v2834 = vadd.f32 %v2793, %v2830
      %v2835 = vadd.f32 %v2794, %v2831
      %v2836 = vadd.f32 %v2795, %v2832
      %2841 = vrot.lane.b32.xlu0 %v2833, 80
      %v2842 = vpop.permute.xlu0 %2841
      %2843 = vrot.lane.b32.xlu0 %v2834, 80
      %v2844 = vpop.permute.xlu0 %2843
      %2845 = vrot.lane.b32.xlu0 %v2835, 80
      %v2846 = vpop.permute.xlu0 %2845
      %2847 = vrot.lane.b32.xlu0 %v2836, 80
      %v2848 = vpop.permute.xlu0 %2847
      %v2853 = vadd.f32 %v2825, %v2842
      %v2854 = vadd.f32 %v2826, %v2844
      %v2855 = vadd.f32 %v2827, %v2846
      %v2856 = vadd.f32 %v2828, %v2848
      %vm2857 = vcmask 786048
      %2858 = vst.msk [vmem:[#allocation7] sm:$0xff] %vm2857, %v2853
      %2859 = vst.msk [vmem:[#allocation7 + $0x10] sm:$0xff] %vm2857, %v2854
      %2860 = vst.msk [vmem:[#allocation7 + $0x20] sm:$0xff] %vm2857, %v2855
      %2861 = vst.msk [vmem:[#allocation7 + $0x30] sm:$0xff] %vm2857, %v2856
      %v2862 = vld [vmem:[#allocation6] sm:$0xff]
      %v2863 = vld [vmem:[#allocation6 + $0x8] sm:$0xff]
      %v2864 = vld [vmem:[#allocation6 + $0x10] sm:$0xff]
      %v2865 = vld [vmem:[#allocation6 + $0x18] sm:$0xff]
      %v2866 = vpack.c.bf16 %v2863, %v2862
      %v2867 = vpack.c.bf16 %v2865, %v2864
      %2870 = vrot.lane.b32.xlu0 %v2866, 96
      %v2871 = vpop.permute.xlu0 %2870
      %2872 = vrot.lane.b32.xlu0 %v2867, 96
      %v2873 = vpop.permute.xlu0 %2872
      %v2875 = vsel %vm1472, %v2871, 0
      %v2878 = vsel %vm1472, %v2873, 0
      %2880 = vmatpush.bf16.msra.mxu0 0
      %2881 = vmatpush.bf16.msra.mxu0 0
      %2882 = vmatpush.bf16.msra.mxu0 0
      %2883 = vmatpush.bf16.msra.mxu0 0
      %2884 = vmatpush.bf16.msra.mxu0 0
      %2885 = vmatpush.bf16.msra.mxu0 0
      %2886 = vmatpush.bf16.msra.mxu0 0
      %2887 = vmatpush.bf16.msra.mxu0 %v2527
      %2888 = vmatmul.bf16.gmra.mxu0 %v2875
      %v2889 = vpop.f32.mrf.mxu0
      %v2890 = vadd.f32 0.0, %v2889
      %v2891 = vpop.f32.mrf.mxu0
      %v2892 = vadd.f32 0.0, %v2891
      %2893 = vmatmul.bf16.gmra.mxu0 %v2878
      %v2894 = vpop.f32.mrf.mxu0
      %v2895 = vadd.f32 0.0, %v2894
      %v2896 = vpop.f32.mrf.mxu0
      %v2897 = vadd.f32 0.0, %v2896
      %2898 = vdwg.mxu0
      %v2899 = vld [vmem:[#allocation7] sm:$0xff]
      %v2900 = vld [vmem:[#allocation7 + $0x10] sm:$0xff]
      %v2901 = vld [vmem:[#allocation7 + $0x20] sm:$0xff]
      %v2902 = vld [vmem:[#allocation7 + $0x30] sm:$0xff]
      %v2903 = vmul.f32 %v2779, 0.75
      %v2904 = vmul.f32 %v2781, 0.75
      %v2905 = vmul.f32 %v2784, 0.75
      %v2906 = vmul.f32 %v2786, 0.75
      %v2907 = vadd.f32 %v2718, %v2903
      %v2908 = vadd.f32 %v2719, %v2904
      %v2909 = vadd.f32 %v2720, %v2905
      %v2910 = vadd.f32 %v2721, %v2906
      %2915 = vrot.lane.b32.xlu0 %v2907, 96
      %v2916 = vpop.permute.xlu0 %2915
      %2917 = vrot.lane.b32.xlu0 %v2908, 96
      %v2918 = vpop.permute.xlu0 %2917
      %2919 = vrot.lane.b32.xlu0 %v2909, 96
      %v2920 = vpop.permute.xlu0 %2919
      %2921 = vrot.lane.b32.xlu0 %v2910, 96
      %v2922 = vpop.permute.xlu0 %2921
      %v2927 = vadd.f32 %v2899, %v2916
      %v2928 = vadd.f32 %v2900, %v2918
      %v2929 = vadd.f32 %v2901, %v2920
      %v2930 = vadd.f32 %v2902, %v2922
      %vm2931 = vcmask 917248
      %2932 = vst.msk [vmem:[#allocation7] sm:$0xff] %vm2931, %v2927
      %2933 = vst.msk [vmem:[#allocation7 + $0x10] sm:$0xff] %vm2931, %v2928
      %2934 = vst.msk [vmem:[#allocation7 + $0x20] sm:$0xff] %vm2931, %v2929
      %2935 = vst.msk [vmem:[#allocation7 + $0x30] sm:$0xff] %vm2931, %v2930
      %v2936 = vld [vmem:[#allocation7] sm:$0xff]
      %v2937 = vld [vmem:[#allocation7 + $0x10] sm:$0xff]
      %v2938 = vld [vmem:[#allocation7 + $0x20] sm:$0xff]
      %v2939 = vld [vmem:[#allocation7 + $0x30] sm:$0xff]
      %v2940 = vmul.f32 %v2890, 0.25
      %v2941 = vmul.f32 %v2892, 0.25
      %v2942 = vmul.f32 %v2895, 0.25
      %v2943 = vmul.f32 %v2897, 0.25
      %v2944 = vadd.f32 %v2903, %v2940
      %v2945 = vadd.f32 %v2904, %v2941
      %v2946 = vadd.f32 %v2905, %v2942
      %v2947 = vadd.f32 %v2906, %v2943
      %2952 = vrot.lane.b32.xlu0 %v2944, 112
      %v2953 = vpop.permute.xlu0 %2952
      %2954 = vrot.lane.b32.xlu0 %v2945, 112
      %v2955 = vpop.permute.xlu0 %2954
      %2956 = vrot.lane.b32.xlu0 %v2946, 112
      %v2957 = vpop.permute.xlu0 %2956
      %2958 = vrot.lane.b32.xlu0 %v2947, 112
      %v2959 = vpop.permute.xlu0 %2958
      %v2964 = vadd.f32 %v2936, %v2953
      %v2965 = vadd.f32 %v2937, %v2955
      %v2966 = vadd.f32 %v2938, %v2957
      %v2967 = vadd.f32 %v2939, %v2959
      %vm2968 = vcmask 1048448
      %2969 = vst.msk [vmem:[#allocation7] sm:$0xff] %vm2968, %v2964
      %2970 = vst.msk [vmem:[#allocation7 + $0x10] sm:$0xff] %vm2968, %v2965
      %2971 = vst.msk [vmem:[#allocation7 + $0x20] sm:$0xff] %vm2968, %v2966
      %2972 = vst.msk [vmem:[#allocation7 + $0x30] sm:$0xff] %vm2968, %v2967
      %v2973 = vld [vmem:[#allocation6] sm:$0xff]
      %v2974 = vld [vmem:[#allocation6 + $0x8] sm:$0xff]
      %v2975 = vld [vmem:[#allocation6 + $0x10] sm:$0xff]
      %v2976 = vld [vmem:[#allocation6 + $0x18] sm:$0xff]
      %v2977 = vpack.c.bf16 %v2974, %v2973
      %v2978 = vpack.c.bf16 %v2976, %v2975
      %2981 = vrot.lane.b32.xlu0 %v2977, 88
      %v2982 = vpop.permute.xlu0 %2981
      %2983 = vrot.lane.b32.xlu0 %v2978, 88
      %v2984 = vpop.permute.xlu0 %2983
      %v2986 = vsel %vm1472, %v2982, 0
      %v2989 = vsel %vm1472, %v2984, 0
      %2991 = vmatpush.bf16.msra.mxu0 0
      %2992 = vmatpush.bf16.msra.mxu0 0
      %2993 = vmatpush.bf16.msra.mxu0 0
      %2994 = vmatpush.bf16.msra.mxu0 0
      %2995 = vmatpush.bf16.msra.mxu0 0
      %2996 = vmatpush.bf16.msra.mxu0 0
      %2997 = vmatpush.bf16.msra.mxu0 0
      %2998 = vmatpush.bf16.msra.mxu0 %v2527
      %2999 = vmatmul.bf16.gmra.mxu0 %v2986
      %v3000 = vpop.f32.mrf.mxu0
      %v3001 = vadd.f32 0.0, %v3000
      %v3002 = vpop.f32.mrf.mxu0
      %v3003 = vadd.f32 0.0, %v3002
      %3004 = vmatmul.bf16.gmra.mxu0 %v2989
      %v3005 = vpop.f32.mrf.mxu0
      %v3006 = vadd.f32 0.0, %v3005
      %v3007 = vpop.f32.mrf.mxu0
      %v3008 = vadd.f32 0.0, %v3007
      %3009 = vdwg.mxu0
      %v3010 = vld [vmem:[#allocation7 + $0x8] sm:$0xff]
      %v3011 = vld [vmem:[#allocation7 + $0x18] sm:$0xff]
      %v3012 = vld [vmem:[#allocation7 + $0x28] sm:$0xff]
      %v3013 = vld [vmem:[#allocation7 + $0x38] sm:$0xff]
      %v3014 = vmul.f32 %v2890, 0.75
      %v3015 = vmul.f32 %v2892, 0.75
      %v3016 = vmul.f32 %v2895, 0.75
      %v3017 = vmul.f32 %v2897, 0.75
      %v3018 = vadd.f32 %v2829, %v3014
      %v3019 = vadd.f32 %v2830, %v3015
      %v3020 = vadd.f32 %v2831, %v3016
      %v3021 = vadd.f32 %v2832, %v3017
      %v3022 = vadd.f32 %v3010, %v3018
      %v3023 = vadd.f32 %v3011, %v3019
      %v3024 = vadd.f32 %v3012, %v3020
      %v3025 = vadd.f32 %v3013, %v3021
      %3026 = vst.msk [vmem:[#allocation7 + $0x8] sm:$0xff] %vm977, %v3022
      %3027 = vst.msk [vmem:[#allocation7 + $0x18] sm:$0xff] %vm977, %v3023
      %3028 = vst.msk [vmem:[#allocation7 + $0x28] sm:$0xff] %vm977, %v3024
      %3029 = vst.msk [vmem:[#allocation7 + $0x38] sm:$0xff] %vm977, %v3025
      %v3030 = vld [vmem:[#allocation7 + $0x8] sm:$0xff]
      %v3031 = vld [vmem:[#allocation7 + $0x18] sm:$0xff]
      %v3032 = vld [vmem:[#allocation7 + $0x28] sm:$0xff]
      %v3033 = vld [vmem:[#allocation7 + $0x38] sm:$0xff]
      %v3034 = vmul.f32 %v3001, 0.25
      %v3035 = vmul.f32 %v3003, 0.25
      %v3036 = vmul.f32 %v3006, 0.25
      %v3037 = vmul.f32 %v3008, 0.25
      %v3038 = vadd.f32 %v3014, %v3034
      %v3039 = vadd.f32 %v3015, %v3035
      %v3040 = vadd.f32 %v3016, %v3036
      %v3041 = vadd.f32 %v3017, %v3037
      %3046 = vrot.lane.b32.xlu0 %v3038, 16
      %v3047 = vpop.permute.xlu0 %3046
      %3048 = vrot.lane.b32.xlu0 %v3039, 16
      %v3049 = vpop.permute.xlu0 %3048
      %3050 = vrot.lane.b32.xlu0 %v3040, 16
      %v3051 = vpop.permute.xlu0 %3050
      %3052 = vrot.lane.b32.xlu0 %v3041, 16
      %v3053 = vpop.permute.xlu0 %3052
      %v3058 = vadd.f32 %v3030, %v3047
      %v3059 = vadd.f32 %v3031, %v3049
      %v3060 = vadd.f32 %v3032, %v3051
      %v3061 = vadd.f32 %v3033, %v3053
      %3062 = vst.msk [vmem:[#allocation7 + $0x8] sm:$0xff] %vm2635, %v3058
      %3063 = vst.msk [vmem:[#allocation7 + $0x18] sm:$0xff] %vm2635, %v3059
      %3064 = vst.msk [vmem:[#allocation7 + $0x28] sm:$0xff] %vm2635, %v3060
      %3065 = vst.msk [vmem:[#allocation7 + $0x38] sm:$0xff] %vm2635, %v3061
      %v3066 = vld [vmem:[#allocation6] sm:$0xff]
      %v3067 = vld [vmem:[#allocation6 + $0x8] sm:$0xff]
      %v3068 = vld [vmem:[#allocation6 + $0x10] sm:$0xff]
      %v3069 = vld [vmem:[#allocation6 + $0x18] sm:$0xff]
      %v3070 = vpack.c.bf16 %v3067, %v3066
      %v3071 = vpack.c.bf16 %v3069, %v3068
      %3074 = vrot.lane.b32.xlu0 %v3070, 80
      %v3075 = vpop.permute.xlu0 %3074
      %3076 = vrot.lane.b32.xlu0 %v3071, 80
      %v3077 = vpop.permute.xlu0 %3076
      %v3079 = vsel %vm1472, %v3075, 0
      %v3082 = vsel %vm1472, %v3077, 0
      %3084 = vmatpush.bf16.msra.mxu0 0
      %3085 = vmatpush.bf16.msra.mxu0 0
      %3086 = vmatpush.bf16.msra.mxu0 0
      %3087 = vmatpush.bf16.msra.mxu0 0
      %3088 = vmatpush.bf16.msra.mxu0 0
      %3089 = vmatpush.bf16.msra.mxu0 0
      %3090 = vmatpush.bf16.msra.mxu0 0
      %3091 = vmatpush.bf16.msra.mxu0 %v2527
      %3092 = vmatmul.bf16.gmra.mxu0 %v3079
      %v3093 = vpop.f32.mrf.mxu0
      %v3094 = vadd.f32 0.0, %v3093
      %v3095 = vpop.f32.mrf.mxu0
      %v3096 = vadd.f32 0.0, %v3095
      %3097 = vmatmul.bf16.gmra.mxu0 %v3082
      %v3098 = vpop.f32.mrf.mxu0
      %v3099 = vadd.f32 0.0, %v3098
      %v3100 = vpop.f32.mrf.mxu0
      %v3101 = vadd.f32 0.0, %v3100
      %3102 = vdwg.mxu0
      %v3103 = vld [vmem:[#allocation7 + $0x8] sm:$0xff]
      %v3104 = vld [vmem:[#allocation7 + $0x18] sm:$0xff]
      %v3105 = vld [vmem:[#allocation7 + $0x28] sm:$0xff]
      %v3106 = vld [vmem:[#allocation7 + $0x38] sm:$0xff]
      %v3107 = vmul.f32 %v3001, 0.75
      %v3108 = vmul.f32 %v3003, 0.75
      %v3109 = vmul.f32 %v3006, 0.75
      %v3110 = vmul.f32 %v3008, 0.75
      %v3111 = vadd.f32 %v2940, %v3107
      %v3112 = vadd.f32 %v2941, %v3108
      %v3113 = vadd.f32 %v2942, %v3109
      %v3114 = vadd.f32 %v2943, %v3110
      %3119 = vrot.lane.b32.xlu0 %v3111, 32
      %v3120 = vpop.permute.xlu0 %3119
      %3121 = vrot.lane.b32.xlu0 %v3112, 32
      %v3122 = vpop.permute.xlu0 %3121
      %3123 = vrot.lane.b32.xlu0 %v3113, 32
      %v3124 = vpop.permute.xlu0 %3123
      %3125 = vrot.lane.b32.xlu0 %v3114, 32
      %v3126 = vpop.permute.xlu0 %3125
      %v3131 = vadd.f32 %v3103, %v3120
      %v3132 = vadd.f32 %v3104, %v3122
      %v3133 = vadd.f32 %v3105, %v3124
      %v3134 = vadd.f32 %v3106, %v3126
      %3135 = vst.msk [vmem:[#allocation7 + $0x8] sm:$0xff] %vm2709, %v3131
      %3136 = vst.msk [vmem:[#allocation7 + $0x18] sm:$0xff] %vm2709, %v3132
      %3137 = vst.msk [vmem:[#allocation7 + $0x28] sm:$0xff] %vm2709, %v3133
      %3138 = vst.msk [vmem:[#allocation7 + $0x38] sm:$0xff] %vm2709, %v3134
      %v3139 = vld [vmem:[#allocation7 + $0x8] sm:$0xff]
      %v3140 = vld [vmem:[#allocation7 + $0x18] sm:$0xff]
      %v3141 = vld [vmem:[#allocation7 + $0x28] sm:$0xff]
      %v3142 = vld [vmem:[#allocation7 + $0x38] sm:$0xff]
      %v3143 = vmul.f32 %v3094, 0.25
      %v3144 = vmul.f32 %v3096, 0.25
      %v3145 = vmul.f32 %v3099, 0.25
      %v3146 = vmul.f32 %v3101, 0.25
      %v3147 = vadd.f32 %v3107, %v3143
      %v3148 = vadd.f32 %v3108, %v3144
      %v3149 = vadd.f32 %v3109, %v3145
      %v3150 = vadd.f32 %v3110, %v3146
      %3155 = vrot.lane.b32.xlu0 %v3147, 48
      %v3156 = vpop.permute.xlu0 %3155
      %3157 = vrot.lane.b32.xlu0 %v3148, 48
      %v3158 = vpop.permute.xlu0 %3157
      %3159 = vrot.lane.b32.xlu0 %v3149, 48
      %v3160 = vpop.permute.xlu0 %3159
      %3161 = vrot.lane.b32.xlu0 %v3150, 48
      %v3162 = vpop.permute.xlu0 %3161
      %v3167 = vadd.f32 %v3139, %v3156
      %v3168 = vadd.f32 %v3140, %v3158
      %v3169 = vadd.f32 %v3141, %v3160
      %v3170 = vadd.f32 %v3142, %v3162
      %3171 = vst.msk [vmem:[#allocation7 + $0x8] sm:$0xff] %vm2746, %v3167
      %3172 = vst.msk [vmem:[#allocation7 + $0x18] sm:$0xff] %vm2746, %v3168
      %3173 = vst.msk [vmem:[#allocation7 + $0x28] sm:$0xff] %vm2746, %v3169
      %3174 = vst.msk [vmem:[#allocation7 + $0x38] sm:$0xff] %vm2746, %v3170
      %v3175 = vld [vmem:[#allocation6] sm:$0xff]
      %v3176 = vld [vmem:[#allocation6 + $0x8] sm:$0xff]
      %v3177 = vld [vmem:[#allocation6 + $0x10] sm:$0xff]
      %v3178 = vld [vmem:[#allocation6 + $0x18] sm:$0xff]
      %v3179 = vpack.c.bf16 %v3176, %v3175
      %v3180 = vpack.c.bf16 %v3178, %v3177
      %3183 = vrot.lane.b32.xlu0 %v3179, 72
      %v3184 = vpop.permute.xlu0 %3183
      %3185 = vrot.lane.b32.xlu0 %v3180, 72
      %v3186 = vpop.permute.xlu0 %3185
      %v3188 = vsel %vm1472, %v3184, 0
      %v3191 = vsel %vm1472, %v3186, 0
      %3193 = vmatpush.bf16.msra.mxu0 0
      %3194 = vmatpush.bf16.msra.mxu0 0
      %3195 = vmatpush.bf16.msra.mxu0 0
      %3196 = vmatpush.bf16.msra.mxu0 0
      %3197 = vmatpush.bf16.msra.mxu0 0
      %3198 = vmatpush.bf16.msra.mxu0 0
      %3199 = vmatpush.bf16.msra.mxu0 0
      %3200 = vmatpush.bf16.msra.mxu0 %v2527
      %3201 = vmatmul.bf16.gmra.mxu0 %v3188
      %v3202 = vpop.f32.mrf.mxu0
      %v3203 = vadd.f32 0.0, %v3202
      %v3204 = vpop.f32.mrf.mxu0
      %v3205 = vadd.f32 0.0, %v3204
      %3206 = vmatmul.bf16.gmra.mxu0 %v3191
      %v3207 = vpop.f32.mrf.mxu0
      %v3208 = vadd.f32 0.0, %v3207
      %v3209 = vpop.f32.mrf.mxu0
      %v3210 = vadd.f32 0.0, %v3209
      %3211 = vdwg.mxu0
      %v3212 = vld [vmem:[#allocation7 + $0x8] sm:$0xff]
      %v3213 = vld [vmem:[#allocation7 + $0x18] sm:$0xff]
      %v3214 = vld [vmem:[#allocation7 + $0x28] sm:$0xff]
      %v3215 = vld [vmem:[#allocation7 + $0x38] sm:$0xff]
      %v3216 = vmul.f32 %v3094, 0.75
      %v3217 = vmul.f32 %v3096, 0.75
      %v3218 = vmul.f32 %v3099, 0.75
      %v3219 = vmul.f32 %v3101, 0.75
      %v3220 = vadd.f32 %v3034, %v3216
      %v3221 = vadd.f32 %v3035, %v3217
      %v3222 = vadd.f32 %v3036, %v3218
      %v3223 = vadd.f32 %v3037, %v3219
      %3228 = vrot.lane.b32.xlu0 %v3220, 64
      %v3229 = vpop.permute.xlu0 %3228
      %3230 = vrot.lane.b32.xlu0 %v3221, 64
      %v3231 = vpop.permute.xlu0 %3230
      %3232 = vrot.lane.b32.xlu0 %v3222, 64
      %v3233 = vpop.permute.xlu0 %3232
      %3234 = vrot.lane.b32.xlu0 %v3223, 64
      %v3235 = vpop.permute.xlu0 %3234
      %v3240 = vadd.f32 %v3212, %v3229
      %v3241 = vadd.f32 %v3213, %v3231
      %v3242 = vadd.f32 %v3214, %v3233
      %v3243 = vadd.f32 %v3215, %v3235
      %3244 = vst.msk [vmem:[#allocation7 + $0x8] sm:$0xff] %vm2820, %v3240
      %3245 = vst.msk [vmem:[#allocation7 + $0x18] sm:$0xff] %vm2820, %v3241
      %3246 = vst.msk [vmem:[#allocation7 + $0x28] sm:$0xff] %vm2820, %v3242
      %3247 = vst.msk [vmem:[#allocation7 + $0x38] sm:$0xff] %vm2820, %v3243
      %v3248 = vld [vmem:[#allocation7 + $0x8] sm:$0xff]
      %v3249 = vld [vmem:[#allocation7 + $0x18] sm:$0xff]
      %v3250 = vld [vmem:[#allocation7 + $0x28] sm:$0xff]
      %v3251 = vld [vmem:[#allocation7 + $0x38] sm:$0xff]
      %v3252 = vmul.f32 %v3203, 0.25
      %v3253 = vmul.f32 %v3205, 0.25
      %v3254 = vmul.f32 %v3208, 0.25
      %v3255 = vmul.f32 %v3210, 0.25
      %v3256 = vadd.f32 %v3216, %v3252
      %v3257 = vadd.f32 %v3217, %v3253
      %v3258 = vadd.f32 %v3218, %v3254
      %v3259 = vadd.f32 %v3219, %v3255
      %3264 = vrot.lane.b32.xlu0 %v3256, 80
      %v3265 = vpop.permute.xlu0 %3264
      %3266 = vrot.lane.b32.xlu0 %v3257, 80
      %v3267 = vpop.permute.xlu0 %3266
      %3268 = vrot.lane.b32.xlu0 %v3258, 80
      %v3269 = vpop.permute.xlu0 %3268
      %3270 = vrot.lane.b32.xlu0 %v3259, 80
      %v3271 = vpop.permute.xlu0 %3270
      %v3276 = vadd.f32 %v3248, %v3265
      %v3277 = vadd.f32 %v3249, %v3267
      %v3278 = vadd.f32 %v3250, %v3269
      %v3279 = vadd.f32 %v3251, %v3271
      %3280 = vst.msk [vmem:[#allocation7 + $0x8] sm:$0xff] %vm2857, %v3276
      %3281 = vst.msk [vmem:[#allocation7 + $0x18] sm:$0xff] %vm2857, %v3277
      %3282 = vst.msk [vmem:[#allocation7 + $0x28] sm:$0xff] %vm2857, %v3278
      %3283 = vst.msk [vmem:[#allocation7 + $0x38] sm:$0xff] %vm2857, %v3279
      %v3284 = vld [vmem:[#allocation7 + $0x8] sm:$0xff]
      %v3285 = vld [vmem:[#allocation7 + $0x18] sm:$0xff]
      %v3286 = vld [vmem:[#allocation7 + $0x28] sm:$0xff]
      %v3287 = vld [vmem:[#allocation7 + $0x38] sm:$0xff]
      %v3288 = vmul.f32 %v3203, 0.75
      %v3289 = vmul.f32 %v3205, 0.75
      %v3290 = vmul.f32 %v3208, 0.75
      %v3291 = vmul.f32 %v3210, 0.75
      %v3292 = vadd.f32 %v3143, %v3288
      %v3293 = vadd.f32 %v3144, %v3289
      %v3294 = vadd.f32 %v3145, %v3290
      %v3295 = vadd.f32 %v3146, %v3291
      %3300 = vrot.lane.b32.xlu0 %v3292, 96
      %v3301 = vpop.permute.xlu0 %3300
      %3302 = vrot.lane.b32.xlu0 %v3293, 96
      %v3303 = vpop.permute.xlu0 %3302
      %3304 = vrot.lane.b32.xlu0 %v3294, 96
      %v3305 = vpop.permute.xlu0 %3304
      %3306 = vrot.lane.b32.xlu0 %v3295, 96
      %v3307 = vpop.permute.xlu0 %3306
      %v3312 = vadd.f32 %v3284, %v3301
      %v3313 = vadd.f32 %v3285, %v3303
      %v3314 = vadd.f32 %v3286, %v3305
      %v3315 = vadd.f32 %v3287, %v3307
      %3316 = vst.msk [vmem:[#allocation7 + $0x8] sm:$0xff] %vm2931, %v3312
      %3317 = vst.msk [vmem:[#allocation7 + $0x18] sm:$0xff] %vm2931, %v3313
      %3318 = vst.msk [vmem:[#allocation7 + $0x28] sm:$0xff] %vm2931, %v3314
      %3319 = vst.msk [vmem:[#allocation7 + $0x38] sm:$0xff] %vm2931, %v3315
      %v3320 = vld [vmem:[#allocation7 + $0x8] sm:$0xff]
      %v3321 = vld [vmem:[#allocation7 + $0x18] sm:$0xff]
      %v3322 = vld [vmem:[#allocation7 + $0x28] sm:$0xff]
      %v3323 = vld [vmem:[#allocation7 + $0x38] sm:$0xff]
      %v3324 = vadd.f32 %v3288, %v3252
      %v3325 = vadd.f32 %v3289, %v3253
      %v3326 = vadd.f32 %v3290, %v3254
      %v3327 = vadd.f32 %v3291, %v3255
      %3332 = vrot.lane.b32.xlu0 %v3324, 112
      %v3333 = vpop.permute.xlu0 %3332
      %3334 = vrot.lane.b32.xlu0 %v3325, 112
      %v3335 = vpop.permute.xlu0 %3334
      %3336 = vrot.lane.b32.xlu0 %v3326, 112
      %v3337 = vpop.permute.xlu0 %3336
      %3338 = vrot.lane.b32.xlu0 %v3327, 112
      %v3339 = vpop.permute.xlu0 %3338
      %v3344 = vadd.f32 %v3320, %v3333
      %v3345 = vadd.f32 %v3321, %v3335
      %v3346 = vadd.f32 %v3322, %v3337
      %v3347 = vadd.f32 %v3323, %v3339
      %3348 = vst.msk [vmem:[#allocation7 + $0x8] sm:$0xff] %vm2968, %v3344
      %3349 = vst.msk [vmem:[#allocation7 + $0x18] sm:$0xff] %vm2968, %v3345
      %3350 = vst.msk [vmem:[#allocation7 + $0x28] sm:$0xff] %vm2968, %v3346
      %3351 = vst.msk [vmem:[#allocation7 + $0x38] sm:$0xff] %vm2968, %v3347
      %v3352 = vld [vmem:[%s17] sm:$0xf]
      %v3353 = vld [vmem:[%s17 + $0x4] sm:$0x7]
      %v3354 = vld [vmem:[%s18] sm:$0xff]
      %v3355 = vld [vmem:[%s18 + $0x8] sm:$0x1f]
      %v3356 = vld [vmem:[#allocation7] sm:$0xff]
      %v3357 = vld [vmem:[#allocation7 + $0x8] sm:$0xff]
      %v3358 = vld [vmem:[#allocation7 + $0x10] sm:$0xff]
      %v3359 = vld [vmem:[#allocation7 + $0x18] sm:$0xff]
      %v3360 = vld [vmem:[#allocation7 + $0x20] sm:$0xff]
      %v3361 = vld [vmem:[#allocation7 + $0x28] sm:$0xff]
      %v3362 = vld [vmem:[#allocation7 + $0x30] sm:$0xff]
      %v3363 = vld [vmem:[#allocation7 + $0x38] sm:$0xff]
      %v3364 = vpack.c.bf16 %v3358, %v3356
      %v3365 = vpack.c.bf16 %v3359, %v3357
      %v3366 = vpack.c.bf16 %v3362, %v3360
      %v3367 = vpack.c.bf16 %v3363, %v3361
      %3369 = vset.pattern.permute.xlu0 0
      %3370 = vperm.xlu0 %3369, %v3354
      %v3371 = vpop.permute.xlu0 %3370
      %3374 = vset.pattern.permute.xlu0 0
      %3375 = vperm.xlu0 %3374, %v3355
      %v3376 = vpop.permute.xlu0 %3375
      %v3380 = vunpack.c.l.b16 %v3352
      %v3381 = vunpack.c.l.b16 %v3353
      %v3382 = vpack.c.b16 %v3381, %v3380
      %v3384 = vsel %vm2213, %v3382, 0
      %3386 = vmatpush.bf16.msra.mxu0 0
      %3387 = vmatpush.bf16.msra.mxu0 0
      %3388 = vmatpush.bf16.msra.mxu0 0
      %3389 = vmatpush.bf16.msra.mxu0 0
      %3390 = vmatpush.bf16.msra.mxu0 0
      %3391 = vmatpush.bf16.msra.mxu0 0
      %3392 = vmatpush.bf16.msra.mxu0 %v3366
      %3393 = vmatpush.bf16.msra.mxu0 %v3364
      %3394 = vmatmul.bf16.gmra.mxu0 %v3384
      %v3395 = vpop.f32.mrf.mxu0
      %v3396 = vadd.f32 %v3371, %v3395
      %v3397 = vpop.f32.mrf.mxu0
      %v3398 = vadd.f32 %v3376, %v3397
      %3399 = vdwg.mxu0
      %3400 = vmatpush.bf16.msra.mxu0 0
      %3401 = vmatpush.bf16.msra.mxu0 0
      %3402 = vmatpush.bf16.msra.mxu0 0
      %3403 = vmatpush.bf16.msra.mxu0 0
      %3404 = vmatpush.bf16.msra.mxu0 0
      %3405 = vmatpush.bf16.msra.mxu0 0
      %3406 = vmatpush.bf16.msra.mxu0 %v3367
      %3407 = vmatpush.bf16.msra.mxu0 %v3365
      %3408 = vmatmul.bf16.gmra.mxu0 %v3384
      %v3409 = vpop.f32.mrf.mxu0
      %v3410 = vadd.f32 %v3371, %v3409
      %v3411 = vpop.f32.mrf.mxu0
      %v3412 = vadd.f32 %v3376, %v3411
      %3413 = vdwg.mxu0
      %3414 = vst [vmem:[%s642] sm:$0xff] %v3396
      %3415 = vst [vmem:[%s642 + $0x8] sm:$0xff] %v3410
      %3416 = vst [vmem:[%s642 + $0x10] sm:$0x1f] %v3398
      %3417 = vst [vmem:[%s642 + $0x18] sm:$0x1f] %v3412
      %p3418 = scmp.lt.s32.totalorder %s30, 1
      %s3419 = scalar_select %p3418, %s30, 1
      %s3420 = smul.addr %s3419, 4
      %s3421 = smul.addr %s3420, 8
      %s3422 = scalar_lea.vmem %s19, %s3421
      // Predicated region
      $region97: #{semantic_head_stuff_forward.1} parent=95 // pred_check
        %p3423 = pneg %p462
      $region98: #{semantic_head_stuff_forward.1} parent=95 // pred_check_branch
        %3425 = sbr.rel (%p3423) target = $region100
      $region99: #{semantic_head_stuff_forward.1} parent=95 // pred_region
        _
      $region100: #{semantic_head_stuff_forward.1} parent=95 // pred_fallthru
        _
    $region96: #{semantic_head_stuff_forward.1} parent=5 // pred_fallthru
      _
    %p3426 = scmp.le.s32.totalorder 2, %s25
    // Predicated region
    $region101: #{semantic_head_stuff_forward.1} parent=5 // pred_check
      %p3427 = pneg %p3426
    $region102: #{semantic_head_stuff_forward.1} parent=5 // pred_check_branch
      %3429 = sbr.rel (%p3427) target = $region104
    $region103: #{semantic_head_stuff_forward.1} parent=5 // pred_region
      %s3430 = ssub.s32 %s25, 2
      // Predicated region
      $region105: #{semantic_head_stuff_forward.1} parent=103 // pred_check
        %p3431 = pneg %p468
      $region106: #{semantic_head_stuff_forward.1} parent=103 // pred_check_branch
        %3433 = sbr.rel (%p3431) target = $region108
      $region107: #{semantic_head_stuff_forward.1} parent=103 // pred_region
        %p3434 = scmp.lt.s32.totalorder %s31, 1
        %s3435 = scalar_select %p3434, %s31, 1
        %s3436 = smul.addr %s3435, 4
        %s3437 = smul.addr %s3436, 8
        %s3438 = scalar_lea.vmem %s19, %s3437
      $region108: #{semantic_head_stuff_forward.1} parent=103 // pred_fallthru
        _
    $region104: #{semantic_head_stuff_forward.1} parent=5 // pred_fallthru
      _
  $region6: #{semantic_head_stuff_forward.1} parent=0 // loop_footer
    %s29 = sadd.s32 1, %s25
  $region7: #{semantic_head_stuff_forward.1} parent=0 // loop_footer_branch
    %24 = sbr.rel target = $region3
  $region8: #{semantic_head_stuff_forward.1} parent=0 // loop_exit
    _

</llo_original>
